<compile_context>
chip_gen: v5e
topology: v5e:2x2
jax: 0.10.0
libtpu: 0.0.40
codegen_flags: <defaults>
</compile_context>

<pallas_src>
import jax
import jax.numpy as jnp
from jax.experimental import pallas as pl
from jax.experimental.pallas import tpu as pltpu  # noqa: F401  (TPU backend)


def _full_spec(shape):
    # whole-array block (no grid) -> index_map takes no args
    return pl.BlockSpec(shape, lambda: (0,) * len(shape))


# ---------------------------------------------------------------------------
# Single fused kernel: encoder -> reg -> generator -> classifier
# ---------------------------------------------------------------------------
def _fused_forward_kernel(
    a_ref, x_ref, noise_ref,
    w_ec1_ref, b_ec1_ref,                       # fused [enc1 | cls1] layer-1
    w_enc2_ref, b_enc2_ref,
    w_reg_ref, b_reg_ref,
    w_fc1_ref, b_fc1_ref, w_fc2_ref, b_fc2_ref, w_flat_ref, b_flat_ref,
    w_cls2_ref, b_cls2_ref,
    deg_ref, gen_ref, nc_ref,
):
    f32, bf16 = jnp.float32, jnp.bfloat16
    a = a_ref[...]          # (n, n)  bf16 row-normalized adjacency
    x = x_ref[...]          # (n, f)  f32 node features

    def dot_bf16(lhs_f32, w_ref):
        # bf16 MXU operands, f32 accumulation
        return jnp.dot(lhs_f32.astype(bf16), w_ref[...], preferred_element_type=f32)

    # shared mean-aggregation of raw features (used by enc1 AND cls1)
    aggr_x = jnp.dot(a, x.astype(bf16), preferred_element_type=f32)
    cat_x = jnp.concatenate([aggr_x, x], axis=-1)               # (n, 2f)

    # --- encoder layer 1 AND classifier layer 1 in ONE matmul ------------
    # w_ec1 = [ [Wl_enc1; Wr_enc1] | [Wl_cls1; Wr_cls1] ]  -> split after relu
    y = jnp.maximum(dot_bf16(cat_x, w_ec1_ref) + b_ec1_ref[...], 0.0)
    hidden = y.shape[-1] // 2
    h1 = y[:, :hidden]      # encoder layer-1 activations  (relu, dropout=eval)
    h2 = y[:, hidden:]      # classifier layer-1 activations

    # --- encoder layer 2: z = SAGE(h1) (no relu on final layer) ----------
    aggr_h1 = jnp.dot(a, h1.astype(bf16), preferred_element_type=f32)
    cat_h1 = jnp.concatenate([aggr_h1, h1], axis=-1)
    z = dot_bf16(cat_h1, w_enc2_ref) + b_enc2_ref[...]

    # --- reg_model: degree = relu(z @ W_reg + b) --------------------------
    deg = jnp.dot(z, w_reg_ref[...], preferred_element_type=f32) + b_reg_ref[...]
    deg_ref[...] = jnp.maximum(deg, 0.0)

    # --- gen: Sampling noise -> relu fc1 -> relu fc2 -> (dropout eval) -> tanh fc_flat
    g = z + noise_ref[...]
    g = jnp.maximum(dot_bf16(g, w_fc1_ref) + b_fc1_ref[...], 0.0)
    g = jnp.maximum(dot_bf16(g, w_fc2_ref) + b_fc2_ref[...], 0.0)
    gen_ref[...] = jnp.tanh(dot_bf16(g, w_flat_ref) + b_flat_ref[...])

    # --- classifier layer 2 on the mended graph (structured form) ---------
    # Mended edges are origin->generated only, so original-node rows aggregate
    # exactly as on the original graph; generated rows never reach nc_pred[:n].
    # Associate as A @ (h2 @ Wl) + h2 @ Wr  (out_dim < in_dim).
    t = dot_bf16(h2, w_cls2_ref)                 # (n, 2*out) = [h2@Wl | h2@Wr]
    out_dim = t.shape[-1] // 2
    nc = jnp.dot(a, t[:, :out_dim].astype(bf16), preferred_element_type=f32)
    nc_ref[...] = nc + t[:, out_dim:] + b_cls2_ref[...]


def local_sage_plus_forward(params, x, edge_index, noise, num_pred):
    """Returns (degree, gen_feat, nc_pred[:n]) matching the PyTorch forward."""
    n, f = x.shape
    a_norm = row_normalize(build_adj(edge_index, n)).astype(jnp.bfloat16)
    out_channels = params["cls2"][0].shape[1] // 2

    # one-time fusion of the two first-layer SAGE weights (shared lhs in-kernel)
    w_enc1, b_enc1 = params["enc1"]
    w_cls1, b_cls1 = params["cls1"]
    w_ec1 = jnp.concatenate([w_enc1, w_cls1], axis=1)   # (2f, 2*hidden) bf16
    b_ec1 = jnp.concatenate([b_enc1, b_cls1], axis=1)   # (1, 2*hidden) f32

    inputs = [a_norm, x, noise, w_ec1, b_ec1]
    for name in ("enc2", "reg", "fc1", "fc2", "fc_flat", "cls2"):
        w, b = params[name]
        inputs += [w, b]

    out_shape = (
        jax.ShapeDtypeStruct((n, 1), jnp.float32),                 # degree
        jax.ShapeDtypeStruct((n, num_pred * f), jnp.float32),      # gen_feat
        jax.ShapeDtypeStruct((n, out_channels), jnp.float32),      # nc_pred[:n]
    )
    return pl.pallas_call(
        _fused_forward_kernel,
        out_shape=out_shape,
        in_specs=[_full_spec(t.shape) for t in inputs],
        out_specs=tuple(_full_spec(s.shape) for s in out_shape),
    )(*inputs)


# ---------------------------------------------------------------------------
# Graph glue (plain JAX): dense row-normalized adjacency from edge_index
# ---------------------------------------------------------------------------
def build_adj(edge_index, num_nodes):
    src, dst = edge_index[0], edge_index[1]
    # messages flow src -> dst; row i aggregates over in-neighbors of i
    return jnp.zeros((num_nodes, num_nodes), jnp.float32).at[dst, src].add(1.0)


def row_normalize(a):
    deg = a.sum(axis=1, keepdims=True)
    return jnp.where(deg > 0, a / jnp.maximum(deg, 1.0), 0.0)


# ---------------------------------------------------------------------------
# Parameter init: PyTorch-Linear-like uniform(-1/sqrt(fan_in)), stored in the
# kernel-ready layout ((in, out) bf16 weights, (1, out) f32 biases, stacked
# Wl/Wr for the SAGE convs) so no transposes/reshapes happen in the hot path.
# ---------------------------------------------------------------------------
def _uniform(key, shape, fan_in):
    bound = 1.0 / jnp.sqrt(jnp.float32(fan_in))
    return jax.random.uniform(key, shape, jnp.float32, -bound, bound)


def _init_linear(key, in_dim, out_dim, w_dtype=jnp.bfloat16):
    k1, k2 = jax.random.split(key)
    w = _uniform(k1, (in_dim, out_dim), in_dim).astype(w_dtype)   # (in, out)
    b = _uniform(k2, (1, out_dim), in_dim)                        # f32
    return w, b


def _init_sage_stacked(key, in_dim, out_dim, stack_axis=0):
    # SAGEConv(mean): lin_l (with bias) on aggregated, lin_r (no bias) on self.
    # stack_axis=0 -> W = [Wl^T ; Wr^T] (2*in, out)   for concat([aggr, x]) @ W
    # stack_axis=1 -> W = [Wl^T | Wr^T] (in, 2*out)   for (x @ W) then split
    k1, k2, k3 = jax.random.split(key, 3)
    w_l = _uniform(k1, (in_dim, out_dim), in_dim)
    w_r = _uniform(k2, (in_dim, out_dim), in_dim)
    b_l = _uniform(k3, (1, out_dim), in_dim)
    w = jnp.concatenate([w_l, w_r], axis=stack_axis).astype(jnp.bfloat16)
    return w, b_l


def init_params(key, in_channels, out_channels, hidden, gen_hidden, num_pred):
    keys = jax.random.split(key, 8)
    return {
        "enc1": _init_sage_stacked(keys[0], in_channels, hidden),
        "enc2": _init_sage_stacked(keys[1], hidden, gen_hidden),
        # reg is a degenerate (out=1) matmul; keep it f32 (same as validated path)
        "reg": _init_linear(keys[2], gen_hidden, 1, w_dtype=jnp.float32),
        "fc1": _init_linear(keys[3], gen_hidden, 256),
        "fc2": _init_linear(keys[4], 256, 2048),
        "fc_flat": _init_linear(keys[5], 2048, num_pred * in_channels),
        "cls1": _init_sage_stacked(keys[6], in_channels, hidden),
        "cls2": _init_sage_stacked(keys[7], hidden, out_channels, stack_axis=1),
    }


# ---------------------------------------------------------------------------
# Main
# ---------------------------------------------------------------------------
if __name__ == "__main__":
    in_channels = 16
    out_channels = 4
    hidden = 32
    gen_hidden = 32
    num_pred = 3
    n_nodes = 8

    root = jax.random.PRNGKey(0)
    k_param, k_x, k_noise = jax.random.split(root, 3)

    params = init_params(k_param, in_channels, out_channels, hidden, gen_hidden, num_pred)

    # small undirected ring graph (both edge directions stored, PyG-style)
    src = jnp.arange(n_nodes, dtype=jnp.int32)
    dst = (src + 1) % n_nodes
    edge_index = jnp.stack(
        [jnp.concatenate([src, dst]), jnp.concatenate([dst, src])], axis=0
    )  # (2, 16)

    x = jax.random.normal(k_x, (n_nodes, in_channels), jnp.float32)
    # Sampling module: additive standard-normal noise (deterministic key here)
    noise = jax.random.normal(k_noise, (n_nodes, gen_hidden), jnp.float32)

    degree, gen_feat, nc_pred = local_sage_plus_forward(
        params, x, edge_index, noise, num_pred
    )
    jax.block_until_ready((degree, gen_feat, nc_pred))

    assert degree.shape == (n_nodes, 1)
    assert gen_feat.shape == (n_nodes, num_pred * in_channels)
    assert nc_pred.shape == (n_nodes, out_channels)
    print("KERNEL_OK")
</pallas_src>

<mosaic_0001>
module attributes {stable_mosaic.version = 11 : i64} {
  func.func @_fused_forward_kernel(%arg0: memref<8x8xbf16, #tpu.memory_space<vmem>>, %arg1: memref<8x16xf32, #tpu.memory_space<vmem>>, %arg2: memref<8x32xf32, #tpu.memory_space<vmem>>, %arg3: memref<32x64xbf16, #tpu.memory_space<vmem>>, %arg4: memref<1x64xf32, #tpu.memory_space<vmem>>, %arg5: memref<64x32xbf16, #tpu.memory_space<vmem>>, %arg6: memref<1x32xf32, #tpu.memory_space<vmem>>, %arg7: memref<32x1xf32, #tpu.memory_space<vmem>>, %arg8: memref<1x1xf32, #tpu.memory_space<vmem>>, %arg9: memref<32x256xbf16, #tpu.memory_space<vmem>>, %arg10: memref<1x256xf32, #tpu.memory_space<vmem>>, %arg11: memref<256x2048xbf16, #tpu.memory_space<vmem>>, %arg12: memref<1x2048xf32, #tpu.memory_space<vmem>>, %arg13: memref<2048x48xbf16, #tpu.memory_space<vmem>>, %arg14: memref<1x48xf32, #tpu.memory_space<vmem>>, %arg15: memref<32x8xbf16, #tpu.memory_space<vmem>>, %arg16: memref<1x4xf32, #tpu.memory_space<vmem>>, %arg17: memref<8x1xf32, #tpu.memory_space<vmem>>, %arg18: memref<8x48xf32, #tpu.memory_space<vmem>>, %arg19: memref<8x4xf32, #tpu.memory_space<vmem>>) attributes {dimension_semantics = [], scalar_prefetch = 0 : i64, scratch_operands = 0 : i64, tpu.core_type = #tpu.core_type<tc>} {
    %c0 = arith.constant 0 : index
    %c0_0 = arith.constant 0 : index
    %0 = vector.load %arg0[%c0, %c0_0] : memref<8x8xbf16, #tpu.memory_space<vmem>>, vector<8x8xbf16>
    %c0_1 = arith.constant 0 : index
    %c0_2 = arith.constant 0 : index
    %1 = vector.load %arg1[%c0_1, %c0_2] : memref<8x16xf32, #tpu.memory_space<vmem>>, vector<8x16xf32>
    %2 = arith.truncf %1 : vector<8x16xf32> to vector<8x16xbf16>
    %cst = arith.constant dense<0.000000e+00> : vector<8x16xf32>
    %3 = tpu.matmul %0, %2, %cst {dimension_numbers = #tpu.dot_dimension_numbers<[1], [0], [0], [1], [0, 0, 1, 1], [], []>} : vector<8x8xbf16>, vector<8x16xbf16>, vector<8x16xf32> -> vector<8x16xf32>
    %4 = tpu.concatenate %3, %1 in 1 : vector<8x16xf32>, vector<8x16xf32> -> vector<8x32xf32>
    %5 = arith.truncf %4 : vector<8x32xf32> to vector<8x32xbf16>
    %c0_3 = arith.constant 0 : index
    %c0_4 = arith.constant 0 : index
    %6 = vector.load %arg3[%c0_3, %c0_4] : memref<32x64xbf16, #tpu.memory_space<vmem>>, vector<32x64xbf16>
    %cst_5 = arith.constant dense<0.000000e+00> : vector<8x64xf32>
    %7 = tpu.matmul %5, %6, %cst_5 {dimension_numbers = #tpu.dot_dimension_numbers<[1], [0], [0], [1], [0, 0, 1, 1], [], []>} : vector<8x32xbf16>, vector<32x64xbf16>, vector<8x64xf32> -> vector<8x64xf32>
    %c0_6 = arith.constant 0 : index
    %c0_7 = arith.constant 0 : index
    %8 = vector.load %arg4[%c0_6, %c0_7] : memref<1x64xf32, #tpu.memory_space<vmem>>, vector<1x64xf32>
    %9 = vector.broadcast %8 : vector<1x64xf32> to vector<8x64xf32>
    %10 = arith.addf %7, %9 : vector<8x64xf32>
    %cst_8 = arith.constant 0.000000e+00 : f32
    %11 = vector.broadcast %cst_8 : f32 to vector<8x64xf32>
    %12 = arith.maximumf %10, %11 : vector<8x64xf32>
    %13 = vector.extract_strided_slice %12 {offsets = [0, 0], sizes = [8, 32], strides = [1, 1]} : vector<8x64xf32> to vector<8x32xf32>
    %14 = vector.extract_strided_slice %12 {offsets = [0, 32], sizes = [8, 32], strides = [1, 1]} : vector<8x64xf32> to vector<8x32xf32>
    %15 = arith.truncf %13 : vector<8x32xf32> to vector<8x32xbf16>
    %cst_9 = arith.constant dense<0.000000e+00> : vector<8x32xf32>
    %16 = tpu.matmul %0, %15, %cst_9 {dimension_numbers = #tpu.dot_dimension_numbers<[1], [0], [0], [1], [0, 0, 1, 1], [], []>} : vector<8x8xbf16>, vector<8x32xbf16>, vector<8x32xf32> -> vector<8x32xf32>
    %17 = tpu.concatenate %16, %13 in 1 : vector<8x32xf32>, vector<8x32xf32> -> vector<8x64xf32>
    %18 = arith.truncf %17 : vector<8x64xf32> to vector<8x64xbf16>
    %c0_10 = arith.constant 0 : index
    %c0_11 = arith.constant 0 : index
    %19 = vector.load %arg5[%c0_10, %c0_11] : memref<64x32xbf16, #tpu.memory_space<vmem>>, vector<64x32xbf16>
    %cst_12 = arith.constant dense<0.000000e+00> : vector<8x32xf32>
    %20 = tpu.matmul %18, %19, %cst_12 {dimension_numbers = #tpu.dot_dimension_numbers<[1], [0], [0], [1], [0, 0, 1, 1], [], []>} : vector<8x64xbf16>, vector<64x32xbf16>, vector<8x32xf32> -> vector<8x32xf32>
    %c0_13 = arith.constant 0 : index
    %c0_14 = arith.constant 0 : index
    %21 = vector.load %arg6[%c0_13, %c0_14] : memref<1x32xf32, #tpu.memory_space<vmem>>, vector<1x32xf32>
    %22 = vector.broadcast %21 : vector<1x32xf32> to vector<8x32xf32>
    %23 = arith.addf %20, %22 : vector<8x32xf32>
    %c0_15 = arith.constant 0 : index
    %c0_16 = arith.constant 0 : index
    %24 = vector.load %arg7[%c0_15, %c0_16] : memref<32x1xf32, #tpu.memory_space<vmem>>, vector<32x1xf32>
    %cst_17 = arith.constant dense<0.000000e+00> : vector<8x1xf32>
    %25 = tpu.matmul %23, %24, %cst_17 {dimension_numbers = #tpu.dot_dimension_numbers<[1], [0], [0], [1], [0, 0, 1, 1], [], []>} : vector<8x32xf32>, vector<32x1xf32>, vector<8x1xf32> -> vector<8x1xf32>
    %c0_18 = arith.constant 0 : index
    %c0_19 = arith.constant 0 : index
    %26 = vector.load %arg8[%c0_18, %c0_19] : memref<1x1xf32, #tpu.memory_space<vmem>>, vector<1x1xf32>
    %27 = vector.broadcast %26 : vector<1x1xf32> to vector<8x1xf32>
    %28 = arith.addf %25, %27 : vector<8x1xf32>
    %cst_20 = arith.constant 0.000000e+00 : f32
    %29 = vector.broadcast %cst_20 : f32 to vector<8x1xf32>
    %30 = arith.maximumf %28, %29 : vector<8x1xf32>
    %c0_21 = arith.constant 0 : index
    %c0_22 = arith.constant 0 : index
    %31 = vector.load %arg17[%c0_21, %c0_22] : memref<8x1xf32, #tpu.memory_space<vmem>>, vector<8x1xf32>
    tpu.vector_store %arg17[%c0_21, %c0_22], %30 {strides = array<i32>} : memref<8x1xf32, #tpu.memory_space<vmem>>, vector<8x1xf32>,
    %c0_23 = arith.constant 0 : index
    %c0_24 = arith.constant 0 : index
    %32 = vector.load %arg2[%c0_23, %c0_24] : memref<8x32xf32, #tpu.memory_space<vmem>>, vector<8x32xf32>
    %33 = arith.addf %23, %32 : vector<8x32xf32>
    %34 = arith.truncf %33 : vector<8x32xf32> to vector<8x32xbf16>
    %c0_25 = arith.constant 0 : index
    %c0_26 = arith.constant 0 : index
    %35 = vector.load %arg9[%c0_25, %c0_26] : memref<32x256xbf16, #tpu.memory_space<vmem>>, vector<32x256xbf16>
    %cst_27 = arith.constant dense<0.000000e+00> : vector<8x256xf32>
    %36 = tpu.matmul %34, %35, %cst_27 {dimension_numbers = #tpu.dot_dimension_numbers<[1], [0], [0], [1], [0, 0, 1, 1], [], []>} : vector<8x32xbf16>, vector<32x256xbf16>, vector<8x256xf32> -> vector<8x256xf32>
    %c0_28 = arith.constant 0 : index
    %c0_29 = arith.constant 0 : index
    %37 = vector.load %arg10[%c0_28, %c0_29] : memref<1x256xf32, #tpu.memory_space<vmem>>, vector<1x256xf32>
    %38 = vector.broadcast %37 : vector<1x256xf32> to vector<8x256xf32>
    %39 = arith.addf %36, %38 : vector<8x256xf32>
    %cst_30 = arith.constant 0.000000e+00 : f32
    %40 = vector.broadcast %cst_30 : f32 to vector<8x256xf32>
    %41 = arith.maximumf %39, %40 : vector<8x256xf32>
    %42 = arith.truncf %41 : vector<8x256xf32> to vector<8x256xbf16>
    %c0_31 = arith.constant 0 : index
    %c0_32 = arith.constant 0 : index
    %43 = vector.load %arg11[%c0_31, %c0_32] : memref<256x2048xbf16, #tpu.memory_space<vmem>>, vector<256x2048xbf16>
    %cst_33 = arith.constant dense<0.000000e+00> : vector<8x2048xf32>
    %44 = tpu.matmul %42, %43, %cst_33 {dimension_numbers = #tpu.dot_dimension_numbers<[1], [0], [0], [1], [0, 0, 1, 1], [], []>} : vector<8x256xbf16>, vector<256x2048xbf16>, vector<8x2048xf32> -> vector<8x2048xf32>
    %c0_34 = arith.constant 0 : index
    %c0_35 = arith.constant 0 : index
    %45 = vector.load %arg12[%c0_34, %c0_35] : memref<1x2048xf32, #tpu.memory_space<vmem>>, vector<1x2048xf32>
    %46 = vector.broadcast %45 : vector<1x2048xf32> to vector<8x2048xf32>
    %47 = arith.addf %44, %46 : vector<8x2048xf32>
    %cst_36 = arith.constant 0.000000e+00 : f32
    %48 = vector.broadcast %cst_36 : f32 to vector<8x2048xf32>
    %49 = arith.maximumf %47, %48 : vector<8x2048xf32>
    %50 = arith.truncf %49 : vector<8x2048xf32> to vector<8x2048xbf16>
    %c0_37 = arith.constant 0 : index
    %c0_38 = arith.constant 0 : index
    %51 = vector.load %arg13[%c0_37, %c0_38] : memref<2048x48xbf16, #tpu.memory_space<vmem>>, vector<2048x48xbf16>
    %cst_39 = arith.constant dense<0.000000e+00> : vector<8x48xf32>
    %52 = tpu.matmul %50, %51, %cst_39 {dimension_numbers = #tpu.dot_dimension_numbers<[1], [0], [0], [1], [0, 0, 1, 1], [], []>} : vector<8x2048xbf16>, vector<2048x48xbf16>, vector<8x48xf32> -> vector<8x48xf32>
    %c0_40 = arith.constant 0 : index
    %c0_41 = arith.constant 0 : index
    %53 = vector.load %arg14[%c0_40, %c0_41] : memref<1x48xf32, #tpu.memory_space<vmem>>, vector<1x48xf32>
    %54 = vector.broadcast %53 : vector<1x48xf32> to vector<8x48xf32>
    %55 = arith.addf %52, %54 : vector<8x48xf32>
    %56 = math.tanh %55 : vector<8x48xf32>
    %c0_42 = arith.constant 0 : index
    %c0_43 = arith.constant 0 : index
    %57 = vector.load %arg18[%c0_42, %c0_43] : memref<8x48xf32, #tpu.memory_space<vmem>>, vector<8x48xf32>
    tpu.vector_store %arg18[%c0_42, %c0_43], %56 {strides = array<i32>} : memref<8x48xf32, #tpu.memory_space<vmem>>, vector<8x48xf32>,
    %58 = arith.truncf %14 : vector<8x32xf32> to vector<8x32xbf16>
    %c0_44 = arith.constant 0 : index
    %c0_45 = arith.constant 0 : index
    %59 = vector.load %arg15[%c0_44, %c0_45] : memref<32x8xbf16, #tpu.memory_space<vmem>>, vector<32x8xbf16>
    %cst_46 = arith.constant dense<0.000000e+00> : vector<8x8xf32>
    %60 = tpu.matmul %58, %59, %cst_46 {dimension_numbers = #tpu.dot_dimension_numbers<[1], [0], [0], [1], [0, 0, 1, 1], [], []>} : vector<8x32xbf16>, vector<32x8xbf16>, vector<8x8xf32> -> vector<8x8xf32>
    %61 = vector.extract_strided_slice %60 {offsets = [0, 0], sizes = [8, 4], strides = [1, 1]} : vector<8x8xf32> to vector<8x4xf32>
    %62 = arith.truncf %61 : vector<8x4xf32> to vector<8x4xbf16>
    %cst_47 = arith.constant dense<0.000000e+00> : vector<8x4xf32>
    %63 = tpu.matmul %0, %62, %cst_47 {dimension_numbers = #tpu.dot_dimension_numbers<[1], [0], [0], [1], [0, 0, 1, 1], [], []>} : vector<8x8xbf16>, vector<8x4xbf16>, vector<8x4xf32> -> vector<8x4xf32>
    %64 = vector.extract_strided_slice %60 {offsets = [0, 4], sizes = [8, 4], strides = [1, 1]} : vector<8x8xf32> to vector<8x4xf32>
    %65 = arith.addf %63, %64 : vector<8x4xf32>
    %c0_48 = arith.constant 0 : index
    %c0_49 = arith.constant 0 : index
    %66 = vector.load %arg16[%c0_48, %c0_49] : memref<1x4xf32, #tpu.memory_space<vmem>>, vector<1x4xf32>
    %67 = vector.broadcast %66 : vector<1x4xf32> to vector<8x4xf32>
    %68 = arith.addf %65, %67 : vector<8x4xf32>
    %c0_50 = arith.constant 0 : index
    %c0_51 = arith.constant 0 : index
    %69 = vector.load %arg19[%c0_50, %c0_51] : memref<8x4xf32, #tpu.memory_space<vmem>>, vector<8x4xf32>
    tpu.vector_store %arg19[%c0_50, %c0_51], %68 {strides = array<i32>} : memref<8x4xf32, #tpu.memory_space<vmem>>, vector<8x4xf32>,
    return
  }
}

</mosaic_0001>

<llo_original>
// kernel: tpu_custom_call.1
$region0: #{tpu_custom_call.1}
  #allocation0 [shape = 'u32[]', space=smem, size = 0x4, offset = 0x4, fixed_abs, tag = 'smem constant byte address 0x4 - core index']
  #allocation1 [shape = 'u32[72,128]{1,0:T(1,128)}', space=vmem, size = 0x9000, scoped, tag = 'internal scratch']
  #allocation2 [shape = 'f32[1,1]{1,0:T(1,128)S(1)}', space=vmem, size = 0x200, scoped, tag = 'scoped memory for tpu_custom_call.1']
  %s0 = inlined_call_operand.vmem [shape: bf16[8,8], index: 0, kind: input, shape index: {}]
  %s1 = inlined_call_operand.vmem [shape: f32[8,16], index: 1, kind: input, shape index: {}]
  %s2 = inlined_call_operand.vmem [shape: f32[8,32], index: 2, kind: input, shape index: {}]
  %s3 = inlined_call_operand.vmem [shape: bf16[32,64], index: 3, kind: input, shape index: {}]
  %s4 = inlined_call_operand.vmem [shape: f32[1,64], index: 4, kind: input, shape index: {}]
  %s5 = inlined_call_operand.vmem [shape: bf16[64,32], index: 5, kind: input, shape index: {}]
  %s6 = inlined_call_operand.vmem [shape: f32[1,32], index: 6, kind: input, shape index: {}]
  %s7 = inlined_call_operand.vmem [shape: f32[32,1], index: 7, kind: input, shape index: {}]
  %s8 = inlined_call_operand.<no memory space> [shape: f32[1,1], index: 8, kind: input, shape index: {}]
  %s9 = inlined_call_operand.vmem [shape: bf16[32,256], index: 9, kind: input, shape index: {}]
  %s10 = inlined_call_operand.vmem [shape: f32[1,256], index: 10, kind: input, shape index: {}]
  %s11 = inlined_call_operand.hbm [shape: bf16[256,2048], index: 11, kind: input, shape index: {}]
  %s12 = inlined_call_operand.vmem [shape: f32[1,2048], index: 12, kind: input, shape index: {}]
  %s13 = inlined_call_operand.vmem [shape: bf16[2048,48], index: 13, kind: input, shape index: {}]
  %s14 = inlined_call_operand.vmem [shape: f32[1,48], index: 14, kind: input, shape index: {}]
  %s15 = inlined_call_operand.vmem [shape: bf16[32,8], index: 15, kind: input, shape index: {}]
  %s16 = inlined_call_operand.vmem [shape: f32[1,4], index: 16, kind: input, shape index: {}]
  %s17 = inlined_call_operand.vmem [shape: f32[8,1], index: 17, kind: output, shape index: {0}]
  %s18 = inlined_call_operand.hbm [shape: f32[8,48], index: 18, kind: output, shape index: {1}]
  %s19 = inlined_call_operand.vmem [shape: f32[8,4], index: 19, kind: output, shape index: {2}]
  %20 = xla_tuple %s17, %s18, %s19
  %s21 = sld [smem:[#allocation0]]
  $region98: #{tpu_custom_call.1} parent=0
    _
  %s23 = ssub.s32 1, %s21
  %s24 = scalar_select 0, %s23, %s21
  %v25 = vstv %s8
  %26 = vst [vmem:[#allocation2] sm:$0x1] %v25
  $region1: #{tpu_custom_call.1} parent=0
    #allocation3 [shape = 'u8[1048576]{0}', space=vmem, size = 0x100000, scoped, tag = 'input window, operand 11, single buffered']
    #allocation4 [shape = 's32[1]{0}', space=sflag, size = 0x4, scoped, tag = 'scoped memory for tpu_custom_call.1']
    #allocation5 [shape = 's32[1]{0}', space=sflag, size = 0x4, scoped, tag = 'scoped memory for tpu_custom_call.1']
    #allocation6 [shape = 'u8[4096]{0}', space=vmem, size = 0x1000, scoped, tag = 'output window, operand 1, single buffered']
    %27 = vsyncpa [#allocation4], 0
    %28 = vsyncpa [#allocation5], 0
    // Predicated region
    $region2: #{tpu_custom_call.1} parent=1 // pred_check
      _
    $region3: #{tpu_custom_call.1} parent=1 // pred_check_branch
      %30 = sbr.rel (0) target = $region5
    $region4: #{tpu_custom_call.1} parent=1 // pred_region
      _
    $region5: #{tpu_custom_call.1} parent=1 // pred_fallthru
      _
    // Predicated region
    $region6: #{tpu_custom_call.1} parent=1 // pred_check
      _
    $region7: #{tpu_custom_call.1} parent=1 // pred_check_branch
      %32 = sbr.rel (0) target = $region9
    $region8: #{tpu_custom_call.1} parent=1 // pred_region
      _
    $region9: #{tpu_custom_call.1} parent=1 // pred_fallthru
      _
    // Predicated region
    $region10: #{tpu_custom_call.1} parent=1 // pred_check
      _
    $region11: #{tpu_custom_call.1} parent=1 // pred_check_branch
      %34 = sbr.rel (0) target = $region13
    $region12: #{tpu_custom_call.1} parent=1 // pred_region
      _
    $region13: #{tpu_custom_call.1} parent=1 // pred_fallthru
      _
    // Predicated region
    $region14: #{tpu_custom_call.1} parent=1 // pred_check
      _
    $region15: #{tpu_custom_call.1} parent=1 // pred_check_branch
      %36 = sbr.rel (0) target = $region17
    $region16: #{tpu_custom_call.1} parent=1 // pred_region
      _
    $region17: #{tpu_custom_call.1} parent=1 // pred_fallthru
      _
    // Predicated region
    $region18: #{tpu_custom_call.1} parent=1 // pred_check
      _
    $region19: #{tpu_custom_call.1} parent=1 // pred_check_branch
      %38 = sbr.rel (0) target = $region21
    $region20: #{tpu_custom_call.1} parent=1 // pred_region
      _
    $region21: #{tpu_custom_call.1} parent=1 // pred_fallthru
      _
    // Predicated region
    $region22: #{tpu_custom_call.1} parent=1 // pred_check
      _
    $region23: #{tpu_custom_call.1} parent=1 // pred_check_branch
      %40 = sbr.rel (0) target = $region25
    $region24: #{tpu_custom_call.1} parent=1 // pred_region
      _
    $region25: #{tpu_custom_call.1} parent=1 // pred_fallthru
      _
    // Predicated region
    $region26: #{tpu_custom_call.1} parent=1 // pred_check
      _
    $region27: #{tpu_custom_call.1} parent=1 // pred_check_branch
      %42 = sbr.rel (0) target = $region29
    $region28: #{tpu_custom_call.1} parent=1 // pred_region
      _
    $region29: #{tpu_custom_call.1} parent=1 // pred_fallthru
      _
    // Predicated region
    $region30: #{tpu_custom_call.1} parent=1 // pred_check
      _
    $region31: #{tpu_custom_call.1} parent=1 // pred_check_branch
      %44 = sbr.rel (0) target = $region33
    $region32: #{tpu_custom_call.1} parent=1 // pred_region
      _
    $region33: #{tpu_custom_call.1} parent=1 // pred_fallthru
      _
    // Predicated region
    $region34: #{tpu_custom_call.1} parent=1 // pred_check
      _
    $region35: #{tpu_custom_call.1} parent=1 // pred_check_branch
      %46 = sbr.rel (0) target = $region37
    $region36: #{tpu_custom_call.1} parent=1 // pred_region
      _
    $region37: #{tpu_custom_call.1} parent=1 // pred_fallthru
      _
    // Predicated region
    $region38: #{tpu_custom_call.1} parent=1 // pred_check
      _
    $region39: #{tpu_custom_call.1} parent=1 // pred_check_branch
      %48 = sbr.rel (0) target = $region41
    $region40: #{tpu_custom_call.1} parent=1 // pred_region
      _
    $region41: #{tpu_custom_call.1} parent=1 // pred_fallthru
      _
    // Predicated region
    $region42: #{tpu_custom_call.1} parent=1 // pred_check
      _
    $region43: #{tpu_custom_call.1} parent=1 // pred_check_branch
      %50 = sbr.rel (0) target = $region45
    $region44: #{tpu_custom_call.1} parent=1 // pred_region
      _
    $region45: #{tpu_custom_call.1} parent=1 // pred_fallthru
      _
    // Predicated region
    $region46: #{tpu_custom_call.1} parent=1 // pred_check
      _
    $region47: #{tpu_custom_call.1} parent=1 // pred_check_branch
      %52 = sbr.rel (0) target = $region49
    $region48: #{tpu_custom_call.1} parent=1 // pred_region
      %54 = vsyncadd [#allocation4], 0
      %s55 = sshll.u32 %s11, 4
      %s56 = int_to_ptr.hbm [resolvable:$true] %s55
      %s57 = sshll.u32 [#allocation3], 4
      %s58 = int_to_ptr.vmem [resolvable:$true] %s57
      %63 = dma.hbm_to_vmem [thread:$0]  %s56, 32768, %s58, [#allocation4], 1024, 1024, 64
    $region49: #{tpu_custom_call.1} parent=1 // pred_fallthru
      _
    // Predicated region
    $region50: #{tpu_custom_call.1} parent=1 // pred_check
      _
    $region51: #{tpu_custom_call.1} parent=1 // pred_check_branch
      %65 = sbr.rel (0) target = $region53
    $region52: #{tpu_custom_call.1} parent=1 // pred_region
      _
    $region53: #{tpu_custom_call.1} parent=1 // pred_fallthru
      _
    // Predicated region
    $region54: #{tpu_custom_call.1} parent=1 // pred_check
      _
    $region55: #{tpu_custom_call.1} parent=1 // pred_check_branch
      %67 = sbr.rel (0) target = $region57
    $region56: #{tpu_custom_call.1} parent=1 // pred_region
      _
    $region57: #{tpu_custom_call.1} parent=1 // pred_fallthru
      _
    // Predicated region
    $region58: #{tpu_custom_call.1} parent=1 // pred_check
      _
    $region59: #{tpu_custom_call.1} parent=1 // pred_check_branch
      %69 = sbr.rel (0) target = $region61
    $region60: #{tpu_custom_call.1} parent=1 // pred_region
      _
    $region61: #{tpu_custom_call.1} parent=1 // pred_fallthru
      _
    // Predicated region
    $region62: #{tpu_custom_call.1} parent=1 // pred_check
      _
    $region63: #{tpu_custom_call.1} parent=1 // pred_check_branch
      %71 = sbr.rel (0) target = $region65
    $region64: #{tpu_custom_call.1} parent=1 // pred_region
      _
    $region65: #{tpu_custom_call.1} parent=1 // pred_fallthru
      _
    // Predicated region
    $region66: #{tpu_custom_call.1} parent=1 // pred_check
      _
    $region67: #{tpu_custom_call.1} parent=1 // pred_check_branch
      %73 = sbr.rel (0) target = $region69
    $region68: #{tpu_custom_call.1} parent=1 // pred_region
      _
    $region69: #{tpu_custom_call.1} parent=1 // pred_fallthru
      _
    // Predicated region
    $region70: #{tpu_custom_call.1} parent=1 // pred_check
      _
    $region71: #{tpu_custom_call.1} parent=1 // pred_check_branch
      %75 = sbr.rel (0) target = $region73
    $region72: #{tpu_custom_call.1} parent=1 // pred_region
      %77 = dma.done [#allocation4], 32768
    $region73: #{tpu_custom_call.1} parent=1 // pred_fallthru
      _
    %v79 = vld [vmem:[%s0] sm:$0xf]
    %v80 = vld [vmem:[%s1] sm:$0xff]
    %v81 = vpack.c.bf16 %v80, %v80
    %vm82 = vcmask 64512
    %v84 = vsel %vm82, %v79, 0
    %vm86 = vcmask 1043456
    %v88 = vsel %vm86, %v81, 0
    %90 = vmatpush.bf16.msra.mxu0 0
    %91 = vmatpush.bf16.msra.mxu0 0
    %92 = vmatpush.bf16.msra.mxu0 0
    %93 = vmatpush.bf16.msra.mxu0 0
    %94 = vmatpush.bf16.msra.mxu0 0
    %95 = vmatpush.bf16.msra.mxu0 0
    %96 = vmatpush.bf16.msra.mxu0 0
    %97 = vmatpush.bf16.msra.mxu0 %v88
    %98 = vmatmul.bf16.gmra.mxu0 %v84
    %v99 = vpop.f32.mrf.mxu0
    %v100 = vadd.f32 0.0, %v99
    %v101 = vpop.f32.mrf.mxu0
    %102 = vdwg.mxu0
    %104 = vrot.lane.b32.xlu0 %v80, 16
    %v105 = vpop.permute.xlu0 %104
    %vm107 = vcmask 130048
    %v108 = vsel %vm107, %v100, %v105
    %v109 = vpack.c.bf16 %v108, %v108
    %v110 = vld [vmem:[%s3] sm:$0xf]
    %v111 = vld [vmem:[%s3 + $0x4] sm:$0xf]
    %v112 = vld [vmem:[%s3 + $0x8] sm:$0xf]
    %v113 = vld [vmem:[%s3 + $0xc] sm:$0xf]
    %v114 = vld [vmem:[%s4] sm:$0x1]
    %v116 = vperm.slane %v114, 0
    %v122 = vunpack.c.l.b16 %v110
    %v123 = vunpack.c.l.b16 %v111
    %v124 = vunpack.c.l.b16 %v112
    %v125 = vunpack.c.l.b16 %v113
    %v126 = vpack.c.b16 %v123, %v122
    %v127 = vpack.c.b16 %v125, %v124
    %vm130 = vcmask 261120
    %v132 = vsel %vm130, %v109, 0
    %134 = vmatpush.bf16.msra.mxu0 0
    %135 = vmatpush.bf16.msra.mxu0 0
    %136 = vmatpush.bf16.msra.mxu0 0
    %137 = vmatpush.bf16.msra.mxu0 0
    %138 = vmatpush.bf16.msra.mxu0 0
    %139 = vmatpush.bf16.msra.mxu0 0
    %140 = vmatpush.bf16.msra.mxu0 %v127
    %141 = vmatpush.bf16.msra.mxu0 %v126
    %142 = vmatmul.bf16.gmra.mxu0 %v132
    %v143 = vpop.f32.mrf.mxu0
    %v144 = vadd.f32 %v116, %v143
    %v145 = vpop.f32.mrf.mxu0
    %146 = vdwg.mxu0
    %v147 = vmax.f32 %v144, 0.0
    %v148 = vpack.c.bf16 %v147, %v147
    %v150 = vsel %vm86, %v148, 0
    %152 = vmatpush.bf16.msra.mxu0 0
    %153 = vmatpush.bf16.msra.mxu0 0
    %154 = vmatpush.bf16.msra.mxu0 0
    %155 = vmatpush.bf16.msra.mxu0 0
    %156 = vmatpush.bf16.msra.mxu0 0
    %157 = vmatpush.bf16.msra.mxu0 0
    %158 = vmatpush.bf16.msra.mxu0 0
    %159 = vmatpush.bf16.msra.mxu0 %v150
    %160 = vmatmul.bf16.gmra.mxu0 %v84
    %v161 = vpop.f32.mrf.mxu0
    %v162 = vadd.f32 0.0, %v161
    %v163 = vpop.f32.mrf.mxu0
    %164 = vdwg.mxu0
    %166 = vrot.lane.b32.xlu0 %v147, 32
    %v167 = vpop.permute.xlu0 %166
    %v169 = vsel %vm130, %v162, %v167
    %v170 = vpack.c.bf16 %v169, %v169
    %v171 = vld [vmem:[%s5] sm:$0xf]
    %v172 = vld [vmem:[%s5 + $0x4] sm:$0xf]
    %v173 = vld [vmem:[%s5 + $0x8] sm:$0xf]
    %v174 = vld [vmem:[%s5 + $0xc] sm:$0xf]
    %v175 = vld [vmem:[%s5 + $0x10] sm:$0xf]
    %v176 = vld [vmem:[%s5 + $0x14] sm:$0xf]
    %v177 = vld [vmem:[%s5 + $0x18] sm:$0xf]
    %v178 = vld [vmem:[%s5 + $0x1c] sm:$0xf]
    %v179 = vld [vmem:[%s6] sm:$0x1]
    %v181 = vperm.slane %v179, 0
    %v191 = vunpack.c.l.b16 %v171
    %v192 = vunpack.c.l.b16 %v172
    %v193 = vunpack.c.l.b16 %v173
    %v194 = vunpack.c.l.b16 %v174
    %v195 = vunpack.c.l.b16 %v175
    %v196 = vunpack.c.l.b16 %v176
    %v197 = vunpack.c.l.b16 %v177
    %v198 = vunpack.c.l.b16 %v178
    %v199 = vpack.c.b16 %v192, %v191
    %v200 = vpack.c.b16 %v194, %v193
    %v201 = vpack.c.b16 %v196, %v195
    %v202 = vpack.c.b16 %v198, %v197
    %vm207 = vcmask 523264
    %v209 = vsel %vm207, %v170, 0
    %211 = vmatpush.bf16.msra.mxu0 0
    %212 = vmatpush.bf16.msra.mxu0 0
    %213 = vmatpush.bf16.msra.mxu0 0
    %214 = vmatpush.bf16.msra.mxu0 0
    %215 = vmatpush.bf16.msra.mxu0 %v202
    %216 = vmatpush.bf16.msra.mxu0 %v201
    %217 = vmatpush.bf16.msra.mxu0 %v200
    %218 = vmatpush.bf16.msra.mxu0 %v199
    %219 = vmatmul.bf16.gmra.mxu0 %v209
    %v220 = vpop.f32.mrf.mxu0
    %v221 = vadd.f32 %v181, %v220
    %v222 = vpop.f32.mrf.mxu0
    %223 = vdwg.mxu0
    %v224 = vld [vmem:[%s7] sm:$0xff]
    %v225 = vld [vmem:[%s7 + $0x8] sm:$0xff]
    %v226 = vld [vmem:[%s7 + $0x10] sm:$0xff]
    %v227 = vld [vmem:[%s7 + $0x18] sm:$0xff]
    %v228 = vld [vmem:[#allocation2] sm:$0x1]
    %v230 = vperm.slane %v228, 0
    %v233 = vsel %vm130, %v221, 0
    %235 = vmatpush.msra.mxu0 0.0
    %236 = vmatpush.msra.mxu0 0.0
    %237 = vmatpush.msra.mxu0 0.0
    %238 = vmatpush.msra.mxu0 0.0
    %239 = vmatpush.msra.mxu0 0.0
    %240 = vmatpush.msra.mxu0 0.0
    %241 = vmatpush.msra.mxu0 0.0
    %242 = vmatpush.msra.mxu0 0.0
    %243 = vmatpush.msra.mxu0 0.0
    %244 = vmatpush.msra.mxu0 0.0
    %245 = vmatpush.msra.mxu0 0.0
    %246 = vmatpush.msra.mxu0 0.0
    %247 = vmatpush.msra.mxu0 %v227
    %248 = vmatpush.msra.mxu0 %v226
    %249 = vmatpush.msra.mxu0 %v225
    %250 = vmatpush.msra.mxu0 %v224
    %251 = vmatmul.f32.gmra.mxu0 %v233
    %v252 = vpop.f32.mrf.mxu0
    %v253 = vadd.f32 %v230, %v252
    %254 = vdwg.mxu0
    %v255 = vmax.f32 %v253, 0.0
    %vm256 = vcmask 7168
    %257 = vst.msk [vmem:[%s17] sm:$0xff] %vm256, %v255
    %v258 = vld [vmem:[%s2] sm:$0xff]
    %v259 = vadd.f32 %v221, %v258
    %v260 = vpack.c.bf16 %v259, %v259
    %v261 = vld [vmem:[%s9] sm:$0xff]
    %v262 = vld [vmem:[%s9 + $0x8] sm:$0xff]
    %v263 = vld [vmem:[%s9 + $0x10] sm:$0xff]
    %v264 = vld [vmem:[%s9 + $0x18] sm:$0xff]
    %v265 = vld [vmem:[%s10] sm:$0x3]
    %v267 = vperm.slane %v265, 0
    %v268 = vperm.slane %v265, 1
    %v275 = vunpack.c.l.b16 %v261
    %v276 = vunpack.c.h.b16 %v261
    %v277 = vunpack.c.l.b16 %v262
    %v278 = vunpack.c.h.b16 %v262
    %v279 = vunpack.c.l.b16 %v263
    %v280 = vunpack.c.h.b16 %v263
    %v281 = vunpack.c.l.b16 %v264
    %v282 = vunpack.c.h.b16 %v264
    %v283 = vpack.c.b16 %v277, %v275
    %v284 = vpack.c.b16 %v278, %v276
    %v285 = vpack.c.b16 %v281, %v279
    %v286 = vpack.c.b16 %v282, %v280
    %v292 = vsel %vm130, %v260, 0
    %294 = vmatpush.bf16.msra.mxu0 0
    %295 = vmatpush.bf16.msra.mxu0 0
    %296 = vmatpush.bf16.msra.mxu0 0
    %297 = vmatpush.bf16.msra.mxu0 0
    %298 = vmatpush.bf16.msra.mxu0 0
    %299 = vmatpush.bf16.msra.mxu0 0
    %300 = vmatpush.bf16.msra.mxu0 %v285
    %301 = vmatpush.bf16.msra.mxu0 %v283
    %302 = vmatmul.bf16.gmra.mxu0 %v292
    %v303 = vpop.f32.mrf.mxu0
    %v304 = vadd.f32 %v267, %v303
    %v305 = vpop.f32.mrf.mxu0
    %306 = vdwg.mxu0
    %307 = vmatpush.bf16.msra.mxu0 0
    %308 = vmatpush.bf16.msra.mxu0 0
    %309 = vmatpush.bf16.msra.mxu0 0
    %310 = vmatpush.bf16.msra.mxu0 0
    %311 = vmatpush.bf16.msra.mxu0 0
    %312 = vmatpush.bf16.msra.mxu0 0
    %313 = vmatpush.bf16.msra.mxu0 %v286
    %314 = vmatpush.bf16.msra.mxu0 %v284
    %315 = vmatmul.bf16.gmra.mxu0 %v292
    %v316 = vpop.f32.mrf.mxu0
    %v317 = vadd.f32 %v268, %v316
    %v318 = vpop.f32.mrf.mxu0
    %319 = vdwg.mxu0
    %v320 = vmax.f32 %v304, 0.0
    %v321 = vmax.f32 %v317, 0.0
    %v322 = vpack.c.bf16 %v320, %v320
    %v323 = vpack.c.bf16 %v321, %v321
    %v324 = vld [vmem:[#allocation3] sm:$0xff]
    %v325 = vld [vmem:[#allocation3 + $0x8] sm:$0xff]
    %v326 = vld [vmem:[#allocation3 + $0x10] sm:$0xff]
    %v327 = vld [vmem:[#allocation3 + $0x18] sm:$0xff]
    %v328 = vld [vmem:[#allocation3 + $0x20] sm:$0xff]
    %v329 = vld [vmem:[#allocation3 + $0x28] sm:$0xff]
    %v330 = vld [vmem:[#allocation3 + $0x30] sm:$0xff]
    %v331 = vld [vmem:[#allocation3 + $0x38] sm:$0xff]
    %v332 = vld [vmem:[#allocation3 + $0x40] sm:$0xff]
    %v333 = vld [vmem:[#allocation3 + $0x48] sm:$0xff]
    %v334 = vld [vmem:[#allocation3 + $0x50] sm:$0xff]
    %v335 = vld [vmem:[#allocation3 + $0x58] sm:$0xff]
    %v336 = vld [vmem:[#allocation3 + $0x60] sm:$0xff]
    %v337 = vld [vmem:[#allocation3 + $0x68] sm:$0xff]
    %v338 = vld [vmem:[#allocation3 + $0x70] sm:$0xff]
    %v339 = vld [vmem:[#allocation3 + $0x78] sm:$0xff]
    %v340 = vld [vmem:[#allocation3 + $0x80] sm:$0xff]
    %v341 = vld [vmem:[#allocation3 + $0x88] sm:$0xff]
    %v342 = vld [vmem:[#allocation3 + $0x90] sm:$0xff]
    %v343 = vld [vmem:[#allocation3 + $0x98] sm:$0xff]
    %v344 = vld [vmem:[#allocation3 + $0xa0] sm:$0xff]
    %v345 = vld [vmem:[#allocation3 + $0xa8] sm:$0xff]
    %v346 = vld [vmem:[#allocation3 + $0xb0] sm:$0xff]
    %v347 = vld [vmem:[#allocation3 + $0xb8] sm:$0xff]
    %v348 = vld [vmem:[#allocation3 + $0xc0] sm:$0xff]
    %v349 = vld [vmem:[#allocation3 + $0xc8] sm:$0xff]
    %v350 = vld [vmem:[#allocation3 + $0xd0] sm:$0xff]
    %v351 = vld [vmem:[#allocation3 + $0xd8] sm:$0xff]
    %v352 = vld [vmem:[#allocation3 + $0xe0] sm:$0xff]
    %v353 = vld [vmem:[#allocation3 + $0xe8] sm:$0xff]
    %v354 = vld [vmem:[#allocation3 + $0xf0] sm:$0xff]
    %v355 = vld [vmem:[#allocation3 + $0xf8] sm:$0xff]
    %v356 = vld [vmem:[#allocation3 + $0x100] sm:$0xff]
    %v357 = vld [vmem:[#allocation3 + $0x108] sm:$0xff]
    %v358 = vld [vmem:[#allocation3 + $0x110] sm:$0xff]
    %v359 = vld [vmem:[#allocation3 + $0x118] sm:$0xff]
    %v360 = vld [vmem:[#allocation3 + $0x120] sm:$0xff]
    %v361 = vld [vmem:[#allocation3 + $0x128] sm:$0xff]
    %v362 = vld [vmem:[#allocation3 + $0x130] sm:$0xff]
    %v363 = vld [vmem:[#allocation3 + $0x138] sm:$0xff]
    %v364 = vld [vmem:[#allocation3 + $0x140] sm:$0xff]
    %v365 = vld [vmem:[#allocation3 + $0x148] sm:$0xff]
    %v366 = vld [vmem:[#allocation3 + $0x150] sm:$0xff]
    %v367 = vld [vmem:[#allocation3 + $0x158] sm:$0xff]
    %v368 = vld [vmem:[#allocation3 + $0x160] sm:$0xff]
    %v369 = vld [vmem:[#allocation3 + $0x168] sm:$0xff]
    %v370 = vld [vmem:[#allocation3 + $0x170] sm:$0xff]
    %v371 = vld [vmem:[#allocation3 + $0x178] sm:$0xff]
    %v372 = vld [vmem:[#allocation3 + $0x180] sm:$0xff]
    %v373 = vld [vmem:[#allocation3 + $0x188] sm:$0xff]
    %v374 = vld [vmem:[#allocation3 + $0x190] sm:$0xff]
    %v375 = vld [vmem:[#allocation3 + $0x198] sm:$0xff]
    %v376 = vld [vmem:[#allocation3 + $0x1a0] sm:$0xff]
    %v377 = vld [vmem:[#allocation3 + $0x1a8] sm:$0xff]
    %v378 = vld [vmem:[#allocation3 + $0x1b0] sm:$0xff]
    %v379 = vld [vmem:[#allocation3 + $0x1b8] sm:$0xff]
    %v380 = vld [vmem:[#allocation3 + $0x1c0] sm:$0xff]
    %v381 = vld [vmem:[#allocation3 + $0x1c8] sm:$0xff]
    %v382 = vld [vmem:[#allocation3 + $0x1d0] sm:$0xff]
    %v383 = vld [vmem:[#allocation3 + $0x1d8] sm:$0xff]
    %v384 = vld [vmem:[#allocation3 + $0x1e0] sm:$0xff]
    %v385 = vld [vmem:[#allocation3 + $0x1e8] sm:$0xff]
    %v386 = vld [vmem:[#allocation3 + $0x1f0] sm:$0xff]
    %v387 = vld [vmem:[#allocation3 + $0x1f8] sm:$0xff]
    %v388 = vld [vmem:[#allocation3 + $0x200] sm:$0xff]
    %v389 = vld [vmem:[#allocation3 + $0x208] sm:$0xff]
    %v390 = vld [vmem:[#allocation3 + $0x210] sm:$0xff]
    %v391 = vld [vmem:[#allocation3 + $0x218] sm:$0xff]
    %v392 = vld [vmem:[#allocation3 + $0x220] sm:$0xff]
    %v393 = vld [vmem:[#allocation3 + $0x228] sm:$0xff]
    %v394 = vld [vmem:[#allocation3 + $0x230] sm:$0xff]
    %v395 = vld [vmem:[#allocation3 + $0x238] sm:$0xff]
    %v396 = vld [vmem:[#allocation3 + $0x240] sm:$0xff]
    %v397 = vld [vmem:[#allocation3 + $0x248] sm:$0xff]
    %v398 = vld [vmem:[#allocation3 + $0x250] sm:$0xff]
    %v399 = vld [vmem:[#allocation3 + $0x258] sm:$0xff]
    %v400 = vld [vmem:[#allocation3 + $0x260] sm:$0xff]
    %v401 = vld [vmem:[#allocation3 + $0x268] sm:$0xff]
    %v402 = vld [vmem:[#allocation3 + $0x270] sm:$0xff]
    %v403 = vld [vmem:[#allocation3 + $0x278] sm:$0xff]
    %v404 = vld [vmem:[#allocation3 + $0x280] sm:$0xff]
    %v405 = vld [vmem:[#allocation3 + $0x288] sm:$0xff]
    %v406 = vld [vmem:[#allocation3 + $0x290] sm:$0xff]
    %v407 = vld [vmem:[#allocation3 + $0x298] sm:$0xff]
    %v408 = vld [vmem:[#allocation3 + $0x2a0] sm:$0xff]
    %v409 = vld [vmem:[#allocation3 + $0x2a8] sm:$0xff]
    %v410 = vld [vmem:[#allocation3 + $0x2b0] sm:$0xff]
    %v411 = vld [vmem:[#allocation3 + $0x2b8] sm:$0xff]
    %v412 = vld [vmem:[#allocation3 + $0x2c0] sm:$0xff]
    %v413 = vld [vmem:[#allocation3 + $0x2c8] sm:$0xff]
    %v414 = vld [vmem:[#allocation3 + $0x2d0] sm:$0xff]
    %v415 = vld [vmem:[#allocation3 + $0x2d8] sm:$0xff]
    %v416 = vld [vmem:[#allocation3 + $0x2e0] sm:$0xff]
    %v417 = vld [vmem:[#allocation3 + $0x2e8] sm:$0xff]
    %v418 = vld [vmem:[#allocation3 + $0x2f0] sm:$0xff]
    %v419 = vld [vmem:[#allocation3 + $0x2f8] sm:$0xff]
    %v420 = vld [vmem:[#allocation3 + $0x300] sm:$0xff]
    %v421 = vld [vmem:[#allocation3 + $0x308] sm:$0xff]
    %v422 = vld [vmem:[#allocation3 + $0x310] sm:$0xff]
    %v423 = vld [vmem:[#allocation3 + $0x318] sm:$0xff]
    %v424 = vld [vmem:[#allocation3 + $0x320] sm:$0xff]
    %v425 = vld [vmem:[#allocation3 + $0x328] sm:$0xff]
    %v426 = vld [vmem:[#allocation3 + $0x330] sm:$0xff]
    %v427 = vld [vmem:[#allocation3 + $0x338] sm:$0xff]
    %v428 = vld [vmem:[#allocation3 + $0x340] sm:$0xff]
    %v429 = vld [vmem:[#allocation3 + $0x348] sm:$0xff]
    %v430 = vld [vmem:[#allocation3 + $0x350] sm:$0xff]
    %v431 = vld [vmem:[#allocation3 + $0x358] sm:$0xff]
    %v432 = vld [vmem:[#allocation3 + $0x360] sm:$0xff]
    %v433 = vld [vmem:[#allocation3 + $0x368] sm:$0xff]
    %v434 = vld [vmem:[#allocation3 + $0x370] sm:$0xff]
    %v435 = vld [vmem:[#allocation3 + $0x378] sm:$0xff]
    %v436 = vld [vmem:[#allocation3 + $0x380] sm:$0xff]
    %v437 = vld [vmem:[#allocation3 + $0x388] sm:$0xff]
    %v438 = vld [vmem:[#allocation3 + $0x390] sm:$0xff]
    %v439 = vld [vmem:[#allocation3 + $0x398] sm:$0xff]
    %v440 = vld [vmem:[#allocation3 + $0x3a0] sm:$0xff]
    %v441 = vld [vmem:[#allocation3 + $0x3a8] sm:$0xff]
    %v442 = vld [vmem:[#allocation3 + $0x3b0] sm:$0xff]
    %v443 = vld [vmem:[#allocation3 + $0x3b8] sm:$0xff]
    %v444 = vld [vmem:[#allocation3 + $0x3c0] sm:$0xff]
    %v445 = vld [vmem:[#allocation3 + $0x3c8] sm:$0xff]
    %v446 = vld [vmem:[#allocation3 + $0x3d0] sm:$0xff]
    %v447 = vld [vmem:[#allocation3 + $0x3d8] sm:$0xff]
    %v448 = vld [vmem:[#allocation3 + $0x3e0] sm:$0xff]
    %v449 = vld [vmem:[#allocation3 + $0x3e8] sm:$0xff]
    %v450 = vld [vmem:[#allocation3 + $0x3f0] sm:$0xff]
    %v451 = vld [vmem:[#allocation3 + $0x3f8] sm:$0xff]
    %v452 = vld [vmem:[#allocation3 + $0x400] sm:$0xff]
    %v453 = vld [vmem:[#allocation3 + $0x408] sm:$0xff]
    %v454 = vld [vmem:[#allocation3 + $0x410] sm:$0xff]
    %v455 = vld [vmem:[#allocation3 + $0x418] sm:$0xff]
    %v456 = vld [vmem:[#allocation3 + $0x420] sm:$0xff]
    %v457 = vld [vmem:[#allocation3 + $0x428] sm:$0xff]
    %v458 = vld [vmem:[#allocation3 + $0x430] sm:$0xff]
    %v459 = vld [vmem:[#allocation3 + $0x438] sm:$0xff]
    %v460 = vld [vmem:[#allocation3 + $0x440] sm:$0xff]
    %v461 = vld [vmem:[#allocation3 + $0x448] sm:$0xff]
    %v462 = vld [vmem:[#allocation3 + $0x450] sm:$0xff]
    %v463 = vld [vmem:[#allocation3 + $0x458] sm:$0xff]
    %v464 = vld [vmem:[#allocation3 + $0x460] sm:$0xff]
    %v465 = vld [vmem:[#allocation3 + $0x468] sm:$0xff]
    %v466 = vld [vmem:[#allocation3 + $0x470] sm:$0xff]
    %v467 = vld [vmem:[#allocation3 + $0x478] sm:$0xff]
    %v468 = vld [vmem:[#allocation3 + $0x480] sm:$0xff]
    %v469 = vld [vmem:[#allocation3 + $0x488] sm:$0xff]
    %v470 = vld [vmem:[#allocation3 + $0x490] sm:$0xff]
    %v471 = vld [vmem:[#allocation3 + $0x498] sm:$0xff]
    %v472 = vld [vmem:[#allocation3 + $0x4a0] sm:$0xff]
    %v473 = vld [vmem:[#allocation3 + $0x4a8] sm:$0xff]
    %v474 = vld [vmem:[#allocation3 + $0x4b0] sm:$0xff]
    %v475 = vld [vmem:[#allocation3 + $0x4b8] sm:$0xff]
    %v476 = vld [vmem:[#allocation3 + $0x4c0] sm:$0xff]
    %v477 = vld [vmem:[#allocation3 + $0x4c8] sm:$0xff]
    %v478 = vld [vmem:[#allocation3 + $0x4d0] sm:$0xff]
    %v479 = vld [vmem:[#allocation3 + $0x4d8] sm:$0xff]
    %v480 = vld [vmem:[#allocation3 + $0x4e0] sm:$0xff]
    %v481 = vld [vmem:[#allocation3 + $0x4e8] sm:$0xff]
    %v482 = vld [vmem:[#allocation3 + $0x4f0] sm:$0xff]
    %v483 = vld [vmem:[#allocation3 + $0x4f8] sm:$0xff]
    %v484 = vld [vmem:[#allocation3 + $0x500] sm:$0xff]
    %v485 = vld [vmem:[#allocation3 + $0x508] sm:$0xff]
    %v486 = vld [vmem:[#allocation3 + $0x510] sm:$0xff]
    %v487 = vld [vmem:[#allocation3 + $0x518] sm:$0xff]
    %v488 = vld [vmem:[#allocation3 + $0x520] sm:$0xff]
    %v489 = vld [vmem:[#allocation3 + $0x528] sm:$0xff]
    %v490 = vld [vmem:[#allocation3 + $0x530] sm:$0xff]
    %v491 = vld [vmem:[#allocation3 + $0x538] sm:$0xff]
    %v492 = vld [vmem:[#allocation3 + $0x540] sm:$0xff]
    %v493 = vld [vmem:[#allocation3 + $0x548] sm:$0xff]
    %v494 = vld [vmem:[#allocation3 + $0x550] sm:$0xff]
    %v495 = vld [vmem:[#allocation3 + $0x558] sm:$0xff]
    %v496 = vld [vmem:[#allocation3 + $0x560] sm:$0xff]
    %v497 = vld [vmem:[#allocation3 + $0x568] sm:$0xff]
    %v498 = vld [vmem:[#allocation3 + $0x570] sm:$0xff]
    %v499 = vld [vmem:[#allocation3 + $0x578] sm:$0xff]
    %v500 = vld [vmem:[#allocation3 + $0x580] sm:$0xff]
    %v501 = vld [vmem:[#allocation3 + $0x588] sm:$0xff]
    %v502 = vld [vmem:[#allocation3 + $0x590] sm:$0xff]
    %v503 = vld [vmem:[#allocation3 + $0x598] sm:$0xff]
    %v504 = vld [vmem:[#allocation3 + $0x5a0] sm:$0xff]
    %v505 = vld [vmem:[#allocation3 + $0x5a8] sm:$0xff]
    %v506 = vld [vmem:[#allocation3 + $0x5b0] sm:$0xff]
    %v507 = vld [vmem:[#allocation3 + $0x5b8] sm:$0xff]
    %v508 = vld [vmem:[#allocation3 + $0x5c0] sm:$0xff]
    %v509 = vld [vmem:[#allocation3 + $0x5c8] sm:$0xff]
    %v510 = vld [vmem:[#allocation3 + $0x5d0] sm:$0xff]
    %v511 = vld [vmem:[#allocation3 + $0x5d8] sm:$0xff]
    %v512 = vld [vmem:[#allocation3 + $0x5e0] sm:$0xff]
    %v513 = vld [vmem:[#allocation3 + $0x5e8] sm:$0xff]
    %v514 = vld [vmem:[#allocation3 + $0x5f0] sm:$0xff]
    %v515 = vld [vmem:[#allocation3 + $0x5f8] sm:$0xff]
    %v516 = vld [vmem:[#allocation3 + $0x600] sm:$0xff]
    %v517 = vld [vmem:[#allocation3 + $0x608] sm:$0xff]
    %v518 = vld [vmem:[#allocation3 + $0x610] sm:$0xff]
    %v519 = vld [vmem:[#allocation3 + $0x618] sm:$0xff]
    %v520 = vld [vmem:[#allocation3 + $0x620] sm:$0xff]
    %v521 = vld [vmem:[#allocation3 + $0x628] sm:$0xff]
    %v522 = vld [vmem:[#allocation3 + $0x630] sm:$0xff]
    %v523 = vld [vmem:[#allocation3 + $0x638] sm:$0xff]
    %v524 = vld [vmem:[#allocation3 + $0x640] sm:$0xff]
    %v525 = vld [vmem:[#allocation3 + $0x648] sm:$0xff]
    %v526 = vld [vmem:[#allocation3 + $0x650] sm:$0xff]
    %v527 = vld [vmem:[#allocation3 + $0x658] sm:$0xff]
    %v528 = vld [vmem:[#allocation3 + $0x660] sm:$0xff]
    %v529 = vld [vmem:[#allocation3 + $0x668] sm:$0xff]
    %v530 = vld [vmem:[#allocation3 + $0x670] sm:$0xff]
    %v531 = vld [vmem:[#allocation3 + $0x678] sm:$0xff]
    %v532 = vld [vmem:[#allocation3 + $0x680] sm:$0xff]
    %v533 = vld [vmem:[#allocation3 + $0x688] sm:$0xff]
    %v534 = vld [vmem:[#allocation3 + $0x690] sm:$0xff]
    %v535 = vld [vmem:[#allocation3 + $0x698] sm:$0xff]
    %v536 = vld [vmem:[#allocation3 + $0x6a0] sm:$0xff]
    %v537 = vld [vmem:[#allocation3 + $0x6a8] sm:$0xff]
    %v538 = vld [vmem:[#allocation3 + $0x6b0] sm:$0xff]
    %v539 = vld [vmem:[#allocation3 + $0x6b8] sm:$0xff]
    %v540 = vld [vmem:[#allocation3 + $0x6c0] sm:$0xff]
    %v541 = vld [vmem:[#allocation3 + $0x6c8] sm:$0xff]
    %v542 = vld [vmem:[#allocation3 + $0x6d0] sm:$0xff]
    %v543 = vld [vmem:[#allocation3 + $0x6d8] sm:$0xff]
    %v544 = vld [vmem:[#allocation3 + $0x6e0] sm:$0xff]
    %v545 = vld [vmem:[#allocation3 + $0x6e8] sm:$0xff]
    %v546 = vld [vmem:[#allocation3 + $0x6f0] sm:$0xff]
    %v547 = vld [vmem:[#allocation3 + $0x6f8] sm:$0xff]
    %v548 = vld [vmem:[#allocation3 + $0x700] sm:$0xff]
    %v549 = vld [vmem:[#allocation3 + $0x708] sm:$0xff]
    %v550 = vld [vmem:[#allocation3 + $0x710] sm:$0xff]
    %v551 = vld [vmem:[#allocation3 + $0x718] sm:$0xff]
    %v552 = vld [vmem:[#allocation3 + $0x720] sm:$0xff]
    %v553 = vld [vmem:[#allocation3 + $0x728] sm:$0xff]
    %v554 = vld [vmem:[#allocation3 + $0x730] sm:$0xff]
    %v555 = vld [vmem:[#allocation3 + $0x738] sm:$0xff]
    %v556 = vld [vmem:[#allocation3 + $0x740] sm:$0xff]
    %v557 = vld [vmem:[#allocation3 + $0x748] sm:$0xff]
    %v558 = vld [vmem:[#allocation3 + $0x750] sm:$0xff]
    %v559 = vld [vmem:[#allocation3 + $0x758] sm:$0xff]
    %v560 = vld [vmem:[#allocation3 + $0x760] sm:$0xff]
    %v561 = vld [vmem:[#allocation3 + $0x768] sm:$0xff]
    %v562 = vld [vmem:[#allocation3 + $0x770] sm:$0xff]
    %v563 = vld [vmem:[#allocation3 + $0x778] sm:$0xff]
    %v564 = vld [vmem:[#allocation3 + $0x780] sm:$0xff]
    %v565 = vld [vmem:[#allocation3 + $0x788] sm:$0xff]
    %v566 = vld [vmem:[#allocation3 + $0x790] sm:$0xff]
    %v567 = vld [vmem:[#allocation3 + $0x798] sm:$0xff]
    %v568 = vld [vmem:[#allocation3 + $0x7a0] sm:$0xff]
    %v569 = vld [vmem:[#allocation3 + $0x7a8] sm:$0xff]
    %v570 = vld [vmem:[#allocation3 + $0x7b0] sm:$0xff]
    %v571 = vld [vmem:[#allocation3 + $0x7b8] sm:$0xff]
    %v572 = vld [vmem:[#allocation3 + $0x7c0] sm:$0xff]
    %v573 = vld [vmem:[#allocation3 + $0x7c8] sm:$0xff]
    %v574 = vld [vmem:[#allocation3 + $0x7d0] sm:$0xff]
    %v575 = vld [vmem:[#allocation3 + $0x7d8] sm:$0xff]
    %v576 = vld [vmem:[#allocation3 + $0x7e0] sm:$0xff]
    %v577 = vld [vmem:[#allocation3 + $0x7e8] sm:$0xff]
    %v578 = vld [vmem:[#allocation3 + $0x7f0] sm:$0xff]
    %v579 = vld [vmem:[#allocation3 + $0x7f8] sm:$0xff]
    %v580 = vld [vmem:[%s12] sm:$0xff]
    %v581 = vld [vmem:[%s12 + $0x8] sm:$0xff]
    %v584 = vperm.slane %v580, 0
    %v585 = vperm.slane %v580, 1
    %v586 = vperm.slane %v580, 2
    %v587 = vperm.slane %v580, 3
    %v588 = vperm.slane %v580, 4
    %v589 = vperm.slane %v580, 5
    %v590 = vperm.slane %v580, 6
    %v591 = vperm.slane %v580, 7
    %v592 = vperm.slane %v581, 0
    %v593 = vperm.slane %v581, 1
    %v594 = vperm.slane %v581, 2
    %v595 = vperm.slane %v581, 3
    %v596 = vperm.slane %v581, 4
    %v597 = vperm.slane %v581, 5
    %v598 = vperm.slane %v581, 6
    %v599 = vperm.slane %v581, 7
    %v872 = vunpack.c.l.b16 %v324
    %v873 = vunpack.c.h.b16 %v324
    %v874 = vunpack.c.l.b16 %v325
    %v875 = vunpack.c.h.b16 %v325
    %v876 = vunpack.c.l.b16 %v326
    %v877 = vunpack.c.h.b16 %v326
    %v878 = vunpack.c.l.b16 %v327
    %v879 = vunpack.c.h.b16 %v327
    %v880 = vunpack.c.l.b16 %v328
    %v881 = vunpack.c.h.b16 %v328
    %v882 = vunpack.c.l.b16 %v329
    %v883 = vunpack.c.h.b16 %v329
    %v884 = vunpack.c.l.b16 %v330
    %v885 = vunpack.c.h.b16 %v330
    %v886 = vunpack.c.l.b16 %v331
    %v887 = vunpack.c.h.b16 %v331
    %v888 = vunpack.c.l.b16 %v332
    %v889 = vunpack.c.h.b16 %v332
    %v890 = vunpack.c.l.b16 %v333
    %v891 = vunpack.c.h.b16 %v333
    %v892 = vunpack.c.l.b16 %v334
    %v893 = vunpack.c.h.b16 %v334
    %v894 = vunpack.c.l.b16 %v335
    %v895 = vunpack.c.h.b16 %v335
    %v896 = vunpack.c.l.b16 %v336
    %v897 = vunpack.c.h.b16 %v336
    %v898 = vunpack.c.l.b16 %v337
    %v899 = vunpack.c.h.b16 %v337
    %v900 = vunpack.c.l.b16 %v338
    %v901 = vunpack.c.h.b16 %v338
    %v902 = vunpack.c.l.b16 %v339
    %v903 = vunpack.c.h.b16 %v339
    %v904 = vunpack.c.l.b16 %v340
    %v905 = vunpack.c.h.b16 %v340
    %v906 = vunpack.c.l.b16 %v341
    %v907 = vunpack.c.h.b16 %v341
    %v908 = vunpack.c.l.b16 %v342
    %v909 = vunpack.c.h.b16 %v342
    %v910 = vunpack.c.l.b16 %v343
    %v911 = vunpack.c.h.b16 %v343
    %v912 = vunpack.c.l.b16 %v344
    %v913 = vunpack.c.h.b16 %v344
    %v914 = vunpack.c.l.b16 %v345
    %v915 = vunpack.c.h.b16 %v345
    %v916 = vunpack.c.l.b16 %v346
    %v917 = vunpack.c.h.b16 %v346
    %v918 = vunpack.c.l.b16 %v347
    %v919 = vunpack.c.h.b16 %v347
    %v920 = vunpack.c.l.b16 %v348
    %v921 = vunpack.c.h.b16 %v348
    %v922 = vunpack.c.l.b16 %v349
    %v923 = vunpack.c.h.b16 %v349
    %v924 = vunpack.c.l.b16 %v350
    %v925 = vunpack.c.h.b16 %v350
    %v926 = vunpack.c.l.b16 %v351
    %v927 = vunpack.c.h.b16 %v351
    %v928 = vunpack.c.l.b16 %v352
    %v929 = vunpack.c.h.b16 %v352
    %v930 = vunpack.c.l.b16 %v353
    %v931 = vunpack.c.h.b16 %v353
    %v932 = vunpack.c.l.b16 %v354
    %v933 = vunpack.c.h.b16 %v354
    %v934 = vunpack.c.l.b16 %v355
    %v935 = vunpack.c.h.b16 %v355
    %v936 = vunpack.c.l.b16 %v356
    %v937 = vunpack.c.h.b16 %v356
    %v938 = vunpack.c.l.b16 %v357
    %v939 = vunpack.c.h.b16 %v357
    %v940 = vunpack.c.l.b16 %v358
    %v941 = vunpack.c.h.b16 %v358
    %v942 = vunpack.c.l.b16 %v359
    %v943 = vunpack.c.h.b16 %v359
    %v944 = vunpack.c.l.b16 %v360
    %v945 = vunpack.c.h.b16 %v360
    %v946 = vunpack.c.l.b16 %v361
    %v947 = vunpack.c.h.b16 %v361
    %v948 = vunpack.c.l.b16 %v362
    %v949 = vunpack.c.h.b16 %v362
    %v950 = vunpack.c.l.b16 %v363
    %v951 = vunpack.c.h.b16 %v363
    %v952 = vunpack.c.l.b16 %v364
    %v953 = vunpack.c.h.b16 %v364
    %v954 = vunpack.c.l.b16 %v365
    %v955 = vunpack.c.h.b16 %v365
    %v956 = vunpack.c.l.b16 %v366
    %v957 = vunpack.c.h.b16 %v366
    %v958 = vunpack.c.l.b16 %v367
    %v959 = vunpack.c.h.b16 %v367
    %v960 = vunpack.c.l.b16 %v368
    %v961 = vunpack.c.h.b16 %v368
    %v962 = vunpack.c.l.b16 %v369
    %v963 = vunpack.c.h.b16 %v369
    %v964 = vunpack.c.l.b16 %v370
    %v965 = vunpack.c.h.b16 %v370
    %v966 = vunpack.c.l.b16 %v371
    %v967 = vunpack.c.h.b16 %v371
    %v968 = vunpack.c.l.b16 %v372
    %v969 = vunpack.c.h.b16 %v372
    %v970 = vunpack.c.l.b16 %v373
    %v971 = vunpack.c.h.b16 %v373
    %v972 = vunpack.c.l.b16 %v374
    %v973 = vunpack.c.h.b16 %v374
    %v974 = vunpack.c.l.b16 %v375
    %v975 = vunpack.c.h.b16 %v375
    %v976 = vunpack.c.l.b16 %v376
    %v977 = vunpack.c.h.b16 %v376
    %v978 = vunpack.c.l.b16 %v377
    %v979 = vunpack.c.h.b16 %v377
    %v980 = vunpack.c.l.b16 %v378
    %v981 = vunpack.c.h.b16 %v378
    %v982 = vunpack.c.l.b16 %v379
    %v983 = vunpack.c.h.b16 %v379
    %v984 = vunpack.c.l.b16 %v380
    %v985 = vunpack.c.h.b16 %v380
    %v986 = vunpack.c.l.b16 %v381
    %v987 = vunpack.c.h.b16 %v381
    %v988 = vunpack.c.l.b16 %v382
    %v989 = vunpack.c.h.b16 %v382
    %v990 = vunpack.c.l.b16 %v383
    %v991 = vunpack.c.h.b16 %v383
    %v992 = vunpack.c.l.b16 %v384
    %v993 = vunpack.c.h.b16 %v384
    %v994 = vunpack.c.l.b16 %v385
    %v995 = vunpack.c.h.b16 %v385
    %v996 = vunpack.c.l.b16 %v386
    %v997 = vunpack.c.h.b16 %v386
    %v998 = vunpack.c.l.b16 %v387
    %v999 = vunpack.c.h.b16 %v387
    %v1000 = vunpack.c.l.b16 %v388
    %v1001 = vunpack.c.h.b16 %v388
    %v1002 = vunpack.c.l.b16 %v389
    %v1003 = vunpack.c.h.b16 %v389
    %v1004 = vunpack.c.l.b16 %v390
    %v1005 = vunpack.c.h.b16 %v390
    %v1006 = vunpack.c.l.b16 %v391
    %v1007 = vunpack.c.h.b16 %v391
    %v1008 = vunpack.c.l.b16 %v392
    %v1009 = vunpack.c.h.b16 %v392
    %v1010 = vunpack.c.l.b16 %v393
    %v1011 = vunpack.c.h.b16 %v393
    %v1012 = vunpack.c.l.b16 %v394
    %v1013 = vunpack.c.h.b16 %v394
    %v1014 = vunpack.c.l.b16 %v395
    %v1015 = vunpack.c.h.b16 %v395
    %v1016 = vunpack.c.l.b16 %v396
    %v1017 = vunpack.c.h.b16 %v396
    %v1018 = vunpack.c.l.b16 %v397
    %v1019 = vunpack.c.h.b16 %v397
    %v1020 = vunpack.c.l.b16 %v398
    %v1021 = vunpack.c.h.b16 %v398
    %v1022 = vunpack.c.l.b16 %v399
    %v1023 = vunpack.c.h.b16 %v399
    %v1024 = vunpack.c.l.b16 %v400
    %v1025 = vunpack.c.h.b16 %v400
    %v1026 = vunpack.c.l.b16 %v401
    %v1027 = vunpack.c.h.b16 %v401
    %v1028 = vunpack.c.l.b16 %v402
    %v1029 = vunpack.c.h.b16 %v402
    %v1030 = vunpack.c.l.b16 %v403
    %v1031 = vunpack.c.h.b16 %v403
    %v1032 = vunpack.c.l.b16 %v404
    %v1033 = vunpack.c.h.b16 %v404
    %v1034 = vunpack.c.l.b16 %v405
    %v1035 = vunpack.c.h.b16 %v405
    %v1036 = vunpack.c.l.b16 %v406
    %v1037 = vunpack.c.h.b16 %v406
    %v1038 = vunpack.c.l.b16 %v407
    %v1039 = vunpack.c.h.b16 %v407
    %v1040 = vunpack.c.l.b16 %v408
    %v1041 = vunpack.c.h.b16 %v408
    %v1042 = vunpack.c.l.b16 %v409
    %v1043 = vunpack.c.h.b16 %v409
    %v1044 = vunpack.c.l.b16 %v410
    %v1045 = vunpack.c.h.b16 %v410
    %v1046 = vunpack.c.l.b16 %v411
    %v1047 = vunpack.c.h.b16 %v411
    %v1048 = vunpack.c.l.b16 %v412
    %v1049 = vunpack.c.h.b16 %v412
    %v1050 = vunpack.c.l.b16 %v413
    %v1051 = vunpack.c.h.b16 %v413
    %v1052 = vunpack.c.l.b16 %v414
    %v1053 = vunpack.c.h.b16 %v414
    %v1054 = vunpack.c.l.b16 %v415
    %v1055 = vunpack.c.h.b16 %v415
    %v1056 = vunpack.c.l.b16 %v416
    %v1057 = vunpack.c.h.b16 %v416
    %v1058 = vunpack.c.l.b16 %v417
    %v1059 = vunpack.c.h.b16 %v417
    %v1060 = vunpack.c.l.b16 %v418
    %v1061 = vunpack.c.h.b16 %v418
    %v1062 = vunpack.c.l.b16 %v419
    %v1063 = vunpack.c.h.b16 %v419
    %v1064 = vunpack.c.l.b16 %v420
    %v1065 = vunpack.c.h.b16 %v420
    %v1066 = vunpack.c.l.b16 %v421
    %v1067 = vunpack.c.h.b16 %v421
    %v1068 = vunpack.c.l.b16 %v422
    %v1069 = vunpack.c.h.b16 %v422
    %v1070 = vunpack.c.l.b16 %v423
    %v1071 = vunpack.c.h.b16 %v423
    %v1072 = vunpack.c.l.b16 %v424
    %v1073 = vunpack.c.h.b16 %v424
    %v1074 = vunpack.c.l.b16 %v425
    %v1075 = vunpack.c.h.b16 %v425
    %v1076 = vunpack.c.l.b16 %v426
    %v1077 = vunpack.c.h.b16 %v426
    %v1078 = vunpack.c.l.b16 %v427
    %v1079 = vunpack.c.h.b16 %v427
    %v1080 = vunpack.c.l.b16 %v428
    %v1081 = vunpack.c.h.b16 %v428
    %v1082 = vunpack.c.l.b16 %v429
    %v1083 = vunpack.c.h.b16 %v429
    %v1084 = vunpack.c.l.b16 %v430
    %v1085 = vunpack.c.h.b16 %v430
    %v1086 = vunpack.c.l.b16 %v431
    %v1087 = vunpack.c.h.b16 %v431
    %v1088 = vunpack.c.l.b16 %v432
    %v1089 = vunpack.c.h.b16 %v432
    %v1090 = vunpack.c.l.b16 %v433
    %v1091 = vunpack.c.h.b16 %v433
    %v1092 = vunpack.c.l.b16 %v434
    %v1093 = vunpack.c.h.b16 %v434
    %v1094 = vunpack.c.l.b16 %v435
    %v1095 = vunpack.c.h.b16 %v435
    %v1096 = vunpack.c.l.b16 %v436
    %v1097 = vunpack.c.h.b16 %v436
    %v1098 = vunpack.c.l.b16 %v437
    %v1099 = vunpack.c.h.b16 %v437
    %v1100 = vunpack.c.l.b16 %v438
    %v1101 = vunpack.c.h.b16 %v438
    %v1102 = vunpack.c.l.b16 %v439
    %v1103 = vunpack.c.h.b16 %v439
    %v1104 = vunpack.c.l.b16 %v440
    %v1105 = vunpack.c.h.b16 %v440
    %v1106 = vunpack.c.l.b16 %v441
    %v1107 = vunpack.c.h.b16 %v441
    %v1108 = vunpack.c.l.b16 %v442
    %v1109 = vunpack.c.h.b16 %v442
    %v1110 = vunpack.c.l.b16 %v443
    %v1111 = vunpack.c.h.b16 %v443
    %v1112 = vunpack.c.l.b16 %v444
    %v1113 = vunpack.c.h.b16 %v444
    %v1114 = vunpack.c.l.b16 %v445
    %v1115 = vunpack.c.h.b16 %v445
    %v1116 = vunpack.c.l.b16 %v446
    %v1117 = vunpack.c.h.b16 %v446
    %v1118 = vunpack.c.l.b16 %v447
    %v1119 = vunpack.c.h.b16 %v447
    %v1120 = vunpack.c.l.b16 %v448
    %v1121 = vunpack.c.h.b16 %v448
    %v1122 = vunpack.c.l.b16 %v449
    %v1123 = vunpack.c.h.b16 %v449
    %v1124 = vunpack.c.l.b16 %v450
    %v1125 = vunpack.c.h.b16 %v450
    %v1126 = vunpack.c.l.b16 %v451
    %v1127 = vunpack.c.h.b16 %v451
    %v1128 = vunpack.c.l.b16 %v452
    %v1129 = vunpack.c.h.b16 %v452
    %v1130 = vunpack.c.l.b16 %v453
    %v1131 = vunpack.c.h.b16 %v453
    %v1132 = vunpack.c.l.b16 %v454
    %v1133 = vunpack.c.h.b16 %v454
    %v1134 = vunpack.c.l.b16 %v455
    %v1135 = vunpack.c.h.b16 %v455
    %v1136 = vunpack.c.l.b16 %v456
    %v1137 = vunpack.c.h.b16 %v456
    %v1138 = vunpack.c.l.b16 %v457
    %v1139 = vunpack.c.h.b16 %v457
    %v1140 = vunpack.c.l.b16 %v458
    %v1141 = vunpack.c.h.b16 %v458
    %v1142 = vunpack.c.l.b16 %v459
    %v1143 = vunpack.c.h.b16 %v459
    %v1144 = vunpack.c.l.b16 %v460
    %v1145 = vunpack.c.h.b16 %v460
    %v1146 = vunpack.c.l.b16 %v461
    %v1147 = vunpack.c.h.b16 %v461
    %v1148 = vunpack.c.l.b16 %v462
    %v1149 = vunpack.c.h.b16 %v462
    %v1150 = vunpack.c.l.b16 %v463
    %v1151 = vunpack.c.h.b16 %v463
    %v1152 = vunpack.c.l.b16 %v464
    %v1153 = vunpack.c.h.b16 %v464
    %v1154 = vunpack.c.l.b16 %v465
    %v1155 = vunpack.c.h.b16 %v465
    %v1156 = vunpack.c.l.b16 %v466
    %v1157 = vunpack.c.h.b16 %v466
    %v1158 = vunpack.c.l.b16 %v467
    %v1159 = vunpack.c.h.b16 %v467
    %v1160 = vunpack.c.l.b16 %v468
    %v1161 = vunpack.c.h.b16 %v468
    %v1162 = vunpack.c.l.b16 %v469
    %v1163 = vunpack.c.h.b16 %v469
    %v1164 = vunpack.c.l.b16 %v470
    %v1165 = vunpack.c.h.b16 %v470
    %v1166 = vunpack.c.l.b16 %v471
    %v1167 = vunpack.c.h.b16 %v471
    %v1168 = vunpack.c.l.b16 %v472
    %v1169 = vunpack.c.h.b16 %v472
    %v1170 = vunpack.c.l.b16 %v473
    %v1171 = vunpack.c.h.b16 %v473
    %v1172 = vunpack.c.l.b16 %v474
    %v1173 = vunpack.c.h.b16 %v474
    %v1174 = vunpack.c.l.b16 %v475
    %v1175 = vunpack.c.h.b16 %v475
    %v1176 = vunpack.c.l.b16 %v476
    %v1177 = vunpack.c.h.b16 %v476
    %v1178 = vunpack.c.l.b16 %v477
    %v1179 = vunpack.c.h.b16 %v477
    %v1180 = vunpack.c.l.b16 %v478
    %v1181 = vunpack.c.h.b16 %v478
    %v1182 = vunpack.c.l.b16 %v479
    %v1183 = vunpack.c.h.b16 %v479
    %v1184 = vunpack.c.l.b16 %v480
    %v1185 = vunpack.c.h.b16 %v480
    %v1186 = vunpack.c.l.b16 %v481
    %v1187 = vunpack.c.h.b16 %v481
    %v1188 = vunpack.c.l.b16 %v482
    %v1189 = vunpack.c.h.b16 %v482
    %v1190 = vunpack.c.l.b16 %v483
    %v1191 = vunpack.c.h.b16 %v483
    %v1192 = vunpack.c.l.b16 %v484
    %v1193 = vunpack.c.h.b16 %v484
    %v1194 = vunpack.c.l.b16 %v485
    %v1195 = vunpack.c.h.b16 %v485
    %v1196 = vunpack.c.l.b16 %v486
    %v1197 = vunpack.c.h.b16 %v486
    %v1198 = vunpack.c.l.b16 %v487
    %v1199 = vunpack.c.h.b16 %v487
    %v1200 = vunpack.c.l.b16 %v488
    %v1201 = vunpack.c.h.b16 %v488
    %v1202 = vunpack.c.l.b16 %v489
    %v1203 = vunpack.c.h.b16 %v489
    %v1204 = vunpack.c.l.b16 %v490
    %v1205 = vunpack.c.h.b16 %v490
    %v1206 = vunpack.c.l.b16 %v491
    %v1207 = vunpack.c.h.b16 %v491
    %v1208 = vunpack.c.l.b16 %v492
    %v1209 = vunpack.c.h.b16 %v492
    %v1210 = vunpack.c.l.b16 %v493
    %v1211 = vunpack.c.h.b16 %v493
    %v1212 = vunpack.c.l.b16 %v494
    %v1213 = vunpack.c.h.b16 %v494
    %v1214 = vunpack.c.l.b16 %v495
    %v1215 = vunpack.c.h.b16 %v495
    %v1216 = vunpack.c.l.b16 %v496
    %v1217 = vunpack.c.h.b16 %v496
    %v1218 = vunpack.c.l.b16 %v497
    %v1219 = vunpack.c.h.b16 %v497
    %v1220 = vunpack.c.l.b16 %v498
    %v1221 = vunpack.c.h.b16 %v498
    %v1222 = vunpack.c.l.b16 %v499
    %v1223 = vunpack.c.h.b16 %v499
    %v1224 = vunpack.c.l.b16 %v500
    %v1225 = vunpack.c.h.b16 %v500
    %v1226 = vunpack.c.l.b16 %v501
    %v1227 = vunpack.c.h.b16 %v501
    %v1228 = vunpack.c.l.b16 %v502
    %v1229 = vunpack.c.h.b16 %v502
    %v1230 = vunpack.c.l.b16 %v503
    %v1231 = vunpack.c.h.b16 %v503
    %v1232 = vunpack.c.l.b16 %v504
    %v1233 = vunpack.c.h.b16 %v504
    %v1234 = vunpack.c.l.b16 %v505
    %v1235 = vunpack.c.h.b16 %v505
    %v1236 = vunpack.c.l.b16 %v506
    %v1237 = vunpack.c.h.b16 %v506
    %v1238 = vunpack.c.l.b16 %v507
    %v1239 = vunpack.c.h.b16 %v507
    %v1240 = vunpack.c.l.b16 %v508
    %v1241 = vunpack.c.h.b16 %v508
    %v1242 = vunpack.c.l.b16 %v509
    %v1243 = vunpack.c.h.b16 %v509
    %v1244 = vunpack.c.l.b16 %v510
    %v1245 = vunpack.c.h.b16 %v510
    %v1246 = vunpack.c.l.b16 %v511
    %v1247 = vunpack.c.h.b16 %v511
    %v1248 = vunpack.c.l.b16 %v512
    %v1249 = vunpack.c.h.b16 %v512
    %v1250 = vunpack.c.l.b16 %v513
    %v1251 = vunpack.c.h.b16 %v513
    %v1252 = vunpack.c.l.b16 %v514
    %v1253 = vunpack.c.h.b16 %v514
    %v1254 = vunpack.c.l.b16 %v515
    %v1255 = vunpack.c.h.b16 %v515
    %v1256 = vunpack.c.l.b16 %v516
    %v1257 = vunpack.c.h.b16 %v516
    %v1258 = vunpack.c.l.b16 %v517
    %v1259 = vunpack.c.h.b16 %v517
    %v1260 = vunpack.c.l.b16 %v518
    %v1261 = vunpack.c.h.b16 %v518
    %v1262 = vunpack.c.l.b16 %v519
    %v1263 = vunpack.c.h.b16 %v519
    %v1264 = vunpack.c.l.b16 %v520
    %v1265 = vunpack.c.h.b16 %v520
    %v1266 = vunpack.c.l.b16 %v521
    %v1267 = vunpack.c.h.b16 %v521
    %v1268 = vunpack.c.l.b16 %v522
    %v1269 = vunpack.c.h.b16 %v522
    %v1270 = vunpack.c.l.b16 %v523
    %v1271 = vunpack.c.h.b16 %v523
    %v1272 = vunpack.c.l.b16 %v524
    %v1273 = vunpack.c.h.b16 %v524
    %v1274 = vunpack.c.l.b16 %v525
    %v1275 = vunpack.c.h.b16 %v525
    %v1276 = vunpack.c.l.b16 %v526
    %v1277 = vunpack.c.h.b16 %v526
    %v1278 = vunpack.c.l.b16 %v527
    %v1279 = vunpack.c.h.b16 %v527
    %v1280 = vunpack.c.l.b16 %v528
    %v1281 = vunpack.c.h.b16 %v528
    %v1282 = vunpack.c.l.b16 %v529
    %v1283 = vunpack.c.h.b16 %v529
    %v1284 = vunpack.c.l.b16 %v530
    %v1285 = vunpack.c.h.b16 %v530
    %v1286 = vunpack.c.l.b16 %v531
    %v1287 = vunpack.c.h.b16 %v531
    %v1288 = vunpack.c.l.b16 %v532
    %v1289 = vunpack.c.h.b16 %v532
    %v1290 = vunpack.c.l.b16 %v533
    %v1291 = vunpack.c.h.b16 %v533
    %v1292 = vunpack.c.l.b16 %v534
    %v1293 = vunpack.c.h.b16 %v534
    %v1294 = vunpack.c.l.b16 %v535
    %v1295 = vunpack.c.h.b16 %v535
    %v1296 = vunpack.c.l.b16 %v536
    %v1297 = vunpack.c.h.b16 %v536
    %v1298 = vunpack.c.l.b16 %v537
    %v1299 = vunpack.c.h.b16 %v537
    %v1300 = vunpack.c.l.b16 %v538
    %v1301 = vunpack.c.h.b16 %v538
    %v1302 = vunpack.c.l.b16 %v539
    %v1303 = vunpack.c.h.b16 %v539
    %v1304 = vunpack.c.l.b16 %v540
    %v1305 = vunpack.c.h.b16 %v540
    %v1306 = vunpack.c.l.b16 %v541
    %v1307 = vunpack.c.h.b16 %v541
    %v1308 = vunpack.c.l.b16 %v542
    %v1309 = vunpack.c.h.b16 %v542
    %v1310 = vunpack.c.l.b16 %v543
    %v1311 = vunpack.c.h.b16 %v543
    %v1312 = vunpack.c.l.b16 %v544
    %v1313 = vunpack.c.h.b16 %v544
    %v1314 = vunpack.c.l.b16 %v545
    %v1315 = vunpack.c.h.b16 %v545
    %v1316 = vunpack.c.l.b16 %v546
    %v1317 = vunpack.c.h.b16 %v546
    %v1318 = vunpack.c.l.b16 %v547
    %v1319 = vunpack.c.h.b16 %v547
    %v1320 = vunpack.c.l.b16 %v548
    %v1321 = vunpack.c.h.b16 %v548
    %v1322 = vunpack.c.l.b16 %v549
    %v1323 = vunpack.c.h.b16 %v549
    %v1324 = vunpack.c.l.b16 %v550
    %v1325 = vunpack.c.h.b16 %v550
    %v1326 = vunpack.c.l.b16 %v551
    %v1327 = vunpack.c.h.b16 %v551
    %v1328 = vunpack.c.l.b16 %v552
    %v1329 = vunpack.c.h.b16 %v552
    %v1330 = vunpack.c.l.b16 %v553
    %v1331 = vunpack.c.h.b16 %v553
    %v1332 = vunpack.c.l.b16 %v554
    %v1333 = vunpack.c.h.b16 %v554
    %v1334 = vunpack.c.l.b16 %v555
    %v1335 = vunpack.c.h.b16 %v555
    %v1336 = vunpack.c.l.b16 %v556
    %v1337 = vunpack.c.h.b16 %v556
    %v1338 = vunpack.c.l.b16 %v557
    %v1339 = vunpack.c.h.b16 %v557
    %v1340 = vunpack.c.l.b16 %v558
    %v1341 = vunpack.c.h.b16 %v558
    %v1342 = vunpack.c.l.b16 %v559
    %v1343 = vunpack.c.h.b16 %v559
    %v1344 = vunpack.c.l.b16 %v560
    %v1345 = vunpack.c.h.b16 %v560
    %v1346 = vunpack.c.l.b16 %v561
    %v1347 = vunpack.c.h.b16 %v561
    %v1348 = vunpack.c.l.b16 %v562
    %v1349 = vunpack.c.h.b16 %v562
    %v1350 = vunpack.c.l.b16 %v563
    %v1351 = vunpack.c.h.b16 %v563
    %v1352 = vunpack.c.l.b16 %v564
    %v1353 = vunpack.c.h.b16 %v564
    %v1354 = vunpack.c.l.b16 %v565
    %v1355 = vunpack.c.h.b16 %v565
    %v1356 = vunpack.c.l.b16 %v566
    %v1357 = vunpack.c.h.b16 %v566
    %v1358 = vunpack.c.l.b16 %v567
    %v1359 = vunpack.c.h.b16 %v567
    %v1360 = vunpack.c.l.b16 %v568
    %v1361 = vunpack.c.h.b16 %v568
    %v1362 = vunpack.c.l.b16 %v569
    %v1363 = vunpack.c.h.b16 %v569
    %v1364 = vunpack.c.l.b16 %v570
    %v1365 = vunpack.c.h.b16 %v570
    %v1366 = vunpack.c.l.b16 %v571
    %v1367 = vunpack.c.h.b16 %v571
    %v1368 = vunpack.c.l.b16 %v572
    %v1369 = vunpack.c.h.b16 %v572
    %v1370 = vunpack.c.l.b16 %v573
    %v1371 = vunpack.c.h.b16 %v573
    %v1372 = vunpack.c.l.b16 %v574
    %v1373 = vunpack.c.h.b16 %v574
    %v1374 = vunpack.c.l.b16 %v575
    %v1375 = vunpack.c.h.b16 %v575
    %v1376 = vunpack.c.l.b16 %v576
    %v1377 = vunpack.c.h.b16 %v576
    %v1378 = vunpack.c.l.b16 %v577
    %v1379 = vunpack.c.h.b16 %v577
    %v1380 = vunpack.c.l.b16 %v578
    %v1381 = vunpack.c.h.b16 %v578
    %v1382 = vunpack.c.l.b16 %v579
    %v1383 = vunpack.c.h.b16 %v579
    %v1384 = vpack.c.b16 %v888, %v872
    %v1385 = vpack.c.b16 %v889, %v873
    %v1386 = vpack.c.b16 %v890, %v874
    %v1387 = vpack.c.b16 %v891, %v875
    %v1388 = vpack.c.b16 %v892, %v876
    %v1389 = vpack.c.b16 %v893, %v877
    %v1390 = vpack.c.b16 %v894, %v878
    %v1391 = vpack.c.b16 %v895, %v879
    %v1392 = vpack.c.b16 %v896, %v880
    %v1393 = vpack.c.b16 %v897, %v881
    %v1394 = vpack.c.b16 %v898, %v882
    %v1395 = vpack.c.b16 %v899, %v883
    %v1396 = vpack.c.b16 %v900, %v884
    %v1397 = vpack.c.b16 %v901, %v885
    %v1398 = vpack.c.b16 %v902, %v886
    %v1399 = vpack.c.b16 %v903, %v887
    %v1400 = vpack.c.b16 %v920, %v904
    %v1401 = vpack.c.b16 %v921, %v905
    %v1402 = vpack.c.b16 %v922, %v906
    %v1403 = vpack.c.b16 %v923, %v907
    %v1404 = vpack.c.b16 %v924, %v908
    %v1405 = vpack.c.b16 %v925, %v909
    %v1406 = vpack.c.b16 %v926, %v910
    %v1407 = vpack.c.b16 %v927, %v911
    %v1408 = vpack.c.b16 %v928, %v912
    %v1409 = vpack.c.b16 %v929, %v913
    %v1410 = vpack.c.b16 %v930, %v914
    %v1411 = vpack.c.b16 %v931, %v915
    %v1412 = vpack.c.b16 %v932, %v916
    %v1413 = vpack.c.b16 %v933, %v917
    %v1414 = vpack.c.b16 %v934, %v918
    %v1415 = vpack.c.b16 %v935, %v919
    %v1416 = vpack.c.b16 %v952, %v936
    %v1417 = vpack.c.b16 %v953, %v937
    %v1418 = vpack.c.b16 %v954, %v938
    %v1419 = vpack.c.b16 %v955, %v939
    %v1420 = vpack.c.b16 %v956, %v940
    %v1421 = vpack.c.b16 %v957, %v941
    %v1422 = vpack.c.b16 %v958, %v942
    %v1423 = vpack.c.b16 %v959, %v943
    %v1424 = vpack.c.b16 %v960, %v944
    %v1425 = vpack.c.b16 %v961, %v945
    %v1426 = vpack.c.b16 %v962, %v946
    %v1427 = vpack.c.b16 %v963, %v947
    %v1428 = vpack.c.b16 %v964, %v948
    %v1429 = vpack.c.b16 %v965, %v949
    %v1430 = vpack.c.b16 %v966, %v950
    %v1431 = vpack.c.b16 %v967, %v951
    %v1432 = vpack.c.b16 %v984, %v968
    %v1433 = vpack.c.b16 %v985, %v969
    %v1434 = vpack.c.b16 %v986, %v970
    %v1435 = vpack.c.b16 %v987, %v971
    %v1436 = vpack.c.b16 %v988, %v972
    %v1437 = vpack.c.b16 %v989, %v973
    %v1438 = vpack.c.b16 %v990, %v974
    %v1439 = vpack.c.b16 %v991, %v975
    %v1440 = vpack.c.b16 %v992, %v976
    %v1441 = vpack.c.b16 %v993, %v977
    %v1442 = vpack.c.b16 %v994, %v978
    %v1443 = vpack.c.b16 %v995, %v979
    %v1444 = vpack.c.b16 %v996, %v980
    %v1445 = vpack.c.b16 %v997, %v981
    %v1446 = vpack.c.b16 %v998, %v982
    %v1447 = vpack.c.b16 %v999, %v983
    %v1448 = vpack.c.b16 %v1016, %v1000
    %v1449 = vpack.c.b16 %v1017, %v1001
    %v1450 = vpack.c.b16 %v1018, %v1002
    %v1451 = vpack.c.b16 %v1019, %v1003
    %v1452 = vpack.c.b16 %v1020, %v1004
    %v1453 = vpack.c.b16 %v1021, %v1005
    %v1454 = vpack.c.b16 %v1022, %v1006
    %v1455 = vpack.c.b16 %v1023, %v1007
    %v1456 = vpack.c.b16 %v1024, %v1008
    %v1457 = vpack.c.b16 %v1025, %v1009
    %v1458 = vpack.c.b16 %v1026, %v1010
    %v1459 = vpack.c.b16 %v1027, %v1011
    %v1460 = vpack.c.b16 %v1028, %v1012
    %v1461 = vpack.c.b16 %v1029, %v1013
    %v1462 = vpack.c.b16 %v1030, %v1014
    %v1463 = vpack.c.b16 %v1031, %v1015
    %v1464 = vpack.c.b16 %v1048, %v1032
    %v1465 = vpack.c.b16 %v1049, %v1033
    %v1466 = vpack.c.b16 %v1050, %v1034
    %v1467 = vpack.c.b16 %v1051, %v1035
    %v1468 = vpack.c.b16 %v1052, %v1036
    %v1469 = vpack.c.b16 %v1053, %v1037
    %v1470 = vpack.c.b16 %v1054, %v1038
    %v1471 = vpack.c.b16 %v1055, %v1039
    %v1472 = vpack.c.b16 %v1056, %v1040
    %v1473 = vpack.c.b16 %v1057, %v1041
    %v1474 = vpack.c.b16 %v1058, %v1042
    %v1475 = vpack.c.b16 %v1059, %v1043
    %v1476 = vpack.c.b16 %v1060, %v1044
    %v1477 = vpack.c.b16 %v1061, %v1045
    %v1478 = vpack.c.b16 %v1062, %v1046
    %v1479 = vpack.c.b16 %v1063, %v1047
    %v1480 = vpack.c.b16 %v1080, %v1064
    %v1481 = vpack.c.b16 %v1081, %v1065
    %v1482 = vpack.c.b16 %v1082, %v1066
    %v1483 = vpack.c.b16 %v1083, %v1067
    %v1484 = vpack.c.b16 %v1084, %v1068
    %v1485 = vpack.c.b16 %v1085, %v1069
    %v1486 = vpack.c.b16 %v1086, %v1070
    %v1487 = vpack.c.b16 %v1087, %v1071
    %v1488 = vpack.c.b16 %v1088, %v1072
    %v1489 = vpack.c.b16 %v1089, %v1073
    %v1490 = vpack.c.b16 %v1090, %v1074
    %v1491 = vpack.c.b16 %v1091, %v1075
    %v1492 = vpack.c.b16 %v1092, %v1076
    %v1493 = vpack.c.b16 %v1093, %v1077
    %v1494 = vpack.c.b16 %v1094, %v1078
    %v1495 = vpack.c.b16 %v1095, %v1079
    %v1496 = vpack.c.b16 %v1112, %v1096
    %v1497 = vpack.c.b16 %v1113, %v1097
    %v1498 = vpack.c.b16 %v1114, %v1098
    %v1499 = vpack.c.b16 %v1115, %v1099
    %v1500 = vpack.c.b16 %v1116, %v1100
    %v1501 = vpack.c.b16 %v1117, %v1101
    %v1502 = vpack.c.b16 %v1118, %v1102
    %v1503 = vpack.c.b16 %v1119, %v1103
    %v1504 = vpack.c.b16 %v1120, %v1104
    %v1505 = vpack.c.b16 %v1121, %v1105
    %v1506 = vpack.c.b16 %v1122, %v1106
    %v1507 = vpack.c.b16 %v1123, %v1107
    %v1508 = vpack.c.b16 %v1124, %v1108
    %v1509 = vpack.c.b16 %v1125, %v1109
    %v1510 = vpack.c.b16 %v1126, %v1110
    %v1511 = vpack.c.b16 %v1127, %v1111
    %v1512 = vpack.c.b16 %v1144, %v1128
    %v1513 = vpack.c.b16 %v1145, %v1129
    %v1514 = vpack.c.b16 %v1146, %v1130
    %v1515 = vpack.c.b16 %v1147, %v1131
    %v1516 = vpack.c.b16 %v1148, %v1132
    %v1517 = vpack.c.b16 %v1149, %v1133
    %v1518 = vpack.c.b16 %v1150, %v1134
    %v1519 = vpack.c.b16 %v1151, %v1135
    %v1520 = vpack.c.b16 %v1152, %v1136
    %v1521 = vpack.c.b16 %v1153, %v1137
    %v1522 = vpack.c.b16 %v1154, %v1138
    %v1523 = vpack.c.b16 %v1155, %v1139
    %v1524 = vpack.c.b16 %v1156, %v1140
    %v1525 = vpack.c.b16 %v1157, %v1141
    %v1526 = vpack.c.b16 %v1158, %v1142
    %v1527 = vpack.c.b16 %v1159, %v1143
    %v1528 = vpack.c.b16 %v1176, %v1160
    %v1529 = vpack.c.b16 %v1177, %v1161
    %v1530 = vpack.c.b16 %v1178, %v1162
    %v1531 = vpack.c.b16 %v1179, %v1163
    %v1532 = vpack.c.b16 %v1180, %v1164
    %v1533 = vpack.c.b16 %v1181, %v1165
    %v1534 = vpack.c.b16 %v1182, %v1166
    %v1535 = vpack.c.b16 %v1183, %v1167
    %v1536 = vpack.c.b16 %v1184, %v1168
    %v1537 = vpack.c.b16 %v1185, %v1169
    %v1538 = vpack.c.b16 %v1186, %v1170
    %v1539 = vpack.c.b16 %v1187, %v1171
    %v1540 = vpack.c.b16 %v1188, %v1172
    %v1541 = vpack.c.b16 %v1189, %v1173
    %v1542 = vpack.c.b16 %v1190, %v1174
    %v1543 = vpack.c.b16 %v1191, %v1175
    %v1544 = vpack.c.b16 %v1208, %v1192
    %v1545 = vpack.c.b16 %v1209, %v1193
    %v1546 = vpack.c.b16 %v1210, %v1194
    %v1547 = vpack.c.b16 %v1211, %v1195
    %v1548 = vpack.c.b16 %v1212, %v1196
    %v1549 = vpack.c.b16 %v1213, %v1197
    %v1550 = vpack.c.b16 %v1214, %v1198
    %v1551 = vpack.c.b16 %v1215, %v1199
    %v1552 = vpack.c.b16 %v1216, %v1200
    %v1553 = vpack.c.b16 %v1217, %v1201
    %v1554 = vpack.c.b16 %v1218, %v1202
    %v1555 = vpack.c.b16 %v1219, %v1203
    %v1556 = vpack.c.b16 %v1220, %v1204
    %v1557 = vpack.c.b16 %v1221, %v1205
    %v1558 = vpack.c.b16 %v1222, %v1206
    %v1559 = vpack.c.b16 %v1223, %v1207
    %v1560 = vpack.c.b16 %v1240, %v1224
    %v1561 = vpack.c.b16 %v1241, %v1225
    %v1562 = vpack.c.b16 %v1242, %v1226
    %v1563 = vpack.c.b16 %v1243, %v1227
    %v1564 = vpack.c.b16 %v1244, %v1228
    %v1565 = vpack.c.b16 %v1245, %v1229
    %v1566 = vpack.c.b16 %v1246, %v1230
    %v1567 = vpack.c.b16 %v1247, %v1231
    %v1568 = vpack.c.b16 %v1248, %v1232
    %v1569 = vpack.c.b16 %v1249, %v1233
    %v1570 = vpack.c.b16 %v1250, %v1234
    %v1571 = vpack.c.b16 %v1251, %v1235
    %v1572 = vpack.c.b16 %v1252, %v1236
    %v1573 = vpack.c.b16 %v1253, %v1237
    %v1574 = vpack.c.b16 %v1254, %v1238
    %v1575 = vpack.c.b16 %v1255, %v1239
    %v1576 = vpack.c.b16 %v1272, %v1256
    %v1577 = vpack.c.b16 %v1273, %v1257
    %v1578 = vpack.c.b16 %v1274, %v1258
    %v1579 = vpack.c.b16 %v1275, %v1259
    %v1580 = vpack.c.b16 %v1276, %v1260
    %v1581 = vpack.c.b16 %v1277, %v1261
    %v1582 = vpack.c.b16 %v1278, %v1262
    %v1583 = vpack.c.b16 %v1279, %v1263
    %v1584 = vpack.c.b16 %v1280, %v1264
    %v1585 = vpack.c.b16 %v1281, %v1265
    %v1586 = vpack.c.b16 %v1282, %v1266
    %v1587 = vpack.c.b16 %v1283, %v1267
    %v1588 = vpack.c.b16 %v1284, %v1268
    %v1589 = vpack.c.b16 %v1285, %v1269
    %v1590 = vpack.c.b16 %v1286, %v1270
    %v1591 = vpack.c.b16 %v1287, %v1271
    %v1592 = vpack.c.b16 %v1304, %v1288
    %v1593 = vpack.c.b16 %v1305, %v1289
    %v1594 = vpack.c.b16 %v1306, %v1290
    %v1595 = vpack.c.b16 %v1307, %v1291
    %v1596 = vpack.c.b16 %v1308, %v1292
    %v1597 = vpack.c.b16 %v1309, %v1293
    %v1598 = vpack.c.b16 %v1310, %v1294
    %v1599 = vpack.c.b16 %v1311, %v1295
    %v1600 = vpack.c.b16 %v1312, %v1296
    %v1601 = vpack.c.b16 %v1313, %v1297
    %v1602 = vpack.c.b16 %v1314, %v1298
    %v1603 = vpack.c.b16 %v1315, %v1299
    %v1604 = vpack.c.b16 %v1316, %v1300
    %v1605 = vpack.c.b16 %v1317, %v1301
    %v1606 = vpack.c.b16 %v1318, %v1302
    %v1607 = vpack.c.b16 %v1319, %v1303
    %v1608 = vpack.c.b16 %v1336, %v1320
    %v1609 = vpack.c.b16 %v1337, %v1321
    %v1610 = vpack.c.b16 %v1338, %v1322
    %v1611 = vpack.c.b16 %v1339, %v1323
    %v1612 = vpack.c.b16 %v1340, %v1324
    %v1613 = vpack.c.b16 %v1341, %v1325
    %v1614 = vpack.c.b16 %v1342, %v1326
    %v1615 = vpack.c.b16 %v1343, %v1327
    %v1616 = vpack.c.b16 %v1344, %v1328
    %v1617 = vpack.c.b16 %v1345, %v1329
    %v1618 = vpack.c.b16 %v1346, %v1330
    %v1619 = vpack.c.b16 %v1347, %v1331
    %v1620 = vpack.c.b16 %v1348, %v1332
    %v1621 = vpack.c.b16 %v1349, %v1333
    %v1622 = vpack.c.b16 %v1350, %v1334
    %v1623 = vpack.c.b16 %v1351, %v1335
    %v1624 = vpack.c.b16 %v1368, %v1352
    %v1625 = vpack.c.b16 %v1369, %v1353
    %v1626 = vpack.c.b16 %v1370, %v1354
    %v1627 = vpack.c.b16 %v1371, %v1355
    %v1628 = vpack.c.b16 %v1372, %v1356
    %v1629 = vpack.c.b16 %v1373, %v1357
    %v1630 = vpack.c.b16 %v1374, %v1358
    %v1631 = vpack.c.b16 %v1375, %v1359
    %v1632 = vpack.c.b16 %v1376, %v1360
    %v1633 = vpack.c.b16 %v1377, %v1361
    %v1634 = vpack.c.b16 %v1378, %v1362
    %v1635 = vpack.c.b16 %v1379, %v1363
    %v1636 = vpack.c.b16 %v1380, %v1364
    %v1637 = vpack.c.b16 %v1381, %v1365
    %v1638 = vpack.c.b16 %v1382, %v1366
    %v1639 = vpack.c.b16 %v1383, %v1367
    %1896 = vmatpush.bf16.msra.mxu0 %v1496
    %1897 = vmatpush.bf16.msra.mxu0 %v1480
    %1898 = vmatpush.bf16.msra.mxu0 %v1464
    %1899 = vmatpush.bf16.msra.mxu0 %v1448
    %1900 = vmatpush.bf16.msra.mxu0 %v1432
    %1901 = vmatpush.bf16.msra.mxu0 %v1416
    %1902 = vmatpush.bf16.msra.mxu0 %v1400
    %1903 = vmatpush.bf16.msra.mxu0 %v1384
    %1904 = vmatmul.bf16.gmra.mxu0 %v322
    %v1905 = vpop.f32.mrf.mxu0
    %v1906 = vadd.f32 %v584, %v1905
    %v1907 = vpop.f32.mrf.mxu0
    %1908 = vdwg.mxu0
    %1909 = vmatpush.bf16.msra.mxu0 %v1624
    %1910 = vmatpush.bf16.msra.mxu0 %v1608
    %1911 = vmatpush.bf16.msra.mxu0 %v1592
    %1912 = vmatpush.bf16.msra.mxu0 %v1576
    %1913 = vmatpush.bf16.msra.mxu0 %v1560
    %1914 = vmatpush.bf16.msra.mxu0 %v1544
    %1915 = vmatpush.bf16.msra.mxu0 %v1528
    %1916 = vmatpush.bf16.msra.mxu0 %v1512
    %1917 = vmatmul.bf16.gmra.mxu0 %v323
    %v1918 = vpop.f32.mrf.mxu0
    %v1919 = vadd.f32 %v1906, %v1918
    %v1920 = vpop.f32.mrf.mxu0
    %1921 = vdwg.mxu0
    %1922 = vmatpush.bf16.msra.mxu0 %v1497
    %1923 = vmatpush.bf16.msra.mxu0 %v1481
    %1924 = vmatpush.bf16.msra.mxu0 %v1465
    %1925 = vmatpush.bf16.msra.mxu0 %v1449
    %1926 = vmatpush.bf16.msra.mxu0 %v1433
    %1927 = vmatpush.bf16.msra.mxu0 %v1417
    %1928 = vmatpush.bf16.msra.mxu0 %v1401
    %1929 = vmatpush.bf16.msra.mxu0 %v1385
    %1930 = vmatmul.bf16.gmra.mxu0 %v322
    %v1931 = vpop.f32.mrf.mxu0
    %v1932 = vadd.f32 %v585, %v1931
    %v1933 = vpop.f32.mrf.mxu0
    %1934 = vdwg.mxu0
    %1935 = vmatpush.bf16.msra.mxu0 %v1625
    %1936 = vmatpush.bf16.msra.mxu0 %v1609
    %1937 = vmatpush.bf16.msra.mxu0 %v1593
    %1938 = vmatpush.bf16.msra.mxu0 %v1577
    %1939 = vmatpush.bf16.msra.mxu0 %v1561
    %1940 = vmatpush.bf16.msra.mxu0 %v1545
    %1941 = vmatpush.bf16.msra.mxu0 %v1529
    %1942 = vmatpush.bf16.msra.mxu0 %v1513
    %1943 = vmatmul.bf16.gmra.mxu0 %v323
    %v1944 = vpop.f32.mrf.mxu0
    %v1945 = vadd.f32 %v1932, %v1944
    %v1946 = vpop.f32.mrf.mxu0
    %1947 = vdwg.mxu0
    %1948 = vmatpush.bf16.msra.mxu0 %v1498
    %1949 = vmatpush.bf16.msra.mxu0 %v1482
    %1950 = vmatpush.bf16.msra.mxu0 %v1466
    %1951 = vmatpush.bf16.msra.mxu0 %v1450
    %1952 = vmatpush.bf16.msra.mxu0 %v1434
    %1953 = vmatpush.bf16.msra.mxu0 %v1418
    %1954 = vmatpush.bf16.msra.mxu0 %v1402
    %1955 = vmatpush.bf16.msra.mxu0 %v1386
    %1956 = vmatmul.bf16.gmra.mxu0 %v322
    %v1957 = vpop.f32.mrf.mxu0
    %v1958 = vadd.f32 %v586, %v1957
    %v1959 = vpop.f32.mrf.mxu0
    %1960 = vdwg.mxu0
    %1961 = vmatpush.bf16.msra.mxu0 %v1626
    %1962 = vmatpush.bf16.msra.mxu0 %v1610
    %1963 = vmatpush.bf16.msra.mxu0 %v1594
    %1964 = vmatpush.bf16.msra.mxu0 %v1578
    %1965 = vmatpush.bf16.msra.mxu0 %v1562
    %1966 = vmatpush.bf16.msra.mxu0 %v1546
    %1967 = vmatpush.bf16.msra.mxu0 %v1530
    %1968 = vmatpush.bf16.msra.mxu0 %v1514
    %1969 = vmatmul.bf16.gmra.mxu0 %v323
    %v1970 = vpop.f32.mrf.mxu0
    %v1971 = vadd.f32 %v1958, %v1970
    %v1972 = vpop.f32.mrf.mxu0
    %1973 = vdwg.mxu0
    %1974 = vmatpush.bf16.msra.mxu0 %v1499
    %1975 = vmatpush.bf16.msra.mxu0 %v1483
    %1976 = vmatpush.bf16.msra.mxu0 %v1467
    %1977 = vmatpush.bf16.msra.mxu0 %v1451
    %1978 = vmatpush.bf16.msra.mxu0 %v1435
    %1979 = vmatpush.bf16.msra.mxu0 %v1419
    %1980 = vmatpush.bf16.msra.mxu0 %v1403
    %1981 = vmatpush.bf16.msra.mxu0 %v1387
    %1982 = vmatmul.bf16.gmra.mxu0 %v322
    %v1983 = vpop.f32.mrf.mxu0
    %v1984 = vadd.f32 %v587, %v1983
    %v1985 = vpop.f32.mrf.mxu0
    %1986 = vdwg.mxu0
    %1987 = vmatpush.bf16.msra.mxu0 %v1627
    %1988 = vmatpush.bf16.msra.mxu0 %v1611
    %1989 = vmatpush.bf16.msra.mxu0 %v1595
    %1990 = vmatpush.bf16.msra.mxu0 %v1579
    %1991 = vmatpush.bf16.msra.mxu0 %v1563
    %1992 = vmatpush.bf16.msra.mxu0 %v1547
    %1993 = vmatpush.bf16.msra.mxu0 %v1531
    %1994 = vmatpush.bf16.msra.mxu0 %v1515
    %1995 = vmatmul.bf16.gmra.mxu0 %v323
    %v1996 = vpop.f32.mrf.mxu0
    %v1997 = vadd.f32 %v1984, %v1996
    %v1998 = vpop.f32.mrf.mxu0
    %1999 = vdwg.mxu0
    %2000 = vmatpush.bf16.msra.mxu0 %v1500
    %2001 = vmatpush.bf16.msra.mxu0 %v1484
    %2002 = vmatpush.bf16.msra.mxu0 %v1468
    %2003 = vmatpush.bf16.msra.mxu0 %v1452
    %2004 = vmatpush.bf16.msra.mxu0 %v1436
    %2005 = vmatpush.bf16.msra.mxu0 %v1420
    %2006 = vmatpush.bf16.msra.mxu0 %v1404
    %2007 = vmatpush.bf16.msra.mxu0 %v1388
    %2008 = vmatmul.bf16.gmra.mxu0 %v322
    %v2009 = vpop.f32.mrf.mxu0
    %v2010 = vadd.f32 %v588, %v2009
    %v2011 = vpop.f32.mrf.mxu0
    %2012 = vdwg.mxu0
    %2013 = vmatpush.bf16.msra.mxu0 %v1628
    %2014 = vmatpush.bf16.msra.mxu0 %v1612
    %2015 = vmatpush.bf16.msra.mxu0 %v1596
    %2016 = vmatpush.bf16.msra.mxu0 %v1580
    %2017 = vmatpush.bf16.msra.mxu0 %v1564
    %2018 = vmatpush.bf16.msra.mxu0 %v1548
    %2019 = vmatpush.bf16.msra.mxu0 %v1532
    %2020 = vmatpush.bf16.msra.mxu0 %v1516
    %2021 = vmatmul.bf16.gmra.mxu0 %v323
    %v2022 = vpop.f32.mrf.mxu0
    %v2023 = vadd.f32 %v2010, %v2022
    %v2024 = vpop.f32.mrf.mxu0
    %2025 = vdwg.mxu0
    %2026 = vmatpush.bf16.msra.mxu0 %v1501
    %2027 = vmatpush.bf16.msra.mxu0 %v1485
    %2028 = vmatpush.bf16.msra.mxu0 %v1469
    %2029 = vmatpush.bf16.msra.mxu0 %v1453
    %2030 = vmatpush.bf16.msra.mxu0 %v1437
    %2031 = vmatpush.bf16.msra.mxu0 %v1421
    %2032 = vmatpush.bf16.msra.mxu0 %v1405
    %2033 = vmatpush.bf16.msra.mxu0 %v1389
    %2034 = vmatmul.bf16.gmra.mxu0 %v322
    %v2035 = vpop.f32.mrf.mxu0
    %v2036 = vadd.f32 %v589, %v2035
    %v2037 = vpop.f32.mrf.mxu0
    %2038 = vdwg.mxu0
    %2039 = vmatpush.bf16.msra.mxu0 %v1629
    %2040 = vmatpush.bf16.msra.mxu0 %v1613
    %2041 = vmatpush.bf16.msra.mxu0 %v1597
    %2042 = vmatpush.bf16.msra.mxu0 %v1581
    %2043 = vmatpush.bf16.msra.mxu0 %v1565
    %2044 = vmatpush.bf16.msra.mxu0 %v1549
    %2045 = vmatpush.bf16.msra.mxu0 %v1533
    %2046 = vmatpush.bf16.msra.mxu0 %v1517
    %2047 = vmatmul.bf16.gmra.mxu0 %v323
    %v2048 = vpop.f32.mrf.mxu0
    %v2049 = vadd.f32 %v2036, %v2048
    %v2050 = vpop.f32.mrf.mxu0
    %2051 = vdwg.mxu0
    %2052 = vmatpush.bf16.msra.mxu0 %v1502
    %2053 = vmatpush.bf16.msra.mxu0 %v1486
    %2054 = vmatpush.bf16.msra.mxu0 %v1470
    %2055 = vmatpush.bf16.msra.mxu0 %v1454
    %2056 = vmatpush.bf16.msra.mxu0 %v1438
    %2057 = vmatpush.bf16.msra.mxu0 %v1422
    %2058 = vmatpush.bf16.msra.mxu0 %v1406
    %2059 = vmatpush.bf16.msra.mxu0 %v1390
    %2060 = vmatmul.bf16.gmra.mxu0 %v322
    %v2061 = vpop.f32.mrf.mxu0
    %v2062 = vadd.f32 %v590, %v2061
    %v2063 = vpop.f32.mrf.mxu0
    %2064 = vdwg.mxu0
    %2065 = vmatpush.bf16.msra.mxu0 %v1630
    %2066 = vmatpush.bf16.msra.mxu0 %v1614
    %2067 = vmatpush.bf16.msra.mxu0 %v1598
    %2068 = vmatpush.bf16.msra.mxu0 %v1582
    %2069 = vmatpush.bf16.msra.mxu0 %v1566
    %2070 = vmatpush.bf16.msra.mxu0 %v1550
    %2071 = vmatpush.bf16.msra.mxu0 %v1534
    %2072 = vmatpush.bf16.msra.mxu0 %v1518
    %2073 = vmatmul.bf16.gmra.mxu0 %v323
    %v2074 = vpop.f32.mrf.mxu0
    %v2075 = vadd.f32 %v2062, %v2074
    %v2076 = vpop.f32.mrf.mxu0
    %2077 = vdwg.mxu0
    %2078 = vmatpush.bf16.msra.mxu0 %v1503
    %2079 = vmatpush.bf16.msra.mxu0 %v1487
    %2080 = vmatpush.bf16.msra.mxu0 %v1471
    %2081 = vmatpush.bf16.msra.mxu0 %v1455
    %2082 = vmatpush.bf16.msra.mxu0 %v1439
    %2083 = vmatpush.bf16.msra.mxu0 %v1423
    %2084 = vmatpush.bf16.msra.mxu0 %v1407
    %2085 = vmatpush.bf16.msra.mxu0 %v1391
    %2086 = vmatmul.bf16.gmra.mxu0 %v322
    %v2087 = vpop.f32.mrf.mxu0
    %v2088 = vadd.f32 %v591, %v2087
    %v2089 = vpop.f32.mrf.mxu0
    %2090 = vdwg.mxu0
    %2091 = vmatpush.bf16.msra.mxu0 %v1631
    %2092 = vmatpush.bf16.msra.mxu0 %v1615
    %2093 = vmatpush.bf16.msra.mxu0 %v1599
    %2094 = vmatpush.bf16.msra.mxu0 %v1583
    %2095 = vmatpush.bf16.msra.mxu0 %v1567
    %2096 = vmatpush.bf16.msra.mxu0 %v1551
    %2097 = vmatpush.bf16.msra.mxu0 %v1535
    %2098 = vmatpush.bf16.msra.mxu0 %v1519
    %2099 = vmatmul.bf16.gmra.mxu0 %v323
    %v2100 = vpop.f32.mrf.mxu0
    %v2101 = vadd.f32 %v2088, %v2100
    %v2102 = vpop.f32.mrf.mxu0
    %2103 = vdwg.mxu0
    %2104 = vmatpush.bf16.msra.mxu0 %v1504
    %2105 = vmatpush.bf16.msra.mxu0 %v1488
    %2106 = vmatpush.bf16.msra.mxu0 %v1472
    %2107 = vmatpush.bf16.msra.mxu0 %v1456
    %2108 = vmatpush.bf16.msra.mxu0 %v1440
    %2109 = vmatpush.bf16.msra.mxu0 %v1424
    %2110 = vmatpush.bf16.msra.mxu0 %v1408
    %2111 = vmatpush.bf16.msra.mxu0 %v1392
    %2112 = vmatmul.bf16.gmra.mxu0 %v322
    %v2113 = vpop.f32.mrf.mxu0
    %v2114 = vadd.f32 %v592, %v2113
    %v2115 = vpop.f32.mrf.mxu0
    %2116 = vdwg.mxu0
    %2117 = vmatpush.bf16.msra.mxu0 %v1632
    %2118 = vmatpush.bf16.msra.mxu0 %v1616
    %2119 = vmatpush.bf16.msra.mxu0 %v1600
    %2120 = vmatpush.bf16.msra.mxu0 %v1584
    %2121 = vmatpush.bf16.msra.mxu0 %v1568
    %2122 = vmatpush.bf16.msra.mxu0 %v1552
    %2123 = vmatpush.bf16.msra.mxu0 %v1536
    %2124 = vmatpush.bf16.msra.mxu0 %v1520
    %2125 = vmatmul.bf16.gmra.mxu0 %v323
    %v2126 = vpop.f32.mrf.mxu0
    %v2127 = vadd.f32 %v2114, %v2126
    %v2128 = vpop.f32.mrf.mxu0
    %2129 = vdwg.mxu0
    %2130 = vmatpush.bf16.msra.mxu0 %v1505
    %2131 = vmatpush.bf16.msra.mxu0 %v1489
    %2132 = vmatpush.bf16.msra.mxu0 %v1473
    %2133 = vmatpush.bf16.msra.mxu0 %v1457
    %2134 = vmatpush.bf16.msra.mxu0 %v1441
    %2135 = vmatpush.bf16.msra.mxu0 %v1425
    %2136 = vmatpush.bf16.msra.mxu0 %v1409
    %2137 = vmatpush.bf16.msra.mxu0 %v1393
    %2138 = vmatmul.bf16.gmra.mxu0 %v322
    %v2139 = vpop.f32.mrf.mxu0
    %v2140 = vadd.f32 %v593, %v2139
    %v2141 = vpop.f32.mrf.mxu0
    %2142 = vdwg.mxu0
    %2143 = vmatpush.bf16.msra.mxu0 %v1633
    %2144 = vmatpush.bf16.msra.mxu0 %v1617
    %2145 = vmatpush.bf16.msra.mxu0 %v1601
    %2146 = vmatpush.bf16.msra.mxu0 %v1585
    %2147 = vmatpush.bf16.msra.mxu0 %v1569
    %2148 = vmatpush.bf16.msra.mxu0 %v1553
    %2149 = vmatpush.bf16.msra.mxu0 %v1537
    %2150 = vmatpush.bf16.msra.mxu0 %v1521
    %2151 = vmatmul.bf16.gmra.mxu0 %v323
    %v2152 = vpop.f32.mrf.mxu0
    %v2153 = vadd.f32 %v2140, %v2152
    %v2154 = vpop.f32.mrf.mxu0
    %2155 = vdwg.mxu0
    %2156 = vmatpush.bf16.msra.mxu0 %v1506
    %2157 = vmatpush.bf16.msra.mxu0 %v1490
    %2158 = vmatpush.bf16.msra.mxu0 %v1474
    %2159 = vmatpush.bf16.msra.mxu0 %v1458
    %2160 = vmatpush.bf16.msra.mxu0 %v1442
    %2161 = vmatpush.bf16.msra.mxu0 %v1426
    %2162 = vmatpush.bf16.msra.mxu0 %v1410
    %2163 = vmatpush.bf16.msra.mxu0 %v1394
    %2164 = vmatmul.bf16.gmra.mxu0 %v322
    %v2165 = vpop.f32.mrf.mxu0
    %v2166 = vadd.f32 %v594, %v2165
    %v2167 = vpop.f32.mrf.mxu0
    %2168 = vdwg.mxu0
    %2169 = vmatpush.bf16.msra.mxu0 %v1634
    %2170 = vmatpush.bf16.msra.mxu0 %v1618
    %2171 = vmatpush.bf16.msra.mxu0 %v1602
    %2172 = vmatpush.bf16.msra.mxu0 %v1586
    %2173 = vmatpush.bf16.msra.mxu0 %v1570
    %2174 = vmatpush.bf16.msra.mxu0 %v1554
    %2175 = vmatpush.bf16.msra.mxu0 %v1538
    %2176 = vmatpush.bf16.msra.mxu0 %v1522
    %2177 = vmatmul.bf16.gmra.mxu0 %v323
    %v2178 = vpop.f32.mrf.mxu0
    %v2179 = vadd.f32 %v2166, %v2178
    %v2180 = vpop.f32.mrf.mxu0
    %2181 = vdwg.mxu0
    %2182 = vmatpush.bf16.msra.mxu0 %v1507
    %2183 = vmatpush.bf16.msra.mxu0 %v1491
    %2184 = vmatpush.bf16.msra.mxu0 %v1475
    %2185 = vmatpush.bf16.msra.mxu0 %v1459
    %2186 = vmatpush.bf16.msra.mxu0 %v1443
    %2187 = vmatpush.bf16.msra.mxu0 %v1427
    %2188 = vmatpush.bf16.msra.mxu0 %v1411
    %2189 = vmatpush.bf16.msra.mxu0 %v1395
    %2190 = vmatmul.bf16.gmra.mxu0 %v322
    %v2191 = vpop.f32.mrf.mxu0
    %v2192 = vadd.f32 %v595, %v2191
    %v2193 = vpop.f32.mrf.mxu0
    %2194 = vdwg.mxu0
    %2195 = vmatpush.bf16.msra.mxu0 %v1635
    %2196 = vmatpush.bf16.msra.mxu0 %v1619
    %2197 = vmatpush.bf16.msra.mxu0 %v1603
    %2198 = vmatpush.bf16.msra.mxu0 %v1587
    %2199 = vmatpush.bf16.msra.mxu0 %v1571
    %2200 = vmatpush.bf16.msra.mxu0 %v1555
    %2201 = vmatpush.bf16.msra.mxu0 %v1539
    %2202 = vmatpush.bf16.msra.mxu0 %v1523
    %2203 = vmatmul.bf16.gmra.mxu0 %v323
    %v2204 = vpop.f32.mrf.mxu0
    %v2205 = vadd.f32 %v2192, %v2204
    %v2206 = vpop.f32.mrf.mxu0
    %2207 = vdwg.mxu0
    %2208 = vmatpush.bf16.msra.mxu0 %v1508
    %2209 = vmatpush.bf16.msra.mxu0 %v1492
    %2210 = vmatpush.bf16.msra.mxu0 %v1476
    %2211 = vmatpush.bf16.msra.mxu0 %v1460
    %2212 = vmatpush.bf16.msra.mxu0 %v1444
    %2213 = vmatpush.bf16.msra.mxu0 %v1428
    %2214 = vmatpush.bf16.msra.mxu0 %v1412
    %2215 = vmatpush.bf16.msra.mxu0 %v1396
    %2216 = vmatmul.bf16.gmra.mxu0 %v322
    %v2217 = vpop.f32.mrf.mxu0
    %v2218 = vadd.f32 %v596, %v2217
    %v2219 = vpop.f32.mrf.mxu0
    %2220 = vdwg.mxu0
    %2221 = vmatpush.bf16.msra.mxu0 %v1636
    %2222 = vmatpush.bf16.msra.mxu0 %v1620
    %2223 = vmatpush.bf16.msra.mxu0 %v1604
    %2224 = vmatpush.bf16.msra.mxu0 %v1588
    %2225 = vmatpush.bf16.msra.mxu0 %v1572
    %2226 = vmatpush.bf16.msra.mxu0 %v1556
    %2227 = vmatpush.bf16.msra.mxu0 %v1540
    %2228 = vmatpush.bf16.msra.mxu0 %v1524
    %2229 = vmatmul.bf16.gmra.mxu0 %v323
    %v2230 = vpop.f32.mrf.mxu0
    %v2231 = vadd.f32 %v2218, %v2230
    %v2232 = vpop.f32.mrf.mxu0
    %2233 = vdwg.mxu0
    %2234 = vmatpush.bf16.msra.mxu0 %v1509
    %2235 = vmatpush.bf16.msra.mxu0 %v1493
    %2236 = vmatpush.bf16.msra.mxu0 %v1477
    %2237 = vmatpush.bf16.msra.mxu0 %v1461
    %2238 = vmatpush.bf16.msra.mxu0 %v1445
    %2239 = vmatpush.bf16.msra.mxu0 %v1429
    %2240 = vmatpush.bf16.msra.mxu0 %v1413
    %2241 = vmatpush.bf16.msra.mxu0 %v1397
    %2242 = vmatmul.bf16.gmra.mxu0 %v322
    %v2243 = vpop.f32.mrf.mxu0
    %v2244 = vadd.f32 %v597, %v2243
    %v2245 = vpop.f32.mrf.mxu0
    %2246 = vdwg.mxu0
    %2247 = vmatpush.bf16.msra.mxu0 %v1637
    %2248 = vmatpush.bf16.msra.mxu0 %v1621
    %2249 = vmatpush.bf16.msra.mxu0 %v1605
    %2250 = vmatpush.bf16.msra.mxu0 %v1589
    %2251 = vmatpush.bf16.msra.mxu0 %v1573
    %2252 = vmatpush.bf16.msra.mxu0 %v1557
    %2253 = vmatpush.bf16.msra.mxu0 %v1541
    %2254 = vmatpush.bf16.msra.mxu0 %v1525
    %2255 = vmatmul.bf16.gmra.mxu0 %v323
    %v2256 = vpop.f32.mrf.mxu0
    %v2257 = vadd.f32 %v2244, %v2256
    %v2258 = vpop.f32.mrf.mxu0
    %2259 = vdwg.mxu0
    %2260 = vmatpush.bf16.msra.mxu0 %v1510
    %2261 = vmatpush.bf16.msra.mxu0 %v1494
    %2262 = vmatpush.bf16.msra.mxu0 %v1478
    %2263 = vmatpush.bf16.msra.mxu0 %v1462
    %2264 = vmatpush.bf16.msra.mxu0 %v1446
    %2265 = vmatpush.bf16.msra.mxu0 %v1430
    %2266 = vmatpush.bf16.msra.mxu0 %v1414
    %2267 = vmatpush.bf16.msra.mxu0 %v1398
    %2268 = vmatmul.bf16.gmra.mxu0 %v322
    %v2269 = vpop.f32.mrf.mxu0
    %v2270 = vadd.f32 %v598, %v2269
    %v2271 = vpop.f32.mrf.mxu0
    %2272 = vdwg.mxu0
    %2273 = vmatpush.bf16.msra.mxu0 %v1638
    %2274 = vmatpush.bf16.msra.mxu0 %v1622
    %2275 = vmatpush.bf16.msra.mxu0 %v1606
    %2276 = vmatpush.bf16.msra.mxu0 %v1590
    %2277 = vmatpush.bf16.msra.mxu0 %v1574
    %2278 = vmatpush.bf16.msra.mxu0 %v1558
    %2279 = vmatpush.bf16.msra.mxu0 %v1542
    %2280 = vmatpush.bf16.msra.mxu0 %v1526
    %2281 = vmatmul.bf16.gmra.mxu0 %v323
    %v2282 = vpop.f32.mrf.mxu0
    %v2283 = vadd.f32 %v2270, %v2282
    %v2284 = vpop.f32.mrf.mxu0
    %2285 = vdwg.mxu0
    %2286 = vmatpush.bf16.msra.mxu0 %v1511
    %2287 = vmatpush.bf16.msra.mxu0 %v1495
    %2288 = vmatpush.bf16.msra.mxu0 %v1479
    %2289 = vmatpush.bf16.msra.mxu0 %v1463
    %2290 = vmatpush.bf16.msra.mxu0 %v1447
    %2291 = vmatpush.bf16.msra.mxu0 %v1431
    %2292 = vmatpush.bf16.msra.mxu0 %v1415
    %2293 = vmatpush.bf16.msra.mxu0 %v1399
    %2294 = vmatmul.bf16.gmra.mxu0 %v322
    %v2295 = vpop.f32.mrf.mxu0
    %v2296 = vadd.f32 %v599, %v2295
    %v2297 = vpop.f32.mrf.mxu0
    %2298 = vdwg.mxu0
    %2299 = vmatpush.bf16.msra.mxu0 %v1639
    %2300 = vmatpush.bf16.msra.mxu0 %v1623
    %2301 = vmatpush.bf16.msra.mxu0 %v1607
    %2302 = vmatpush.bf16.msra.mxu0 %v1591
    %2303 = vmatpush.bf16.msra.mxu0 %v1575
    %2304 = vmatpush.bf16.msra.mxu0 %v1559
    %2305 = vmatpush.bf16.msra.mxu0 %v1543
    %2306 = vmatpush.bf16.msra.mxu0 %v1527
    %2307 = vmatmul.bf16.gmra.mxu0 %v323
    %v2308 = vpop.f32.mrf.mxu0
    %v2309 = vadd.f32 %v2296, %v2308
    %v2310 = vpop.f32.mrf.mxu0
    %2311 = vdwg.mxu0
    %v2312 = vmax.f32 %v1919, 0.0
    %v2313 = vmax.f32 %v1945, 0.0
    %v2314 = vmax.f32 %v1971, 0.0
    %v2315 = vmax.f32 %v1997, 0.0
    %v2316 = vmax.f32 %v2023, 0.0
    %v2317 = vmax.f32 %v2049, 0.0
    %v2318 = vmax.f32 %v2075, 0.0
    %v2319 = vmax.f32 %v2101, 0.0
    %v2320 = vmax.f32 %v2127, 0.0
    %v2321 = vmax.f32 %v2153, 0.0
    %v2322 = vmax.f32 %v2179, 0.0
    %v2323 = vmax.f32 %v2205, 0.0
    %v2324 = vmax.f32 %v2231, 0.0
    %v2325 = vmax.f32 %v2257, 0.0
    %v2326 = vmax.f32 %v2283, 0.0
    %v2327 = vmax.f32 %v2309, 0.0
    %v2328 = vpack.c.bf16 %v2312, %v2312
    %v2329 = vpack.c.bf16 %v2313, %v2313
    %v2330 = vpack.c.bf16 %v2314, %v2314
    %v2331 = vpack.c.bf16 %v2315, %v2315
    %v2332 = vpack.c.bf16 %v2316, %v2316
    %v2333 = vpack.c.bf16 %v2317, %v2317
    %v2334 = vpack.c.bf16 %v2318, %v2318
    %v2335 = vpack.c.bf16 %v2319, %v2319
    %v2336 = vpack.c.bf16 %v2320, %v2320
    %v2337 = vpack.c.bf16 %v2321, %v2321
    %v2338 = vpack.c.bf16 %v2322, %v2322
    %v2339 = vpack.c.bf16 %v2323, %v2323
    %v2340 = vpack.c.bf16 %v2324, %v2324
    %v2341 = vpack.c.bf16 %v2325, %v2325
    %v2342 = vpack.c.bf16 %v2326, %v2326
    %v2343 = vpack.c.bf16 %v2327, %v2327
    %v2344 = vld [vmem:[%s13] sm:$0xf]
    %v2345 = vld [vmem:[%s13 + $0x4] sm:$0xf]
    %v2346 = vld [vmem:[%s13 + $0x8] sm:$0xf]
    %v2347 = vld [vmem:[%s13 + $0xc] sm:$0xf]
    %v2348 = vld [vmem:[%s13 + $0x10] sm:$0xf]
    %v2349 = vld [vmem:[%s13 + $0x14] sm:$0xf]
    %v2350 = vld [vmem:[%s13 + $0x18] sm:$0xf]
    %v2351 = vld [vmem:[%s13 + $0x1c] sm:$0xf]
    %v2352 = vld [vmem:[%s13 + $0x20] sm:$0xf]
    %v2353 = vld [vmem:[%s13 + $0x24] sm:$0xf]
    %v2354 = vld [vmem:[%s13 + $0x28] sm:$0xf]
    %v2355 = vld [vmem:[%s13 + $0x2c] sm:$0xf]
    %v2356 = vld [vmem:[%s13 + $0x30] sm:$0xf]
    %v2357 = vld [vmem:[%s13 + $0x34] sm:$0xf]
    %v2358 = vld [vmem:[%s13 + $0x38] sm:$0xf]
    %v2359 = vld [vmem:[%s13 + $0x3c] sm:$0xf]
    %v2360 = vld [vmem:[%s13 + $0x40] sm:$0xf]
    %v2361 = vld [vmem:[%s13 + $0x44] sm:$0xf]
    %v2362 = vld [vmem:[%s13 + $0x48] sm:$0xf]
    %v2363 = vld [vmem:[%s13 + $0x4c] sm:$0xf]
    %v2364 = vld [vmem:[%s13 + $0x50] sm:$0xf]
    %v2365 = vld [vmem:[%s13 + $0x54] sm:$0xf]
    %v2366 = vld [vmem:[%s13 + $0x58] sm:$0xf]
    %v2367 = vld [vmem:[%s13 + $0x5c] sm:$0xf]
    %v2368 = vld [vmem:[%s13 + $0x60] sm:$0xf]
    %v2369 = vld [vmem:[%s13 + $0x64] sm:$0xf]
    %v2370 = vld [vmem:[%s13 + $0x68] sm:$0xf]
    %v2371 = vld [vmem:[%s13 + $0x6c] sm:$0xf]
    %v2372 = vld [vmem:[%s13 + $0x70] sm:$0xf]
    %v2373 = vld [vmem:[%s13 + $0x74] sm:$0xf]
    %v2374 = vld [vmem:[%s13 + $0x78] sm:$0xf]
    %v2375 = vld [vmem:[%s13 + $0x7c] sm:$0xf]
    %v2376 = vld [vmem:[%s13 + $0x80] sm:$0xf]
    %v2377 = vld [vmem:[%s13 + $0x84] sm:$0xf]
    %v2378 = vld [vmem:[%s13 + $0x88] sm:$0xf]
    %v2379 = vld [vmem:[%s13 + $0x8c] sm:$0xf]
    %v2380 = vld [vmem:[%s13 + $0x90] sm:$0xf]
    %v2381 = vld [vmem:[%s13 + $0x94] sm:$0xf]
    %v2382 = vld [vmem:[%s13 + $0x98] sm:$0xf]
    %v2383 = vld [vmem:[%s13 + $0x9c] sm:$0xf]
    %v2384 = vld [vmem:[%s13 + $0xa0] sm:$0xf]
    %v2385 = vld [vmem:[%s13 + $0xa4] sm:$0xf]
    %v2386 = vld [vmem:[%s13 + $0xa8] sm:$0xf]
    %v2387 = vld [vmem:[%s13 + $0xac] sm:$0xf]
    %v2388 = vld [vmem:[%s13 + $0xb0] sm:$0xf]
    %v2389 = vld [vmem:[%s13 + $0xb4] sm:$0xf]
    %v2390 = vld [vmem:[%s13 + $0xb8] sm:$0xf]
    %v2391 = vld [vmem:[%s13 + $0xbc] sm:$0xf]
    %v2392 = vld [vmem:[%s13 + $0xc0] sm:$0xf]
    %v2393 = vld [vmem:[%s13 + $0xc4] sm:$0xf]
    %v2394 = vld [vmem:[%s13 + $0xc8] sm:$0xf]
    %v2395 = vld [vmem:[%s13 + $0xcc] sm:$0xf]
    %v2396 = vld [vmem:[%s13 + $0xd0] sm:$0xf]
    %v2397 = vld [vmem:[%s13 + $0xd4] sm:$0xf]
    %v2398 = vld [vmem:[%s13 + $0xd8] sm:$0xf]
    %v2399 = vld [vmem:[%s13 + $0xdc] sm:$0xf]
    %v2400 = vld [vmem:[%s13 + $0xe0] sm:$0xf]
    %v2401 = vld [vmem:[%s13 + $0xe4] sm:$0xf]
    %v2402 = vld [vmem:[%s13 + $0xe8] sm:$0xf]
    %v2403 = vld [vmem:[%s13 + $0xec] sm:$0xf]
    %v2404 = vld [vmem:[%s13 + $0xf0] sm:$0xf]
    %v2405 = vld [vmem:[%s13 + $0xf4] sm:$0xf]
    %v2406 = vld [vmem:[%s13 + $0xf8] sm:$0xf]
    %v2407 = vld [vmem:[%s13 + $0xfc] sm:$0xf]
    %v2408 = vld [vmem:[%s13 + $0x100] sm:$0xf]
    %v2409 = vld [vmem:[%s13 + $0x104] sm:$0xf]
    %v2410 = vld [vmem:[%s13 + $0x108] sm:$0xf]
    %v2411 = vld [vmem:[%s13 + $0x10c] sm:$0xf]
    %v2412 = vld [vmem:[%s13 + $0x110] sm:$0xf]
    %v2413 = vld [vmem:[%s13 + $0x114] sm:$0xf]
    %v2414 = vld [vmem:[%s13 + $0x118] sm:$0xf]
    %v2415 = vld [vmem:[%s13 + $0x11c] sm:$0xf]
    %v2416 = vld [vmem:[%s13 + $0x120] sm:$0xf]
    %v2417 = vld [vmem:[%s13 + $0x124] sm:$0xf]
    %v2418 = vld [vmem:[%s13 + $0x128] sm:$0xf]
    %v2419 = vld [vmem:[%s13 + $0x12c] sm:$0xf]
    %v2420 = vld [vmem:[%s13 + $0x130] sm:$0xf]
    %v2421 = vld [vmem:[%s13 + $0x134] sm:$0xf]
    %v2422 = vld [vmem:[%s13 + $0x138] sm:$0xf]
    %v2423 = vld [vmem:[%s13 + $0x13c] sm:$0xf]
    %v2424 = vld [vmem:[%s13 + $0x140] sm:$0xf]
    %v2425 = vld [vmem:[%s13 + $0x144] sm:$0xf]
    %v2426 = vld [vmem:[%s13 + $0x148] sm:$0xf]
    %v2427 = vld [vmem:[%s13 + $0x14c] sm:$0xf]
    %v2428 = vld [vmem:[%s13 + $0x150] sm:$0xf]
    %v2429 = vld [vmem:[%s13 + $0x154] sm:$0xf]
    %v2430 = vld [vmem:[%s13 + $0x158] sm:$0xf]
    %v2431 = vld [vmem:[%s13 + $0x15c] sm:$0xf]
    %v2432 = vld [vmem:[%s13 + $0x160] sm:$0xf]
    %v2433 = vld [vmem:[%s13 + $0x164] sm:$0xf]
    %v2434 = vld [vmem:[%s13 + $0x168] sm:$0xf]
    %v2435 = vld [vmem:[%s13 + $0x16c] sm:$0xf]
    %v2436 = vld [vmem:[%s13 + $0x170] sm:$0xf]
    %v2437 = vld [vmem:[%s13 + $0x174] sm:$0xf]
    %v2438 = vld [vmem:[%s13 + $0x178] sm:$0xf]
    %v2439 = vld [vmem:[%s13 + $0x17c] sm:$0xf]
    %v2440 = vld [vmem:[%s13 + $0x180] sm:$0xf]
    %v2441 = vld [vmem:[%s13 + $0x184] sm:$0xf]
    %v2442 = vld [vmem:[%s13 + $0x188] sm:$0xf]
    %v2443 = vld [vmem:[%s13 + $0x18c] sm:$0xf]
    %v2444 = vld [vmem:[%s13 + $0x190] sm:$0xf]
    %v2445 = vld [vmem:[%s13 + $0x194] sm:$0xf]
    %v2446 = vld [vmem:[%s13 + $0x198] sm:$0xf]
    %v2447 = vld [vmem:[%s13 + $0x19c] sm:$0xf]
    %v2448 = vld [vmem:[%s13 + $0x1a0] sm:$0xf]
    %v2449 = vld [vmem:[%s13 + $0x1a4] sm:$0xf]
    %v2450 = vld [vmem:[%s13 + $0x1a8] sm:$0xf]
    %v2451 = vld [vmem:[%s13 + $0x1ac] sm:$0xf]
    %v2452 = vld [vmem:[%s13 + $0x1b0] sm:$0xf]
    %v2453 = vld [vmem:[%s13 + $0x1b4] sm:$0xf]
    %v2454 = vld [vmem:[%s13 + $0x1b8] sm:$0xf]
    %v2455 = vld [vmem:[%s13 + $0x1bc] sm:$0xf]
    %v2456 = vld [vmem:[%s13 + $0x1c0] sm:$0xf]
    %v2457 = vld [vmem:[%s13 + $0x1c4] sm:$0xf]
    %v2458 = vld [vmem:[%s13 + $0x1c8] sm:$0xf]
    %v2459 = vld [vmem:[%s13 + $0x1cc] sm:$0xf]
    %v2460 = vld [vmem:[%s13 + $0x1d0] sm:$0xf]
    %v2461 = vld [vmem:[%s13 + $0x1d4] sm:$0xf]
    %v2462 = vld [vmem:[%s13 + $0x1d8] sm:$0xf]
    %v2463 = vld [vmem:[%s13 + $0x1dc] sm:$0xf]
    %v2464 = vld [vmem:[%s13 + $0x1e0] sm:$0xf]
    %v2465 = vld [vmem:[%s13 + $0x1e4] sm:$0xf]
    %v2466 = vld [vmem:[%s13 + $0x1e8] sm:$0xf]
    %v2467 = vld [vmem:[%s13 + $0x1ec] sm:$0xf]
    %v2468 = vld [vmem:[%s13 + $0x1f0] sm:$0xf]
    %v2469 = vld [vmem:[%s13 + $0x1f4] sm:$0xf]
    %v2470 = vld [vmem:[%s13 + $0x1f8] sm:$0xf]
    %v2471 = vld [vmem:[%s13 + $0x1fc] sm:$0xf]
    %v2472 = vld [vmem:[%s13 + $0x200] sm:$0xf]
    %v2473 = vld [vmem:[%s13 + $0x204] sm:$0xf]
    %v2474 = vld [vmem:[%s13 + $0x208] sm:$0xf]
    %v2475 = vld [vmem:[%s13 + $0x20c] sm:$0xf]
    %v2476 = vld [vmem:[%s13 + $0x210] sm:$0xf]
    %v2477 = vld [vmem:[%s13 + $0x214] sm:$0xf]
    %v2478 = vld [vmem:[%s13 + $0x218] sm:$0xf]
    %v2479 = vld [vmem:[%s13 + $0x21c] sm:$0xf]
    %v2480 = vld [vmem:[%s13 + $0x220] sm:$0xf]
    %v2481 = vld [vmem:[%s13 + $0x224] sm:$0xf]
    %v2482 = vld [vmem:[%s13 + $0x228] sm:$0xf]
    %v2483 = vld [vmem:[%s13 + $0x22c] sm:$0xf]
    %v2484 = vld [vmem:[%s13 + $0x230] sm:$0xf]
    %v2485 = vld [vmem:[%s13 + $0x234] sm:$0xf]
    %v2486 = vld [vmem:[%s13 + $0x238] sm:$0xf]
    %v2487 = vld [vmem:[%s13 + $0x23c] sm:$0xf]
    %v2488 = vld [vmem:[%s13 + $0x240] sm:$0xf]
    %v2489 = vld [vmem:[%s13 + $0x244] sm:$0xf]
    %v2490 = vld [vmem:[%s13 + $0x248] sm:$0xf]
    %v2491 = vld [vmem:[%s13 + $0x24c] sm:$0xf]
    %v2492 = vld [vmem:[%s13 + $0x250] sm:$0xf]
    %v2493 = vld [vmem:[%s13 + $0x254] sm:$0xf]
    %v2494 = vld [vmem:[%s13 + $0x258] sm:$0xf]
    %v2495 = vld [vmem:[%s13 + $0x25c] sm:$0xf]
    %v2496 = vld [vmem:[%s13 + $0x260] sm:$0xf]
    %v2497 = vld [vmem:[%s13 + $0x264] sm:$0xf]
    %v2498 = vld [vmem:[%s13 + $0x268] sm:$0xf]
    %v2499 = vld [vmem:[%s13 + $0x26c] sm:$0xf]
    %v2500 = vld [vmem:[%s13 + $0x270] sm:$0xf]
    %v2501 = vld [vmem:[%s13 + $0x274] sm:$0xf]
    %v2502 = vld [vmem:[%s13 + $0x278] sm:$0xf]
    %v2503 = vld [vmem:[%s13 + $0x27c] sm:$0xf]
    %v2504 = vld [vmem:[%s13 + $0x280] sm:$0xf]
    %v2505 = vld [vmem:[%s13 + $0x284] sm:$0xf]
    %v2506 = vld [vmem:[%s13 + $0x288] sm:$0xf]
    %v2507 = vld [vmem:[%s13 + $0x28c] sm:$0xf]
    %v2508 = vld [vmem:[%s13 + $0x290] sm:$0xf]
    %v2509 = vld [vmem:[%s13 + $0x294] sm:$0xf]
    %v2510 = vld [vmem:[%s13 + $0x298] sm:$0xf]
    %v2511 = vld [vmem:[%s13 + $0x29c] sm:$0xf]
    %v2512 = vld [vmem:[%s13 + $0x2a0] sm:$0xf]
    %v2513 = vld [vmem:[%s13 + $0x2a4] sm:$0xf]
    %v2514 = vld [vmem:[%s13 + $0x2a8] sm:$0xf]
    %v2515 = vld [vmem:[%s13 + $0x2ac] sm:$0xf]
    %v2516 = vld [vmem:[%s13 + $0x2b0] sm:$0xf]
    %v2517 = vld [vmem:[%s13 + $0x2b4] sm:$0xf]
    %v2518 = vld [vmem:[%s13 + $0x2b8] sm:$0xf]
    %v2519 = vld [vmem:[%s13 + $0x2bc] sm:$0xf]
    %v2520 = vld [vmem:[%s13 + $0x2c0] sm:$0xf]
    %v2521 = vld [vmem:[%s13 + $0x2c4] sm:$0xf]
    %v2522 = vld [vmem:[%s13 + $0x2c8] sm:$0xf]
    %v2523 = vld [vmem:[%s13 + $0x2cc] sm:$0xf]
    %v2524 = vld [vmem:[%s13 + $0x2d0] sm:$0xf]
    %v2525 = vld [vmem:[%s13 + $0x2d4] sm:$0xf]
    %v2526 = vld [vmem:[%s13 + $0x2d8] sm:$0xf]
    %v2527 = vld [vmem:[%s13 + $0x2dc] sm:$0xf]
    %v2528 = vld [vmem:[%s13 + $0x2e0] sm:$0xf]
    %v2529 = vld [vmem:[%s13 + $0x2e4] sm:$0xf]
    %v2530 = vld [vmem:[%s13 + $0x2e8] sm:$0xf]
    %v2531 = vld [vmem:[%s13 + $0x2ec] sm:$0xf]
    %v2532 = vld [vmem:[%s13 + $0x2f0] sm:$0xf]
    %v2533 = vld [vmem:[%s13 + $0x2f4] sm:$0xf]
    %v2534 = vld [vmem:[%s13 + $0x2f8] sm:$0xf]
    %v2535 = vld [vmem:[%s13 + $0x2fc] sm:$0xf]
    %v2536 = vld [vmem:[%s13 + $0x300] sm:$0xf]
    %v2537 = vld [vmem:[%s13 + $0x304] sm:$0xf]
    %v2538 = vld [vmem:[%s13 + $0x308] sm:$0xf]
    %v2539 = vld [vmem:[%s13 + $0x30c] sm:$0xf]
    %v2540 = vld [vmem:[%s13 + $0x310] sm:$0xf]
    %v2541 = vld [vmem:[%s13 + $0x314] sm:$0xf]
    %v2542 = vld [vmem:[%s13 + $0x318] sm:$0xf]
    %v2543 = vld [vmem:[%s13 + $0x31c] sm:$0xf]
    %v2544 = vld [vmem:[%s13 + $0x320] sm:$0xf]
    %v2545 = vld [vmem:[%s13 + $0x324] sm:$0xf]
    %v2546 = vld [vmem:[%s13 + $0x328] sm:$0xf]
    %v2547 = vld [vmem:[%s13 + $0x32c] sm:$0xf]
    %v2548 = vld [vmem:[%s13 + $0x330] sm:$0xf]
    %v2549 = vld [vmem:[%s13 + $0x334] sm:$0xf]
    %v2550 = vld [vmem:[%s13 + $0x338] sm:$0xf]
    %v2551 = vld [vmem:[%s13 + $0x33c] sm:$0xf]
    %v2552 = vld [vmem:[%s13 + $0x340] sm:$0xf]
    %v2553 = vld [vmem:[%s13 + $0x344] sm:$0xf]
    %v2554 = vld [vmem:[%s13 + $0x348] sm:$0xf]
    %v2555 = vld [vmem:[%s13 + $0x34c] sm:$0xf]
    %v2556 = vld [vmem:[%s13 + $0x350] sm:$0xf]
    %v2557 = vld [vmem:[%s13 + $0x354] sm:$0xf]
    %v2558 = vld [vmem:[%s13 + $0x358] sm:$0xf]
    %v2559 = vld [vmem:[%s13 + $0x35c] sm:$0xf]
    %v2560 = vld [vmem:[%s13 + $0x360] sm:$0xf]
    %v2561 = vld [vmem:[%s13 + $0x364] sm:$0xf]
    %v2562 = vld [vmem:[%s13 + $0x368] sm:$0xf]
    %v2563 = vld [vmem:[%s13 + $0x36c] sm:$0xf]
    %v2564 = vld [vmem:[%s13 + $0x370] sm:$0xf]
    %v2565 = vld [vmem:[%s13 + $0x374] sm:$0xf]
    %v2566 = vld [vmem:[%s13 + $0x378] sm:$0xf]
    %v2567 = vld [vmem:[%s13 + $0x37c] sm:$0xf]
    %v2568 = vld [vmem:[%s13 + $0x380] sm:$0xf]
    %v2569 = vld [vmem:[%s13 + $0x384] sm:$0xf]
    %v2570 = vld [vmem:[%s13 + $0x388] sm:$0xf]
    %v2571 = vld [vmem:[%s13 + $0x38c] sm:$0xf]
    %v2572 = vld [vmem:[%s13 + $0x390] sm:$0xf]
    %v2573 = vld [vmem:[%s13 + $0x394] sm:$0xf]
    %v2574 = vld [vmem:[%s13 + $0x398] sm:$0xf]
    %v2575 = vld [vmem:[%s13 + $0x39c] sm:$0xf]
    %v2576 = vld [vmem:[%s13 + $0x3a0] sm:$0xf]
    %v2577 = vld [vmem:[%s13 + $0x3a4] sm:$0xf]
    %v2578 = vld [vmem:[%s13 + $0x3a8] sm:$0xf]
    %v2579 = vld [vmem:[%s13 + $0x3ac] sm:$0xf]
    %v2580 = vld [vmem:[%s13 + $0x3b0] sm:$0xf]
    %v2581 = vld [vmem:[%s13 + $0x3b4] sm:$0xf]
    %v2582 = vld [vmem:[%s13 + $0x3b8] sm:$0xf]
    %v2583 = vld [vmem:[%s13 + $0x3bc] sm:$0xf]
    %v2584 = vld [vmem:[%s13 + $0x3c0] sm:$0xf]
    %v2585 = vld [vmem:[%s13 + $0x3c4] sm:$0xf]
    %v2586 = vld [vmem:[%s13 + $0x3c8] sm:$0xf]
    %v2587 = vld [vmem:[%s13 + $0x3cc] sm:$0xf]
    %v2588 = vld [vmem:[%s13 + $0x3d0] sm:$0xf]
    %v2589 = vld [vmem:[%s13 + $0x3d4] sm:$0xf]
    %v2590 = vld [vmem:[%s13 + $0x3d8] sm:$0xf]
    %v2591 = vld [vmem:[%s13 + $0x3dc] sm:$0xf]
    %v2592 = vld [vmem:[%s13 + $0x3e0] sm:$0xf]
    %v2593 = vld [vmem:[%s13 + $0x3e4] sm:$0xf]
    %v2594 = vld [vmem:[%s13 + $0x3e8] sm:$0xf]
    %v2595 = vld [vmem:[%s13 + $0x3ec] sm:$0xf]
    %v2596 = vld [vmem:[%s13 + $0x3f0] sm:$0xf]
    %v2597 = vld [vmem:[%s13 + $0x3f4] sm:$0xf]
    %v2598 = vld [vmem:[%s13 + $0x3f8] sm:$0xf]
    %v2599 = vld [vmem:[%s13 + $0x3fc] sm:$0xf]
    %v2600 = vld [vmem:[%s14] sm:$0x1]
    %v2602 = vperm.slane %v2600, 0
    %v2860 = vunpack.c.l.b16 %v2344
    %v2861 = vunpack.c.l.b16 %v2345
    %v2862 = vunpack.c.l.b16 %v2346
    %v2863 = vunpack.c.l.b16 %v2347
    %v2864 = vunpack.c.l.b16 %v2348
    %v2865 = vunpack.c.l.b16 %v2349
    %v2866 = vunpack.c.l.b16 %v2350
    %v2867 = vunpack.c.l.b16 %v2351
    %v2868 = vunpack.c.l.b16 %v2352
    %v2869 = vunpack.c.l.b16 %v2353
    %v2870 = vunpack.c.l.b16 %v2354
    %v2871 = vunpack.c.l.b16 %v2355
    %v2872 = vunpack.c.l.b16 %v2356
    %v2873 = vunpack.c.l.b16 %v2357
    %v2874 = vunpack.c.l.b16 %v2358
    %v2875 = vunpack.c.l.b16 %v2359
    %v2876 = vunpack.c.l.b16 %v2360
    %v2877 = vunpack.c.l.b16 %v2361
    %v2878 = vunpack.c.l.b16 %v2362
    %v2879 = vunpack.c.l.b16 %v2363
    %v2880 = vunpack.c.l.b16 %v2364
    %v2881 = vunpack.c.l.b16 %v2365
    %v2882 = vunpack.c.l.b16 %v2366
    %v2883 = vunpack.c.l.b16 %v2367
    %v2884 = vunpack.c.l.b16 %v2368
    %v2885 = vunpack.c.l.b16 %v2369
    %v2886 = vunpack.c.l.b16 %v2370
    %v2887 = vunpack.c.l.b16 %v2371
    %v2888 = vunpack.c.l.b16 %v2372
    %v2889 = vunpack.c.l.b16 %v2373
    %v2890 = vunpack.c.l.b16 %v2374
    %v2891 = vunpack.c.l.b16 %v2375
    %v2892 = vunpack.c.l.b16 %v2376
    %v2893 = vunpack.c.l.b16 %v2377
    %v2894 = vunpack.c.l.b16 %v2378
    %v2895 = vunpack.c.l.b16 %v2379
    %v2896 = vunpack.c.l.b16 %v2380
    %v2897 = vunpack.c.l.b16 %v2381
    %v2898 = vunpack.c.l.b16 %v2382
    %v2899 = vunpack.c.l.b16 %v2383
    %v2900 = vunpack.c.l.b16 %v2384
    %v2901 = vunpack.c.l.b16 %v2385
    %v2902 = vunpack.c.l.b16 %v2386
    %v2903 = vunpack.c.l.b16 %v2387
    %v2904 = vunpack.c.l.b16 %v2388
    %v2905 = vunpack.c.l.b16 %v2389
    %v2906 = vunpack.c.l.b16 %v2390
    %v2907 = vunpack.c.l.b16 %v2391
    %v2908 = vunpack.c.l.b16 %v2392
    %v2909 = vunpack.c.l.b16 %v2393
    %v2910 = vunpack.c.l.b16 %v2394
    %v2911 = vunpack.c.l.b16 %v2395
    %v2912 = vunpack.c.l.b16 %v2396
    %v2913 = vunpack.c.l.b16 %v2397
    %v2914 = vunpack.c.l.b16 %v2398
    %v2915 = vunpack.c.l.b16 %v2399
    %v2916 = vunpack.c.l.b16 %v2400
    %v2917 = vunpack.c.l.b16 %v2401
    %v2918 = vunpack.c.l.b16 %v2402
    %v2919 = vunpack.c.l.b16 %v2403
    %v2920 = vunpack.c.l.b16 %v2404
    %v2921 = vunpack.c.l.b16 %v2405
    %v2922 = vunpack.c.l.b16 %v2406
    %v2923 = vunpack.c.l.b16 %v2407
    %v2924 = vunpack.c.l.b16 %v2408
    %v2925 = vunpack.c.l.b16 %v2409
    %v2926 = vunpack.c.l.b16 %v2410
    %v2927 = vunpack.c.l.b16 %v2411
    %v2928 = vunpack.c.l.b16 %v2412
    %v2929 = vunpack.c.l.b16 %v2413
    %v2930 = vunpack.c.l.b16 %v2414
    %v2931 = vunpack.c.l.b16 %v2415
    %v2932 = vunpack.c.l.b16 %v2416
    %v2933 = vunpack.c.l.b16 %v2417
    %v2934 = vunpack.c.l.b16 %v2418
    %v2935 = vunpack.c.l.b16 %v2419
    %v2936 = vunpack.c.l.b16 %v2420
    %v2937 = vunpack.c.l.b16 %v2421
    %v2938 = vunpack.c.l.b16 %v2422
    %v2939 = vunpack.c.l.b16 %v2423
    %v2940 = vunpack.c.l.b16 %v2424
    %v2941 = vunpack.c.l.b16 %v2425
    %v2942 = vunpack.c.l.b16 %v2426
    %v2943 = vunpack.c.l.b16 %v2427
    %v2944 = vunpack.c.l.b16 %v2428
    %v2945 = vunpack.c.l.b16 %v2429
    %v2946 = vunpack.c.l.b16 %v2430
    %v2947 = vunpack.c.l.b16 %v2431
    %v2948 = vunpack.c.l.b16 %v2432
    %v2949 = vunpack.c.l.b16 %v2433
    %v2950 = vunpack.c.l.b16 %v2434
    %v2951 = vunpack.c.l.b16 %v2435
    %v2952 = vunpack.c.l.b16 %v2436
    %v2953 = vunpack.c.l.b16 %v2437
    %v2954 = vunpack.c.l.b16 %v2438
    %v2955 = vunpack.c.l.b16 %v2439
    %v2956 = vunpack.c.l.b16 %v2440
    %v2957 = vunpack.c.l.b16 %v2441
    %v2958 = vunpack.c.l.b16 %v2442
    %v2959 = vunpack.c.l.b16 %v2443
    %v2960 = vunpack.c.l.b16 %v2444
    %v2961 = vunpack.c.l.b16 %v2445
    %v2962 = vunpack.c.l.b16 %v2446
    %v2963 = vunpack.c.l.b16 %v2447
    %v2964 = vunpack.c.l.b16 %v2448
    %v2965 = vunpack.c.l.b16 %v2449
    %v2966 = vunpack.c.l.b16 %v2450
    %v2967 = vunpack.c.l.b16 %v2451
    %v2968 = vunpack.c.l.b16 %v2452
    %v2969 = vunpack.c.l.b16 %v2453
    %v2970 = vunpack.c.l.b16 %v2454
    %v2971 = vunpack.c.l.b16 %v2455
    %v2972 = vunpack.c.l.b16 %v2456
    %v2973 = vunpack.c.l.b16 %v2457
    %v2974 = vunpack.c.l.b16 %v2458
    %v2975 = vunpack.c.l.b16 %v2459
    %v2976 = vunpack.c.l.b16 %v2460
    %v2977 = vunpack.c.l.b16 %v2461
    %v2978 = vunpack.c.l.b16 %v2462
    %v2979 = vunpack.c.l.b16 %v2463
    %v2980 = vunpack.c.l.b16 %v2464
    %v2981 = vunpack.c.l.b16 %v2465
    %v2982 = vunpack.c.l.b16 %v2466
    %v2983 = vunpack.c.l.b16 %v2467
    %v2984 = vunpack.c.l.b16 %v2468
    %v2985 = vunpack.c.l.b16 %v2469
    %v2986 = vunpack.c.l.b16 %v2470
    %v2987 = vunpack.c.l.b16 %v2471
    %v2988 = vunpack.c.l.b16 %v2472
    %v2989 = vunpack.c.l.b16 %v2473
    %v2990 = vunpack.c.l.b16 %v2474
    %v2991 = vunpack.c.l.b16 %v2475
    %v2992 = vunpack.c.l.b16 %v2476
    %v2993 = vunpack.c.l.b16 %v2477
    %v2994 = vunpack.c.l.b16 %v2478
    %v2995 = vunpack.c.l.b16 %v2479
    %v2996 = vunpack.c.l.b16 %v2480
    %v2997 = vunpack.c.l.b16 %v2481
    %v2998 = vunpack.c.l.b16 %v2482
    %v2999 = vunpack.c.l.b16 %v2483
    %v3000 = vunpack.c.l.b16 %v2484
    %v3001 = vunpack.c.l.b16 %v2485
    %v3002 = vunpack.c.l.b16 %v2486
    %v3003 = vunpack.c.l.b16 %v2487
    %v3004 = vunpack.c.l.b16 %v2488
    %v3005 = vunpack.c.l.b16 %v2489
    %v3006 = vunpack.c.l.b16 %v2490
    %v3007 = vunpack.c.l.b16 %v2491
    %v3008 = vunpack.c.l.b16 %v2492
    %v3009 = vunpack.c.l.b16 %v2493
    %v3010 = vunpack.c.l.b16 %v2494
    %v3011 = vunpack.c.l.b16 %v2495
    %v3012 = vunpack.c.l.b16 %v2496
    %v3013 = vunpack.c.l.b16 %v2497
    %v3014 = vunpack.c.l.b16 %v2498
    %v3015 = vunpack.c.l.b16 %v2499
    %v3016 = vunpack.c.l.b16 %v2500
    %v3017 = vunpack.c.l.b16 %v2501
    %v3018 = vunpack.c.l.b16 %v2502
    %v3019 = vunpack.c.l.b16 %v2503
    %v3020 = vunpack.c.l.b16 %v2504
    %v3021 = vunpack.c.l.b16 %v2505
    %v3022 = vunpack.c.l.b16 %v2506
    %v3023 = vunpack.c.l.b16 %v2507
    %v3024 = vunpack.c.l.b16 %v2508
    %v3025 = vunpack.c.l.b16 %v2509
    %v3026 = vunpack.c.l.b16 %v2510
    %v3027 = vunpack.c.l.b16 %v2511
    %v3028 = vunpack.c.l.b16 %v2512
    %v3029 = vunpack.c.l.b16 %v2513
    %v3030 = vunpack.c.l.b16 %v2514
    %v3031 = vunpack.c.l.b16 %v2515
    %v3032 = vunpack.c.l.b16 %v2516
    %v3033 = vunpack.c.l.b16 %v2517
    %v3034 = vunpack.c.l.b16 %v2518
    %v3035 = vunpack.c.l.b16 %v2519
    %v3036 = vunpack.c.l.b16 %v2520
    %v3037 = vunpack.c.l.b16 %v2521
    %v3038 = vunpack.c.l.b16 %v2522
    %v3039 = vunpack.c.l.b16 %v2523
    %v3040 = vunpack.c.l.b16 %v2524
    %v3041 = vunpack.c.l.b16 %v2525
    %v3042 = vunpack.c.l.b16 %v2526
    %v3043 = vunpack.c.l.b16 %v2527
    %v3044 = vunpack.c.l.b16 %v2528
    %v3045 = vunpack.c.l.b16 %v2529
    %v3046 = vunpack.c.l.b16 %v2530
    %v3047 = vunpack.c.l.b16 %v2531
    %v3048 = vunpack.c.l.b16 %v2532
    %v3049 = vunpack.c.l.b16 %v2533
    %v3050 = vunpack.c.l.b16 %v2534
    %v3051 = vunpack.c.l.b16 %v2535
    %v3052 = vunpack.c.l.b16 %v2536
    %v3053 = vunpack.c.l.b16 %v2537
    %v3054 = vunpack.c.l.b16 %v2538
    %v3055 = vunpack.c.l.b16 %v2539
    %v3056 = vunpack.c.l.b16 %v2540
    %v3057 = vunpack.c.l.b16 %v2541
    %v3058 = vunpack.c.l.b16 %v2542
    %v3059 = vunpack.c.l.b16 %v2543
    %v3060 = vunpack.c.l.b16 %v2544
    %v3061 = vunpack.c.l.b16 %v2545
    %v3062 = vunpack.c.l.b16 %v2546
    %v3063 = vunpack.c.l.b16 %v2547
    %v3064 = vunpack.c.l.b16 %v2548
    %v3065 = vunpack.c.l.b16 %v2549
    %v3066 = vunpack.c.l.b16 %v2550
    %v3067 = vunpack.c.l.b16 %v2551
    %v3068 = vunpack.c.l.b16 %v2552
    %v3069 = vunpack.c.l.b16 %v2553
    %v3070 = vunpack.c.l.b16 %v2554
    %v3071 = vunpack.c.l.b16 %v2555
    %v3072 = vunpack.c.l.b16 %v2556
    %v3073 = vunpack.c.l.b16 %v2557
    %v3074 = vunpack.c.l.b16 %v2558
    %v3075 = vunpack.c.l.b16 %v2559
    %v3076 = vunpack.c.l.b16 %v2560
    %v3077 = vunpack.c.l.b16 %v2561
    %v3078 = vunpack.c.l.b16 %v2562
    %v3079 = vunpack.c.l.b16 %v2563
    %v3080 = vunpack.c.l.b16 %v2564
    %v3081 = vunpack.c.l.b16 %v2565
    %v3082 = vunpack.c.l.b16 %v2566
    %v3083 = vunpack.c.l.b16 %v2567
    %v3084 = vunpack.c.l.b16 %v2568
    %v3085 = vunpack.c.l.b16 %v2569
    %v3086 = vunpack.c.l.b16 %v2570
    %v3087 = vunpack.c.l.b16 %v2571
    %v3088 = vunpack.c.l.b16 %v2572
    %v3089 = vunpack.c.l.b16 %v2573
    %v3090 = vunpack.c.l.b16 %v2574
    %v3091 = vunpack.c.l.b16 %v2575
    %v3092 = vunpack.c.l.b16 %v2576
    %v3093 = vunpack.c.l.b16 %v2577
    %v3094 = vunpack.c.l.b16 %v2578
    %v3095 = vunpack.c.l.b16 %v2579
    %v3096 = vunpack.c.l.b16 %v2580
    %v3097 = vunpack.c.l.b16 %v2581
    %v3098 = vunpack.c.l.b16 %v2582
    %v3099 = vunpack.c.l.b16 %v2583
    %v3100 = vunpack.c.l.b16 %v2584
    %v3101 = vunpack.c.l.b16 %v2585
    %v3102 = vunpack.c.l.b16 %v2586
    %v3103 = vunpack.c.l.b16 %v2587
    %v3104 = vunpack.c.l.b16 %v2588
    %v3105 = vunpack.c.l.b16 %v2589
    %v3106 = vunpack.c.l.b16 %v2590
    %v3107 = vunpack.c.l.b16 %v2591
    %v3108 = vunpack.c.l.b16 %v2592
    %v3109 = vunpack.c.l.b16 %v2593
    %v3110 = vunpack.c.l.b16 %v2594
    %v3111 = vunpack.c.l.b16 %v2595
    %v3112 = vunpack.c.l.b16 %v2596
    %v3113 = vunpack.c.l.b16 %v2597
    %v3114 = vunpack.c.l.b16 %v2598
    %v3115 = vunpack.c.l.b16 %v2599
    %v3116 = vpack.c.b16 %v2861, %v2860
    %v3117 = vpack.c.b16 %v2863, %v2862
    %v3118 = vpack.c.b16 %v2865, %v2864
    %v3119 = vpack.c.b16 %v2867, %v2866
    %v3120 = vpack.c.b16 %v2869, %v2868
    %v3121 = vpack.c.b16 %v2871, %v2870
    %v3122 = vpack.c.b16 %v2873, %v2872
    %v3123 = vpack.c.b16 %v2875, %v2874
    %v3124 = vpack.c.b16 %v2877, %v2876
    %v3125 = vpack.c.b16 %v2879, %v2878
    %v3126 = vpack.c.b16 %v2881, %v2880
    %v3127 = vpack.c.b16 %v2883, %v2882
    %v3128 = vpack.c.b16 %v2885, %v2884
    %v3129 = vpack.c.b16 %v2887, %v2886
    %v3130 = vpack.c.b16 %v2889, %v2888
    %v3131 = vpack.c.b16 %v2891, %v2890
    %v3132 = vpack.c.b16 %v2893, %v2892
    %v3133 = vpack.c.b16 %v2895, %v2894
    %v3134 = vpack.c.b16 %v2897, %v2896
    %v3135 = vpack.c.b16 %v2899, %v2898
    %v3136 = vpack.c.b16 %v2901, %v2900
    %v3137 = vpack.c.b16 %v2903, %v2902
    %v3138 = vpack.c.b16 %v2905, %v2904
    %v3139 = vpack.c.b16 %v2907, %v2906
    %v3140 = vpack.c.b16 %v2909, %v2908
    %v3141 = vpack.c.b16 %v2911, %v2910
    %v3142 = vpack.c.b16 %v2913, %v2912
    %v3143 = vpack.c.b16 %v2915, %v2914
    %v3144 = vpack.c.b16 %v2917, %v2916
    %v3145 = vpack.c.b16 %v2919, %v2918
    %v3146 = vpack.c.b16 %v2921, %v2920
    %v3147 = vpack.c.b16 %v2923, %v2922
    %v3148 = vpack.c.b16 %v2925, %v2924
    %v3149 = vpack.c.b16 %v2927, %v2926
    %v3150 = vpack.c.b16 %v2929, %v2928
    %v3151 = vpack.c.b16 %v2931, %v2930
    %v3152 = vpack.c.b16 %v2933, %v2932
    %v3153 = vpack.c.b16 %v2935, %v2934
    %v3154 = vpack.c.b16 %v2937, %v2936
    %v3155 = vpack.c.b16 %v2939, %v2938
    %v3156 = vpack.c.b16 %v2941, %v2940
    %v3157 = vpack.c.b16 %v2943, %v2942
    %v3158 = vpack.c.b16 %v2945, %v2944
    %v3159 = vpack.c.b16 %v2947, %v2946
    %v3160 = vpack.c.b16 %v2949, %v2948
    %v3161 = vpack.c.b16 %v2951, %v2950
    %v3162 = vpack.c.b16 %v2953, %v2952
    %v3163 = vpack.c.b16 %v2955, %v2954
    %v3164 = vpack.c.b16 %v2957, %v2956
    %v3165 = vpack.c.b16 %v2959, %v2958
    %v3166 = vpack.c.b16 %v2961, %v2960
    %v3167 = vpack.c.b16 %v2963, %v2962
    %v3168 = vpack.c.b16 %v2965, %v2964
    %v3169 = vpack.c.b16 %v2967, %v2966
    %v3170 = vpack.c.b16 %v2969, %v2968
    %v3171 = vpack.c.b16 %v2971, %v2970
    %v3172 = vpack.c.b16 %v2973, %v2972
    %v3173 = vpack.c.b16 %v2975, %v2974
    %v3174 = vpack.c.b16 %v2977, %v2976
    %v3175 = vpack.c.b16 %v2979, %v2978
    %v3176 = vpack.c.b16 %v2981, %v2980
    %v3177 = vpack.c.b16 %v2983, %v2982
    %v3178 = vpack.c.b16 %v2985, %v2984
    %v3179 = vpack.c.b16 %v2987, %v2986
    %v3180 = vpack.c.b16 %v2989, %v2988
    %v3181 = vpack.c.b16 %v2991, %v2990
    %v3182 = vpack.c.b16 %v2993, %v2992
    %v3183 = vpack.c.b16 %v2995, %v2994
    %v3184 = vpack.c.b16 %v2997, %v2996
    %v3185 = vpack.c.b16 %v2999, %v2998
    %v3186 = vpack.c.b16 %v3001, %v3000
    %v3187 = vpack.c.b16 %v3003, %v3002
    %v3188 = vpack.c.b16 %v3005, %v3004
    %v3189 = vpack.c.b16 %v3007, %v3006
    %v3190 = vpack.c.b16 %v3009, %v3008
    %v3191 = vpack.c.b16 %v3011, %v3010
    %v3192 = vpack.c.b16 %v3013, %v3012
    %v3193 = vpack.c.b16 %v3015, %v3014
    %v3194 = vpack.c.b16 %v3017, %v3016
    %v3195 = vpack.c.b16 %v3019, %v3018
    %v3196 = vpack.c.b16 %v3021, %v3020
    %v3197 = vpack.c.b16 %v3023, %v3022
    %v3198 = vpack.c.b16 %v3025, %v3024
    %v3199 = vpack.c.b16 %v3027, %v3026
    %v3200 = vpack.c.b16 %v3029, %v3028
    %v3201 = vpack.c.b16 %v3031, %v3030
    %v3202 = vpack.c.b16 %v3033, %v3032
    %v3203 = vpack.c.b16 %v3035, %v3034
    %v3204 = vpack.c.b16 %v3037, %v3036
    %v3205 = vpack.c.b16 %v3039, %v3038
    %v3206 = vpack.c.b16 %v3041, %v3040
    %v3207 = vpack.c.b16 %v3043, %v3042
    %v3208 = vpack.c.b16 %v3045, %v3044
    %v3209 = vpack.c.b16 %v3047, %v3046
    %v3210 = vpack.c.b16 %v3049, %v3048
    %v3211 = vpack.c.b16 %v3051, %v3050
    %v3212 = vpack.c.b16 %v3053, %v3052
    %v3213 = vpack.c.b16 %v3055, %v3054
    %v3214 = vpack.c.b16 %v3057, %v3056
    %v3215 = vpack.c.b16 %v3059, %v3058
    %v3216 = vpack.c.b16 %v3061, %v3060
    %v3217 = vpack.c.b16 %v3063, %v3062
    %v3218 = vpack.c.b16 %v3065, %v3064
    %v3219 = vpack.c.b16 %v3067, %v3066
    %v3220 = vpack.c.b16 %v3069, %v3068
    %v3221 = vpack.c.b16 %v3071, %v3070
    %v3222 = vpack.c.b16 %v3073, %v3072
    %v3223 = vpack.c.b16 %v3075, %v3074
    %v3224 = vpack.c.b16 %v3077, %v3076
    %v3225 = vpack.c.b16 %v3079, %v3078
    %v3226 = vpack.c.b16 %v3081, %v3080
    %v3227 = vpack.c.b16 %v3083, %v3082
    %v3228 = vpack.c.b16 %v3085, %v3084
    %v3229 = vpack.c.b16 %v3087, %v3086
    %v3230 = vpack.c.b16 %v3089, %v3088
    %v3231 = vpack.c.b16 %v3091, %v3090
    %v3232 = vpack.c.b16 %v3093, %v3092
    %v3233 = vpack.c.b16 %v3095, %v3094
    %v3234 = vpack.c.b16 %v3097, %v3096
    %v3235 = vpack.c.b16 %v3099, %v3098
    %v3236 = vpack.c.b16 %v3101, %v3100
    %v3237 = vpack.c.b16 %v3103, %v3102
    %v3238 = vpack.c.b16 %v3105, %v3104
    %v3239 = vpack.c.b16 %v3107, %v3106
    %v3240 = vpack.c.b16 %v3109, %v3108
    %v3241 = vpack.c.b16 %v3111, %v3110
    %v3242 = vpack.c.b16 %v3113, %v3112
    %v3243 = vpack.c.b16 %v3115, %v3114
    %3372 = vmatpush.bf16.msra.mxu0 %v3123
    %3373 = vmatpush.bf16.msra.mxu0 %v3122
    %3374 = vmatpush.bf16.msra.mxu0 %v3121
    %3375 = vmatpush.bf16.msra.mxu0 %v3120
    %3376 = vmatpush.bf16.msra.mxu0 %v3119
    %3377 = vmatpush.bf16.msra.mxu0 %v3118
    %3378 = vmatpush.bf16.msra.mxu0 %v3117
    %3379 = vmatpush.bf16.msra.mxu0 %v3116
    %3380 = vmatmul.bf16.gmra.mxu0 %v2328
    %v3381 = vpop.f32.mrf.mxu0
    %v3382 = vadd.f32 %v2602, %v3381
    %v3383 = vpop.f32.mrf.mxu0
    %3384 = vdwg.mxu0
    %3385 = vmatpush.bf16.msra.mxu0 %v3131
    %3386 = vmatpush.bf16.msra.mxu0 %v3130
    %3387 = vmatpush.bf16.msra.mxu0 %v3129
    %3388 = vmatpush.bf16.msra.mxu0 %v3128
    %3389 = vmatpush.bf16.msra.mxu0 %v3127
    %3390 = vmatpush.bf16.msra.mxu0 %v3126
    %3391 = vmatpush.bf16.msra.mxu0 %v3125
    %3392 = vmatpush.bf16.msra.mxu0 %v3124
    %3393 = vmatmul.bf16.gmra.mxu0 %v2329
    %v3394 = vpop.f32.mrf.mxu0
    %v3395 = vadd.f32 %v3382, %v3394
    %v3396 = vpop.f32.mrf.mxu0
    %3397 = vdwg.mxu0
    %3398 = vmatpush.bf16.msra.mxu0 %v3139
    %3399 = vmatpush.bf16.msra.mxu0 %v3138
    %3400 = vmatpush.bf16.msra.mxu0 %v3137
    %3401 = vmatpush.bf16.msra.mxu0 %v3136
    %3402 = vmatpush.bf16.msra.mxu0 %v3135
    %3403 = vmatpush.bf16.msra.mxu0 %v3134
    %3404 = vmatpush.bf16.msra.mxu0 %v3133
    %3405 = vmatpush.bf16.msra.mxu0 %v3132
    %3406 = vmatmul.bf16.gmra.mxu0 %v2330
    %v3407 = vpop.f32.mrf.mxu0
    %v3408 = vadd.f32 %v3395, %v3407
    %v3409 = vpop.f32.mrf.mxu0
    %3410 = vdwg.mxu0
    %3411 = vmatpush.bf16.msra.mxu0 %v3147
    %3412 = vmatpush.bf16.msra.mxu0 %v3146
    %3413 = vmatpush.bf16.msra.mxu0 %v3145
    %3414 = vmatpush.bf16.msra.mxu0 %v3144
    %3415 = vmatpush.bf16.msra.mxu0 %v3143
    %3416 = vmatpush.bf16.msra.mxu0 %v3142
    %3417 = vmatpush.bf16.msra.mxu0 %v3141
    %3418 = vmatpush.bf16.msra.mxu0 %v3140
    %3419 = vmatmul.bf16.gmra.mxu0 %v2331
    %v3420 = vpop.f32.mrf.mxu0
    %v3421 = vadd.f32 %v3408, %v3420
    %v3422 = vpop.f32.mrf.mxu0
    %3423 = vdwg.mxu0
    %3424 = vmatpush.bf16.msra.mxu0 %v3155
    %3425 = vmatpush.bf16.msra.mxu0 %v3154
    %3426 = vmatpush.bf16.msra.mxu0 %v3153
    %3427 = vmatpush.bf16.msra.mxu0 %v3152
    %3428 = vmatpush.bf16.msra.mxu0 %v3151
    %3429 = vmatpush.bf16.msra.mxu0 %v3150
    %3430 = vmatpush.bf16.msra.mxu0 %v3149
    %3431 = vmatpush.bf16.msra.mxu0 %v3148
    %3432 = vmatmul.bf16.gmra.mxu0 %v2332
    %v3433 = vpop.f32.mrf.mxu0
    %v3434 = vadd.f32 %v3421, %v3433
    %v3435 = vpop.f32.mrf.mxu0
    %3436 = vdwg.mxu0
    %3437 = vmatpush.bf16.msra.mxu0 %v3163
    %3438 = vmatpush.bf16.msra.mxu0 %v3162
    %3439 = vmatpush.bf16.msra.mxu0 %v3161
    %3440 = vmatpush.bf16.msra.mxu0 %v3160
    %3441 = vmatpush.bf16.msra.mxu0 %v3159
    %3442 = vmatpush.bf16.msra.mxu0 %v3158
    %3443 = vmatpush.bf16.msra.mxu0 %v3157
    %3444 = vmatpush.bf16.msra.mxu0 %v3156
    %3445 = vmatmul.bf16.gmra.mxu0 %v2333
    %v3446 = vpop.f32.mrf.mxu0
    %v3447 = vadd.f32 %v3434, %v3446
    %v3448 = vpop.f32.mrf.mxu0
    %3449 = vdwg.mxu0
    %3450 = vmatpush.bf16.msra.mxu0 %v3171
    %3451 = vmatpush.bf16.msra.mxu0 %v3170
    %3452 = vmatpush.bf16.msra.mxu0 %v3169
    %3453 = vmatpush.bf16.msra.mxu0 %v3168
    %3454 = vmatpush.bf16.msra.mxu0 %v3167
    %3455 = vmatpush.bf16.msra.mxu0 %v3166
    %3456 = vmatpush.bf16.msra.mxu0 %v3165
    %3457 = vmatpush.bf16.msra.mxu0 %v3164
    %3458 = vmatmul.bf16.gmra.mxu0 %v2334
    %v3459 = vpop.f32.mrf.mxu0
    %v3460 = vadd.f32 %v3447, %v3459
    %v3461 = vpop.f32.mrf.mxu0
    %3462 = vdwg.mxu0
    %3463 = vmatpush.bf16.msra.mxu0 %v3179
    %3464 = vmatpush.bf16.msra.mxu0 %v3178
    %3465 = vmatpush.bf16.msra.mxu0 %v3177
    %3466 = vmatpush.bf16.msra.mxu0 %v3176
    %3467 = vmatpush.bf16.msra.mxu0 %v3175
    %3468 = vmatpush.bf16.msra.mxu0 %v3174
    %3469 = vmatpush.bf16.msra.mxu0 %v3173
    %3470 = vmatpush.bf16.msra.mxu0 %v3172
    %3471 = vmatmul.bf16.gmra.mxu0 %v2335
    %v3472 = vpop.f32.mrf.mxu0
    %v3473 = vadd.f32 %v3460, %v3472
    %v3474 = vpop.f32.mrf.mxu0
    %3475 = vdwg.mxu0
    %3476 = vmatpush.bf16.msra.mxu0 %v3187
    %3477 = vmatpush.bf16.msra.mxu0 %v3186
    %3478 = vmatpush.bf16.msra.mxu0 %v3185
    %3479 = vmatpush.bf16.msra.mxu0 %v3184
    %3480 = vmatpush.bf16.msra.mxu0 %v3183
    %3481 = vmatpush.bf16.msra.mxu0 %v3182
    %3482 = vmatpush.bf16.msra.mxu0 %v3181
    %3483 = vmatpush.bf16.msra.mxu0 %v3180
    %3484 = vmatmul.bf16.gmra.mxu0 %v2336
    %v3485 = vpop.f32.mrf.mxu0
    %v3486 = vadd.f32 %v3473, %v3485
    %v3487 = vpop.f32.mrf.mxu0
    %3488 = vdwg.mxu0
    %3489 = vmatpush.bf16.msra.mxu0 %v3195
    %3490 = vmatpush.bf16.msra.mxu0 %v3194
    %3491 = vmatpush.bf16.msra.mxu0 %v3193
    %3492 = vmatpush.bf16.msra.mxu0 %v3192
    %3493 = vmatpush.bf16.msra.mxu0 %v3191
    %3494 = vmatpush.bf16.msra.mxu0 %v3190
    %3495 = vmatpush.bf16.msra.mxu0 %v3189
    %3496 = vmatpush.bf16.msra.mxu0 %v3188
    %3497 = vmatmul.bf16.gmra.mxu0 %v2337
    %v3498 = vpop.f32.mrf.mxu0
    %v3499 = vadd.f32 %v3486, %v3498
    %v3500 = vpop.f32.mrf.mxu0
    %3501 = vdwg.mxu0
    %3502 = vmatpush.bf16.msra.mxu0 %v3203
    %3503 = vmatpush.bf16.msra.mxu0 %v3202
    %3504 = vmatpush.bf16.msra.mxu0 %v3201
    %3505 = vmatpush.bf16.msra.mxu0 %v3200
    %3506 = vmatpush.bf16.msra.mxu0 %v3199
    %3507 = vmatpush.bf16.msra.mxu0 %v3198
    %3508 = vmatpush.bf16.msra.mxu0 %v3197
    %3509 = vmatpush.bf16.msra.mxu0 %v3196
    %3510 = vmatmul.bf16.gmra.mxu0 %v2338
    %v3511 = vpop.f32.mrf.mxu0
    %v3512 = vadd.f32 %v3499, %v3511
    %v3513 = vpop.f32.mrf.mxu0
    %3514 = vdwg.mxu0
    %3515 = vmatpush.bf16.msra.mxu0 %v3211
    %3516 = vmatpush.bf16.msra.mxu0 %v3210
    %3517 = vmatpush.bf16.msra.mxu0 %v3209
    %3518 = vmatpush.bf16.msra.mxu0 %v3208
    %3519 = vmatpush.bf16.msra.mxu0 %v3207
    %3520 = vmatpush.bf16.msra.mxu0 %v3206
    %3521 = vmatpush.bf16.msra.mxu0 %v3205
    %3522 = vmatpush.bf16.msra.mxu0 %v3204
    %3523 = vmatmul.bf16.gmra.mxu0 %v2339
    %v3524 = vpop.f32.mrf.mxu0
    %v3525 = vadd.f32 %v3512, %v3524
    %v3526 = vpop.f32.mrf.mxu0
    %3527 = vdwg.mxu0
    %3528 = vmatpush.bf16.msra.mxu0 %v3219
    %3529 = vmatpush.bf16.msra.mxu0 %v3218
    %3530 = vmatpush.bf16.msra.mxu0 %v3217
    %3531 = vmatpush.bf16.msra.mxu0 %v3216
    %3532 = vmatpush.bf16.msra.mxu0 %v3215
    %3533 = vmatpush.bf16.msra.mxu0 %v3214
    %3534 = vmatpush.bf16.msra.mxu0 %v3213
    %3535 = vmatpush.bf16.msra.mxu0 %v3212
    %3536 = vmatmul.bf16.gmra.mxu0 %v2340
    %v3537 = vpop.f32.mrf.mxu0
    %v3538 = vadd.f32 %v3525, %v3537
    %v3539 = vpop.f32.mrf.mxu0
    %3540 = vdwg.mxu0
    %3541 = vmatpush.bf16.msra.mxu0 %v3227
    %3542 = vmatpush.bf16.msra.mxu0 %v3226
    %3543 = vmatpush.bf16.msra.mxu0 %v3225
    %3544 = vmatpush.bf16.msra.mxu0 %v3224
    %3545 = vmatpush.bf16.msra.mxu0 %v3223
    %3546 = vmatpush.bf16.msra.mxu0 %v3222
    %3547 = vmatpush.bf16.msra.mxu0 %v3221
    %3548 = vmatpush.bf16.msra.mxu0 %v3220
    %3549 = vmatmul.bf16.gmra.mxu0 %v2341
    %v3550 = vpop.f32.mrf.mxu0
    %v3551 = vadd.f32 %v3538, %v3550
    %v3552 = vpop.f32.mrf.mxu0
    %3553 = vdwg.mxu0
    %3554 = vmatpush.bf16.msra.mxu0 %v3235
    %3555 = vmatpush.bf16.msra.mxu0 %v3234
    %3556 = vmatpush.bf16.msra.mxu0 %v3233
    %3557 = vmatpush.bf16.msra.mxu0 %v3232
    %3558 = vmatpush.bf16.msra.mxu0 %v3231
    %3559 = vmatpush.bf16.msra.mxu0 %v3230
    %3560 = vmatpush.bf16.msra.mxu0 %v3229
    %3561 = vmatpush.bf16.msra.mxu0 %v3228
    %3562 = vmatmul.bf16.gmra.mxu0 %v2342
    %v3563 = vpop.f32.mrf.mxu0
    %v3564 = vadd.f32 %v3551, %v3563
    %v3565 = vpop.f32.mrf.mxu0
    %3566 = vdwg.mxu0
    %3567 = vmatpush.bf16.msra.mxu0 %v3243
    %3568 = vmatpush.bf16.msra.mxu0 %v3242
    %3569 = vmatpush.bf16.msra.mxu0 %v3241
    %3570 = vmatpush.bf16.msra.mxu0 %v3240
    %3571 = vmatpush.bf16.msra.mxu0 %v3239
    %3572 = vmatpush.bf16.msra.mxu0 %v3238
    %3573 = vmatpush.bf16.msra.mxu0 %v3237
    %3574 = vmatpush.bf16.msra.mxu0 %v3236
    %3575 = vmatmul.bf16.gmra.mxu0 %v2343
    %v3576 = vpop.f32.mrf.mxu0
    %v3577 = vadd.f32 %v3564, %v3576
    %v3578 = vpop.f32.mrf.mxu0
    %3579 = vdwg.mxu0
    %v3580 = vtanh.pop %v3577
    %vm3581 = vcmask 392192
    %3582 = vst.msk [vmem:[#allocation6] sm:$0xff] %vm3581, %v3580
    %v3583 = vld [vmem:[%s15] sm:$0xf]
    %v3584 = vld [vmem:[%s15 + $0x4] sm:$0xf]
    %v3585 = vld [vmem:[%s15 + $0x8] sm:$0xf]
    %v3586 = vld [vmem:[%s15 + $0xc] sm:$0xf]
    %3588 = vrot.lane.b32.xlu0 %v148, 96
    %v3589 = vpop.permute.xlu0 %3588
    %v3594 = vunpack.c.l.b16 %v3583
    %v3595 = vunpack.c.l.b16 %v3584
    %v3596 = vunpack.c.l.b16 %v3585
    %v3597 = vunpack.c.l.b16 %v3586
    %v3598 = vpack.c.b16 %v3595, %v3594
    %v3599 = vpack.c.b16 %v3597, %v3596
    %v3603 = vsel %vm130, %v3589, 0
    %3605 = vmatpush.bf16.msra.mxu0 0
    %3606 = vmatpush.bf16.msra.mxu0 0
    %3607 = vmatpush.bf16.msra.mxu0 0
    %3608 = vmatpush.bf16.msra.mxu0 0
    %3609 = vmatpush.bf16.msra.mxu0 0
    %3610 = vmatpush.bf16.msra.mxu0 0
    %3611 = vmatpush.bf16.msra.mxu0 %v3599
    %3612 = vmatpush.bf16.msra.mxu0 %v3598
    %3613 = vmatmul.bf16.gmra.mxu0 %v3603
    %v3614 = vpop.f32.mrf.mxu0
    %v3615 = vadd.f32 0.0, %v3614
    %v3616 = vpop.f32.mrf.mxu0
    %3617 = vdwg.mxu0
    %v3618 = vpack.c.bf16 %v3615, %v3615
    %3620 = vrot.lane.b32.xlu0 %v3615, 124
    %v3621 = vpop.permute.xlu0 %3620
    %v3624 = vsel %vm86, %v3618, 0
    %3626 = vmatpush.bf16.msra.mxu0 0
    %3627 = vmatpush.bf16.msra.mxu0 0
    %3628 = vmatpush.bf16.msra.mxu0 0
    %3629 = vmatpush.bf16.msra.mxu0 0
    %3630 = vmatpush.bf16.msra.mxu0 0
    %3631 = vmatpush.bf16.msra.mxu0 0
    %3632 = vmatpush.bf16.msra.mxu0 0
    %3633 = vmatpush.bf16.msra.mxu0 %v3624
    %3634 = vmatmul.bf16.gmra.mxu0 %v84
    %v3635 = vpop.f32.mrf.mxu0
    %v3636 = vadd.f32 %v3621, %v3635
    %v3637 = vpop.f32.mrf.mxu0
    %3638 = vdwg.mxu0
    %v3639 = vld [vmem:[%s16] sm:$0x1]
    %v3641 = vperm.slane %v3639, 0
    %v3643 = vadd.f32 %v3636, %v3641
    %vm3644 = vcmask 31744
    %3645 = vst.msk [vmem:[%s19] sm:$0xff] %vm3644, %v3643
    // Predicated region
    $region74: #{tpu_custom_call.1} parent=1 // pred_check
      _
    $region75: #{tpu_custom_call.1} parent=1 // pred_check_branch
      %3647 = sbr.rel (0) target = $region77
    $region76: #{tpu_custom_call.1} parent=1 // pred_region
      _
    $region77: #{tpu_custom_call.1} parent=1 // pred_fallthru
      _
    // Predicated region
    $region78: #{tpu_custom_call.1} parent=1 // pred_check
      _
    $region79: #{tpu_custom_call.1} parent=1 // pred_check_branch
      %3649 = sbr.rel (0) target = $region81
    $region80: #{tpu_custom_call.1} parent=1 // pred_region
      %3651 = vsyncadd [#allocation5], 0
      %s3653 = sshll.u32 [#allocation6], 4
      %s3654 = int_to_ptr.vmem [resolvable:$true] %s3653
      %s3655 = sshll.u32 %s18, 4
      %s3656 = int_to_ptr.hbm [resolvable:$true] %s3655
      %3658 = dma.vmem_to_hbm [thread:$0]  %s3654, 128, %s3656, [#allocation5]
    $region81: #{tpu_custom_call.1} parent=1 // pred_fallthru
      _
    // Predicated region
    $region82: #{tpu_custom_call.1} parent=1 // pred_check
      _
    $region83: #{tpu_custom_call.1} parent=1 // pred_check_branch
      %3660 = sbr.rel (0) target = $region85
    $region84: #{tpu_custom_call.1} parent=1 // pred_region
      _
    $region85: #{tpu_custom_call.1} parent=1 // pred_fallthru
      _
    // Predicated region
    $region86: #{tpu_custom_call.1} parent=1 // pred_check
      _
    $region87: #{tpu_custom_call.1} parent=1 // pred_check_branch
      %3662 = sbr.rel (0) target = $region89
    $region88: #{tpu_custom_call.1} parent=1 // pred_region
      _
    $region89: #{tpu_custom_call.1} parent=1 // pred_fallthru
      _
    // Predicated region
    $region90: #{tpu_custom_call.1} parent=1 // pred_check
      _
    $region91: #{tpu_custom_call.1} parent=1 // pred_check_branch
      %3664 = sbr.rel (0) target = $region93
    $region92: #{tpu_custom_call.1} parent=1 // pred_region
      %3666 = dma.done [#allocation5], 128
    $region93: #{tpu_custom_call.1} parent=1 // pred_fallthru
      _
    // Predicated region
    $region94: #{tpu_custom_call.1} parent=1 // pred_check
      _
    $region95: #{tpu_custom_call.1} parent=1 // pred_check_branch
      %3668 = sbr.rel (0) target = $region97
    $region96: #{tpu_custom_call.1} parent=1 // pred_region
      _
    $region97: #{tpu_custom_call.1} parent=1 // pred_fallthru
      _
    %3669 = vsyncpa [#allocation4], 1
    %3670 = vsyncpa [#allocation5], 1

</llo_original>
